<compile_context>
chip_gen: v6e
topology: v6e:2x2x1
jax: 0.10.0
libtpu: 0.0.40
codegen_flags: <defaults>
</compile_context>

<pallas_src>
import functools

import jax
import jax.numpy as jnp
from jax.experimental import pallas as pl
from jax.experimental.pallas import tpu as pltpu

LN_EPS = 1e-5                      # torch nn.LayerNorm default
MATMUL_DTYPE = jnp.bfloat16        # MXU operand dtype (accumulation is always f32)


# ---------------------------------------------------------------------------
# Single fused kernel: whole Decoder forward for one batch element
# ---------------------------------------------------------------------------
def _decoder_kernel(action_ref, obs_ref, rel_ref, am_ref,
                    wae_ref, ln0g_ref, ln0b_ref,
                    wqkv_ref, bqkv_ref, wrel_ref, brel_ref, wout_ref, bout_ref,
                    lng_ref, lnb_ref, w1_ref, b1_ref, w2_ref, b2_ref,
                    hw1_ref, hb1_ref, hlng_ref, hlnb_ref, hw2_ref, hb2_ref,
                    o_ref, *, num_heads, dec_agent, self_loop_add):
    f32 = jnp.float32
    cdt = MATMUL_DTYPE
    _, n, _ = action_ref.shape
    E = obs_ref.shape[-1]
    n_block = wqkv_ref.shape[0]
    H = num_heads
    hd = E // H
    # torch applies scaling = hd**-0.5 to (q + ra) AND 1/sqrt(hd) to the score -> 1/hd total.
    inv_hd = 1.0 / hd

    def mm(x, w):                  # MXU matmul: bf16 operands, f32 accumulate
        return jnp.dot(x.astype(w.dtype), w, preferred_element_type=f32)

    def gelu(x):
        # TODO(synk): torch nn.GELU() is the exact erf form; tanh approximation used here.
        return 0.5 * x * (1.0 + jnp.tanh(0.7978845608028654 * (x + 0.044715 * x * x * x)))

    def layer_norm(x, g, b):
        mu = jnp.mean(x, axis=-1, keepdims=True)
        var = jnp.mean((x - mu) ** 2, axis=-1, keepdims=True)
        return (x - mu) * jax.lax.rsqrt(var + LN_EPS) * g + b

    # --- masks shared by every attention layer (identical for attn1/attn2, every block) ---
    row = jax.lax.broadcasted_iota(jnp.int32, (n, n), 0)   # tgt index i
    col = jax.lax.broadcasted_iota(jnp.int32, (n, n), 1)   # src index j
    causal_bad = (col > row)[None, :, :]                    # registered tril(ones)==0 buffer
    neg_inf = jnp.float32(-jnp.inf)
    if dec_agent:
        eye = (row == col).astype(f32)[None, :, :]
        am = am_ref[...].astype(f32)                        # (1, tgt, src)
        am_eff = am + eye if self_loop_add else am * (1.0 - eye) + eye
        if H > 1:
            # torch's mask broadcast over bsz*H is only defined for H==1 (or bsz==1);
            # replicating across heads matches those cases exactly.
            am_eff = jnp.repeat(am_eff, H, axis=0)

    # relation slab in its natural [p, q] = relation_embed[b, p, q] row order (no HBM transpose)
    rel2d = rel_ref[...].reshape(n * n, E)

    def split_heads(x2d):          # (n, E) -> (H, n, hd)
        if H == 1:
            return x2d.reshape(1, n, E)
        return jnp.moveaxis(x2d.reshape(n, H, hd), 1, 0)

    def merge_heads(x):            # (H, n, hd) -> (n, E)
        if H == 1:
            return x.reshape(n, E)
        return jnp.moveaxis(x, 0, 1).reshape(n, E)

    def split_heads_rel(x2d):      # (n*n, E) -> (H, p, q, hd)
        if H == 1:
            return x2d.reshape(1, n, n, E)
        return jnp.moveaxis(x2d.reshape(n, n, H, hd), 2, 0)

    def swap_last2(x):             # minor-two-dims transpose of a small (B, n, n) tensor
        if x.shape[0] == 1:
            return x.reshape(n, n).T.reshape(1, n, n)
        return jnp.swapaxes(x, 1, 2)

    def relation_attention(q_in, kv_in, wqkv, bqkv, wrel, brel, wout, bout):
        """RelationMultiheadAttention(masked=True) for one batch element."""
        q2, kv2 = q_in.reshape(n, E), kv_in.reshape(n, E)
        if q_in is kv_in:                          # qkv_same: one fused (n,E)@(E,3E) projection
            qkv = mm(q2, wqkv) + bqkv
            qp, kp, vp = qkv[:, :E], qkv[:, E:2 * E], qkv[:, 2 * E:]
        else:                                      # kv_same: q from query, fused k|v from key
            qp = mm(q2, wqkv[:, :E]) + bqkv[:, :E]
            kvp = mm(kv2, wqkv[:, E:]) + bqkv[:, E:]
            kp, vp = kvp[:, :E], kvp[:, E:]

        rp = mm(rel2d, wrel) + brel                # Conv1D relation projection, (n*n, 2E)
        ra = split_heads_rel(rp[:, :E])            # (H, p=src, q=tgt, hd)
        rb = split_heads_rel(rp[:, E:])

        q3, k3, v3 = split_heads(qp), split_heads(kp), split_heads(vp)   # (H, n, hd)

        # score[h, i, j] = (q[i] + ra[j, i]) . (k[j] + rb[j, i]) / hd
        #   q.k^T goes to the MXU; the relation terms are reduced in the relation tensor's
        #   natural [p, q] layout and only the tiny (H, n, n) result is transposed.
        qk = jnp.einsum('bid,bjd->bij', q3.astype(cdt), k3.astype(cdt),
                        preferred_element_type=f32)
        rel_t = jnp.sum(q3[:, None, :, :] * rb + ra * (k3[:, :, None, :] + rb), axis=-1)
        s = (qk + swap_last2(rel_t)) * inv_hd      # (H, tgt, src)

        s = jnp.where(causal_bad, neg_inf, s)      # masked=True (causal buffer)
        if dec_agent:
            s = jnp.where(am_eff == 0.0, neg_inf, s)
        m = jnp.max(s, axis=-1, keepdims=True)     # softmax over src (torch dim=1)
        e = jnp.exp(s - m)
        w = e * pl.reciprocal(jnp.sum(e, axis=-1, keepdims=True), approx=True)
        if dec_agent:
            w = w * am_eff                         # torch re-weights by the (possibly 2-valued) mask

        attn = jnp.einsum('bij,bjd->bid', w.astype(cdt), v3.astype(cdt),
                          preferred_element_type=f32)        # (H, tgt, hd), MXU
        out = mm(merge_heads(attn), wout) + bout              # Conv1D out_proj
        return out.reshape(1, n, E)                # dropout p=0.0 -> identity

    # --- Decoder prologue: action encoder (Linear, no bias) -> GELU -> LayerNorm ---
    act = action_ref[...].reshape(n, -1).astype(f32)
    x = gelu(mm(act, wae_ref[...]))
    x = layer_norm(x.reshape(1, n, E), ln0g_ref[...], ln0b_ref[...])
    rep = obs_ref[...].astype(f32)                 # obs_rep (1, n, E)

    # --- n_block DecodeBlocks, fully fused (intermediates never leave VMEM) ---
    for blk in range(n_block):
        y1 = relation_attention(x, x,
                                wqkv_ref[blk, 0], bqkv_ref[blk, 0], wrel_ref[blk, 0],
                                brel_ref[blk, 0], wout_ref[blk, 0], bout_ref[blk, 0])
        x1 = layer_norm(x + y1, lng_ref[blk, 0], lnb_ref[blk, 0])

        y2 = relation_attention(rep, x1,
                                wqkv_ref[blk, 1], bqkv_ref[blk, 1], wrel_ref[blk, 1],
                                brel_ref[blk, 1], wout_ref[blk, 1], bout_ref[blk, 1])
        x2 = layer_norm(rep + y2, lng_ref[blk, 1], lnb_ref[blk, 1])

        h = gelu(mm(x2.reshape(n, E), w1_ref[blk]) + b1_ref[blk])
        y3 = (mm(h, w2_ref[blk]) + b2_ref[blk]).reshape(1, n, E)
        x = layer_norm(x2 + y3, lng_ref[blk, 2], lnb_ref[blk, 2])

    # --- head: Linear -> GELU -> LayerNorm -> Linear(action_dim) ---
    h = gelu(mm(x.reshape(n, E), hw1_ref[...]) + hb1_ref[...])
    h = layer_norm(h, hlng_ref[...], hlnb_ref[...])
    logit = mm(h, hw2_ref[...]) + hb2_ref[...]
    o_ref[...] = logit.reshape(1, n, -1).astype(o_ref.dtype)


# ---------------------------------------------------------------------------
# Parameters (weights pre-transposed for x @ W; matmul weights stored in bf16)
# ---------------------------------------------------------------------------
def init_decoder_params(key, n_embd, n_block, action_dim):
    E = n_embd
    ks = jax.random.split(key, 8)

    def w(k, shape):
        return (0.02 * jax.random.normal(k, shape, jnp.float32)).astype(MATMUL_DTYPE)

    return {
        # action encoder (Discrete): Linear(action_dim + 1, E, bias=False)
        'wae': w(ks[0], (action_dim + 1, E)),
        'ln0_g': jnp.ones((1, E), jnp.float32), 'ln0_b': jnp.zeros((1, E), jnp.float32),
        # per-block params stacked as [n_block, attn_idx(2) or ln_idx(3), ...]
        'wqkv': w(ks[1], (n_block, 2, E, 3 * E)),          # in_proj_weight.T (q|k|v columns)
        'bqkv': jnp.zeros((n_block, 2, 1, 3 * E), jnp.float32),
        'wrel': w(ks[2], (n_block, 2, E, 2 * E)),          # Conv1D(2E, E) weight (nx, nf)
        'brel': jnp.zeros((n_block, 2, 1, 2 * E), jnp.float32),
        'wout': w(ks[3], (n_block, 2, E, E)),              # Conv1D(E, E) weight
        'bout': jnp.zeros((n_block, 2, 1, E), jnp.float32),
        'ln_g': jnp.ones((n_block, 3, 1, E), jnp.float32),  # ln1 | ln2 | ln3
        'ln_b': jnp.zeros((n_block, 3, 1, E), jnp.float32),
        'mlp_w1': w(ks[4], (n_block, E, E)),               # Linear weights stored transposed
        'mlp_b1': jnp.zeros((n_block, 1, E), jnp.float32),
        'mlp_w2': w(ks[5], (n_block, E, E)),
        'mlp_b2': jnp.zeros((n_block, 1, E), jnp.float32),
        # head: Linear(E, E) -> GELU -> LayerNorm -> Linear(E, action_dim)
        'head_w1': w(ks[6], (E, E)), 'head_b1': jnp.zeros((1, E), jnp.float32),
        'head_ln_g': jnp.ones((1, E), jnp.float32), 'head_ln_b': jnp.zeros((1, E), jnp.float32),
        'head_w2': w(ks[7], (E, action_dim)), 'head_b2': jnp.zeros((1, action_dim), jnp.float32),
    }


_PARAM_ORDER = ('wae', 'ln0_g', 'ln0_b',
                'wqkv', 'bqkv', 'wrel', 'brel', 'wout', 'bout',
                'ln_g', 'ln_b', 'mlp_w1', 'mlp_b1', 'mlp_w2', 'mlp_b2',
                'head_w1', 'head_b1', 'head_ln_g', 'head_ln_b', 'head_w2', 'head_b2')


@functools.partial(jax.jit, static_argnames=('n_head', 'dec_agent', 'self_loop_add'))
def decoder_forward(params, action, obs_rep, relation_embed, attn_mask,
                    *, n_head, dec_agent, self_loop_add):
    bs, n, _ = action.shape
    a_out = params['head_w2'].shape[-1]
    ordered = tuple(params[k] for k in _PARAM_ORDER)

    def batch_spec(shape):                       # tiled over the batch grid axis
        nd = len(shape)
        return pl.BlockSpec((1,) + tuple(shape[1:]),
                            lambda b, nd=nd: (b,) + (0,) * (nd - 1))

    def bcast_spec(arr):                         # same full block for every grid step
        nd = arr.ndim
        return pl.BlockSpec(arr.shape, lambda b, nd=nd: (0,) * nd)

    kern = functools.partial(_decoder_kernel, num_heads=n_head,
                             dec_agent=dec_agent, self_loop_add=self_loop_add)
    return pl.pallas_call(
        kern,
        out_shape=jax.ShapeDtypeStruct((bs, n, a_out), jnp.float32),
        grid=(bs,),
        in_specs=[batch_spec(action.shape), batch_spec(obs_rep.shape),
                  batch_spec(relation_embed.shape), batch_spec(attn_mask.shape)]
                 + [bcast_spec(p) for p in ordered],
        out_specs=pl.BlockSpec((1, n, a_out), lambda b: (b, 0, 0)),
        compiler_params=pltpu.CompilerParams(
            dimension_semantics=("parallel",),   # batch axis -> both TensorCores on v7x
            vmem_limit_bytes=32 * 1024 * 1024,
        ),
    )(action, obs_rep, relation_embed, attn_mask, *ordered)


if __name__ == "__main__":
    # Small shapes consistent with the module; n_head=1 so the torch broadcast of
    # attn_mask over bsz*num_heads is well-defined and matched exactly.
    bs, n_agent, n_embd, n_head = 2, 8, 32, 1
    n_block, action_dim = 2, 16
    dec_agent, self_loop_add = True, True

    key = jax.random.PRNGKey(0)
    kp, ka, ko, krel, km = jax.random.split(key, 5)
    params = init_decoder_params(kp, n_embd, n_block, action_dim)

    # Discrete action encoder consumes (action_dim + 1)-wide inputs.
    action = jax.random.normal(ka, (bs, n_agent, action_dim + 1), jnp.float32)
    obs_rep = jax.random.normal(ko, (bs, n_agent, n_embd), jnp.float32)
    relation_embed = jax.random.normal(krel, (bs, n_agent, n_agent, n_embd), jnp.float32)
    attn_mask = (jax.random.uniform(km, (bs, n_agent, n_agent)) > 0.3).astype(jnp.float32)

    logit = decoder_forward(params, action, obs_rep, relation_embed, attn_mask,
                            n_head=n_head, dec_agent=dec_agent, self_loop_add=self_loop_add)
    logit = jax.block_until_ready(logit)
    assert logit.shape == (bs, n_agent, action_dim)
    assert bool(jnp.all(jnp.isfinite(logit)))
    print("KERNEL_OK")
</pallas_src>

<mosaic_0001>
module attributes {stable_mosaic.version = 11 : i64} {
  func.func @_decoder_kernel(%arg0: i32, %arg1: memref<1x8x17xf32, #tpu.memory_space<vmem>>, %arg2: memref<1x8x32xf32, #tpu.memory_space<vmem>>, %arg3: memref<1x8x8x32xf32, #tpu.memory_space<vmem>>, %arg4: memref<1x8x8xf32, #tpu.memory_space<vmem>>, %arg5: memref<17x32xbf16, #tpu.memory_space<vmem>>, %arg6: memref<1x32xf32, #tpu.memory_space<vmem>>, %arg7: memref<1x32xf32, #tpu.memory_space<vmem>>, %arg8: memref<2x2x32x96xbf16, #tpu.memory_space<vmem>>, %arg9: memref<2x2x1x96xf32, #tpu.memory_space<vmem>>, %arg10: memref<2x2x32x64xbf16, #tpu.memory_space<vmem>>, %arg11: memref<2x2x1x64xf32, #tpu.memory_space<vmem>>, %arg12: memref<2x2x32x32xbf16, #tpu.memory_space<vmem>>, %arg13: memref<2x2x1x32xf32, #tpu.memory_space<vmem>>, %arg14: memref<2x3x1x32xf32, #tpu.memory_space<vmem>>, %arg15: memref<2x3x1x32xf32, #tpu.memory_space<vmem>>, %arg16: memref<2x32x32xbf16, #tpu.memory_space<vmem>>, %arg17: memref<2x1x32xf32, #tpu.memory_space<vmem>>, %arg18: memref<2x32x32xbf16, #tpu.memory_space<vmem>>, %arg19: memref<2x1x32xf32, #tpu.memory_space<vmem>>, %arg20: memref<32x32xbf16, #tpu.memory_space<vmem>>, %arg21: memref<1x32xf32, #tpu.memory_space<vmem>>, %arg22: memref<1x32xf32, #tpu.memory_space<vmem>>, %arg23: memref<1x32xf32, #tpu.memory_space<vmem>>, %arg24: memref<32x16xbf16, #tpu.memory_space<vmem>>, %arg25: memref<1x16xf32, #tpu.memory_space<vmem>>, %arg26: memref<1x8x16xf32, #tpu.memory_space<vmem>>) attributes {dimension_semantics = [#tpu.dimension_semantics<parallel>], iteration_bounds = array<i64: 2>, scalar_prefetch = 0 : i64, scratch_operands = 0 : i64, tpu.core_type = #tpu.core_type<tc>, window_params = [{transform_indices = @transform_0, window_bounds = array<i64: 1, 8, 17>}, {transform_indices = @transform_1, window_bounds = array<i64: 1, 8, 32>}, {transform_indices = @transform_2, window_bounds = array<i64: 1, 8, 8, 32>}, {transform_indices = @transform_3, window_bounds = array<i64: 1, 8, 8>}, {pipeline_mode = #tpu.pipeline_mode<synchronous>, transform_indices = @transform_4, window_bounds = array<i64: 17, 32>}, {pipeline_mode = #tpu.pipeline_mode<synchronous>, transform_indices = @transform_5, window_bounds = array<i64: 1, 32>}, {pipeline_mode = #tpu.pipeline_mode<synchronous>, transform_indices = @transform_6, window_bounds = array<i64: 1, 32>}, {pipeline_mode = #tpu.pipeline_mode<synchronous>, transform_indices = @transform_7, window_bounds = array<i64: 2, 2, 32, 96>}, {pipeline_mode = #tpu.pipeline_mode<synchronous>, transform_indices = @transform_8, window_bounds = array<i64: 2, 2, 1, 96>}, {pipeline_mode = #tpu.pipeline_mode<synchronous>, transform_indices = @transform_9, window_bounds = array<i64: 2, 2, 32, 64>}, {pipeline_mode = #tpu.pipeline_mode<synchronous>, transform_indices = @transform_10, window_bounds = array<i64: 2, 2, 1, 64>}, {pipeline_mode = #tpu.pipeline_mode<synchronous>, transform_indices = @transform_11, window_bounds = array<i64: 2, 2, 32, 32>}, {pipeline_mode = #tpu.pipeline_mode<synchronous>, transform_indices = @transform_12, window_bounds = array<i64: 2, 2, 1, 32>}, {pipeline_mode = #tpu.pipeline_mode<synchronous>, transform_indices = @transform_13, window_bounds = array<i64: 2, 3, 1, 32>}, {pipeline_mode = #tpu.pipeline_mode<synchronous>, transform_indices = @transform_14, window_bounds = array<i64: 2, 3, 1, 32>}, {pipeline_mode = #tpu.pipeline_mode<synchronous>, transform_indices = @transform_15, window_bounds = array<i64: 2, 32, 32>}, {pipeline_mode = #tpu.pipeline_mode<synchronous>, transform_indices = @transform_16, window_bounds = array<i64: 2, 1, 32>}, {pipeline_mode = #tpu.pipeline_mode<synchronous>, transform_indices = @transform_17, window_bounds = array<i64: 2, 32, 32>}, {pipeline_mode = #tpu.pipeline_mode<synchronous>, transform_indices = @transform_18, window_bounds = array<i64: 2, 1, 32>}, {pipeline_mode = #tpu.pipeline_mode<synchronous>, transform_indices = @transform_19, window_bounds = array<i64: 32, 32>}, {pipeline_mode = #tpu.pipeline_mode<synchronous>, transform_indices = @transform_20, window_bounds = array<i64: 1, 32>}, {pipeline_mode = #tpu.pipeline_mode<synchronous>, transform_indices = @transform_21, window_bounds = array<i64: 1, 32>}, {pipeline_mode = #tpu.pipeline_mode<synchronous>, transform_indices = @transform_22, window_bounds = array<i64: 1, 32>}, {pipeline_mode = #tpu.pipeline_mode<synchronous>, transform_indices = @transform_23, window_bounds = array<i64: 32, 16>}, {pipeline_mode = #tpu.pipeline_mode<synchronous>, transform_indices = @transform_24, window_bounds = array<i64: 1, 16>}, {transform_indices = @transform_25, window_bounds = array<i64: 1, 8, 16>}]} {
    %0 = tpu.iota {dimensions = array<i32: 0>} : vector<8x8xi32>
    %1 = tpu.iota {dimensions = array<i32: 1>} : vector<8x8xi32>
    %2 = arith.cmpi sgt, %1, %0 : vector<8x8xi32>
    %3 = vector.shape_cast %2 : vector<8x8xi1> to vector<1x8x8xi1>
    %4 = arith.cmpi eq, %0, %1 : vector<8x8xi32>
    %5 = arith.extui %4 : vector<8x8xi1> to vector<8x8xi32>
    %6 = arith.sitofp %5 : vector<8x8xi32> to vector<8x8xf32>
    %7 = vector.shape_cast %6 : vector<8x8xf32> to vector<1x8x8xf32>
    %c0 = arith.constant 0 : index
    %c0_0 = arith.constant 0 : index
    %c0_1 = arith.constant 0 : index
    %8 = vector.load %arg4[%c0, %c0_0, %c0_1] : memref<1x8x8xf32, #tpu.memory_space<vmem>>, vector<1x8x8xf32>
    %9 = arith.addf %8, %7 : vector<1x8x8xf32>
    %c0_2 = arith.constant 0 : index
    %c0_3 = arith.constant 0 : index
    %c0_4 = arith.constant 0 : index
    %c0_5 = arith.constant 0 : index
    %10 = vector.load %arg3[%c0_2, %c0_3, %c0_4, %c0_5] : memref<1x8x8x32xf32, #tpu.memory_space<vmem>>, vector<1x8x8x32xf32>
    %11 = vector.shape_cast %10 : vector<1x8x8x32xf32> to vector<64x32xf32>
    %c0_6 = arith.constant 0 : index
    %c0_7 = arith.constant 0 : index
    %c0_8 = arith.constant 0 : index
    %12 = vector.load %arg1[%c0_6, %c0_7, %c0_8] : memref<1x8x17xf32, #tpu.memory_space<vmem>>, vector<1x8x17xf32>
    %13 = vector.shape_cast %12 : vector<1x8x17xf32> to vector<8x17xf32>
    %c0_9 = arith.constant 0 : index
    %c0_10 = arith.constant 0 : index
    %14 = vector.load %arg5[%c0_9, %c0_10] : memref<17x32xbf16, #tpu.memory_space<vmem>>, vector<17x32xbf16>
    %15 = arith.truncf %13 : vector<8x17xf32> to vector<8x17xbf16>
    %cst = arith.constant dense<0.000000e+00> : vector<8x32xf32>
    %16 = tpu.matmul %15, %14, %cst {dimension_numbers = #tpu.dot_dimension_numbers<[1], [0], [0], [1], [0, 0, 1, 1], [], []>} : vector<8x17xbf16>, vector<17x32xbf16>, vector<8x32xf32> -> vector<8x32xf32>
    %cst_11 = arith.constant 5.000000e-01 : f32
    %17 = vector.broadcast %cst_11 : f32 to vector<8x32xf32>
    %18 = arith.mulf %17, %16 : vector<8x32xf32>
    %cst_12 = arith.constant 4.471500e-02 : f32
    %19 = vector.broadcast %cst_12 : f32 to vector<8x32xf32>
    %20 = arith.mulf %19, %16 : vector<8x32xf32>
    %21 = arith.mulf %20, %16 : vector<8x32xf32>
    %22 = arith.mulf %21, %16 : vector<8x32xf32>
    %23 = arith.addf %16, %22 : vector<8x32xf32>
    %cst_13 = arith.constant 0.797884583 : f32
    %24 = vector.broadcast %cst_13 : f32 to vector<8x32xf32>
    %25 = arith.mulf %24, %23 : vector<8x32xf32>
    %26 = math.tanh %25 : vector<8x32xf32>
    %cst_14 = arith.constant 1.000000e+00 : f32
    %27 = vector.broadcast %cst_14 : f32 to vector<8x32xf32>
    %28 = arith.addf %27, %26 : vector<8x32xf32>
    %29 = arith.mulf %18, %28 : vector<8x32xf32>
    %30 = vector.shape_cast %29 : vector<8x32xf32> to vector<1x8x32xf32>
    %c0_15 = arith.constant 0 : index
    %c0_16 = arith.constant 0 : index
    %31 = vector.load %arg6[%c0_15, %c0_16] : memref<1x32xf32, #tpu.memory_space<vmem>>, vector<1x32xf32>
    %c0_17 = arith.constant 0 : index
    %c0_18 = arith.constant 0 : index
    %32 = vector.load %arg7[%c0_17, %c0_18] : memref<1x32xf32, #tpu.memory_space<vmem>>, vector<1x32xf32>
    %cst_19 = arith.constant dense<0.000000e+00> : vector<1x8xf32>
    %33 = vector.multi_reduction <add>, %30, %cst_19 [2] : vector<1x8x32xf32> to vector<1x8xf32>
    %34 = vector.shape_cast %33 : vector<1x8xf32> to vector<1x8x1xf32>
    %cst_20 = arith.constant 3.200000e+01 : f32
    %35 = vector.broadcast %cst_20 : f32 to vector<1x8x1xf32>
    %36 = arith.divf %34, %35 : vector<1x8x1xf32>
    %37 = vector.broadcast %36 : vector<1x8x1xf32> to vector<1x8x32xf32>
    %38 = arith.subf %30, %37 : vector<1x8x32xf32>
    %39 = arith.mulf %38, %38 : vector<1x8x32xf32>
    %cst_21 = arith.constant dense<0.000000e+00> : vector<1x8xf32>
    %40 = vector.multi_reduction <add>, %39, %cst_21 [2] : vector<1x8x32xf32> to vector<1x8xf32>
    %41 = vector.shape_cast %40 : vector<1x8xf32> to vector<1x8x1xf32>
    %cst_22 = arith.constant 3.200000e+01 : f32
    %42 = vector.broadcast %cst_22 : f32 to vector<1x8x1xf32>
    %43 = arith.divf %41, %42 : vector<1x8x1xf32>
    %44 = vector.broadcast %36 : vector<1x8x1xf32> to vector<1x8x32xf32>
    %45 = arith.subf %30, %44 : vector<1x8x32xf32>
    %cst_23 = arith.constant 9.99999974E-6 : f32
    %46 = vector.broadcast %cst_23 : f32 to vector<1x8x1xf32>
    %47 = arith.addf %43, %46 : vector<1x8x1xf32>
    %48 = math.rsqrt %47 : vector<1x8x1xf32>
    %49 = vector.broadcast %48 : vector<1x8x1xf32> to vector<1x8x32xf32>
    %50 = arith.mulf %45, %49 : vector<1x8x32xf32>
    %51 = vector.shape_cast %31 : vector<1x32xf32> to vector<1x1x32xf32>
    %52 = vector.broadcast %51 : vector<1x1x32xf32> to vector<1x8x32xf32>
    %53 = arith.mulf %50, %52 : vector<1x8x32xf32>
    %54 = vector.shape_cast %32 : vector<1x32xf32> to vector<1x1x32xf32>
    %55 = vector.broadcast %54 : vector<1x1x32xf32> to vector<1x8x32xf32>
    %56 = arith.addf %53, %55 : vector<1x8x32xf32>
    %c0_24 = arith.constant 0 : index
    %c0_25 = arith.constant 0 : index
    %c0_26 = arith.constant 0 : index
    %57 = vector.load %arg2[%c0_24, %c0_25, %c0_26] : memref<1x8x32xf32, #tpu.memory_space<vmem>>, vector<1x8x32xf32>
    %c0_27 = arith.constant 0 : index
    %c0_28 = arith.constant 0 : index
    %c0_29 = arith.constant 0 : index
    %c0_30 = arith.constant 0 : index
    %58 = vector.load %arg8[%c0_27, %c0_28, %c0_29, %c0_30] : memref<2x2x32x96xbf16, #tpu.memory_space<vmem>>, vector<1x1x32x96xbf16>
    %59 = vector.shape_cast %58 : vector<1x1x32x96xbf16> to vector<32x96xbf16>
    %c0_31 = arith.constant 0 : index
    %c0_32 = arith.constant 0 : index
    %c0_33 = arith.constant 0 : index
    %c0_34 = arith.constant 0 : index
    %60 = vector.load %arg9[%c0_31, %c0_32, %c0_33, %c0_34] : memref<2x2x1x96xf32, #tpu.memory_space<vmem>>, vector<1x1x1x96xf32>
    %61 = vector.shape_cast %60 : vector<1x1x1x96xf32> to vector<1x96xf32>
    %c0_35 = arith.constant 0 : index
    %c0_36 = arith.constant 0 : index
    %c0_37 = arith.constant 0 : index
    %c0_38 = arith.constant 0 : index
    %62 = vector.load %arg10[%c0_35, %c0_36, %c0_37, %c0_38] : memref<2x2x32x64xbf16, #tpu.memory_space<vmem>>, vector<1x1x32x64xbf16>
    %63 = vector.shape_cast %62 : vector<1x1x32x64xbf16> to vector<32x64xbf16>
    %c0_39 = arith.constant 0 : index
    %c0_40 = arith.constant 0 : index
    %c0_41 = arith.constant 0 : index
    %c0_42 = arith.constant 0 : index
    %64 = vector.load %arg11[%c0_39, %c0_40, %c0_41, %c0_42] : memref<2x2x1x64xf32, #tpu.memory_space<vmem>>, vector<1x1x1x64xf32>
    %65 = vector.shape_cast %64 : vector<1x1x1x64xf32> to vector<1x64xf32>
    %c0_43 = arith.constant 0 : index
    %c0_44 = arith.constant 0 : index
    %c0_45 = arith.constant 0 : index
    %c0_46 = arith.constant 0 : index
    %66 = vector.load %arg12[%c0_43, %c0_44, %c0_45, %c0_46] : memref<2x2x32x32xbf16, #tpu.memory_space<vmem>>, vector<1x1x32x32xbf16>
    %67 = vector.shape_cast %66 : vector<1x1x32x32xbf16> to vector<32x32xbf16>
    %c0_47 = arith.constant 0 : index
    %c0_48 = arith.constant 0 : index
    %c0_49 = arith.constant 0 : index
    %c0_50 = arith.constant 0 : index
    %68 = vector.load %arg13[%c0_47, %c0_48, %c0_49, %c0_50] : memref<2x2x1x32xf32, #tpu.memory_space<vmem>>, vector<1x1x1x32xf32>
    %69 = vector.shape_cast %68 : vector<1x1x1x32xf32> to vector<1x32xf32>
    %70 = vector.shape_cast %56 : vector<1x8x32xf32> to vector<8x32xf32>
    %71 = arith.truncf %70 : vector<8x32xf32> to vector<8x32xbf16>
    %cst_51 = arith.constant dense<0.000000e+00> : vector<8x96xf32>
    %72 = tpu.matmul %71, %59, %cst_51 {dimension_numbers = #tpu.dot_dimension_numbers<[1], [0], [0], [1], [0, 0, 1, 1], [], []>} : vector<8x32xbf16>, vector<32x96xbf16>, vector<8x96xf32> -> vector<8x96xf32>
    %73 = vector.broadcast %61 : vector<1x96xf32> to vector<8x96xf32>
    %74 = arith.addf %72, %73 : vector<8x96xf32>
    %75 = vector.extract_strided_slice %74 {offsets = [0, 0], sizes = [8, 32], strides = [1, 1]} : vector<8x96xf32> to vector<8x32xf32>
    %76 = vector.extract_strided_slice %74 {offsets = [0, 32], sizes = [8, 32], strides = [1, 1]} : vector<8x96xf32> to vector<8x32xf32>
    %77 = vector.extract_strided_slice %74 {offsets = [0, 64], sizes = [8, 32], strides = [1, 1]} : vector<8x96xf32> to vector<8x32xf32>
    %78 = arith.truncf %11 : vector<64x32xf32> to vector<64x32xbf16>
    %cst_52 = arith.constant dense<0.000000e+00> : vector<64x64xf32>
    %79 = tpu.matmul %78, %63, %cst_52 {dimension_numbers = #tpu.dot_dimension_numbers<[1], [0], [0], [1], [0, 0, 1, 1], [], []>} : vector<64x32xbf16>, vector<32x64xbf16>, vector<64x64xf32> -> vector<64x64xf32>
    %80 = vector.broadcast %65 : vector<1x64xf32> to vector<64x64xf32>
    %81 = arith.addf %79, %80 : vector<64x64xf32>
    %82 = vector.extract_strided_slice %81 {offsets = [0, 0], sizes = [64, 32], strides = [1, 1]} : vector<64x64xf32> to vector<64x32xf32>
    %83 = vector.shape_cast %82 : vector<64x32xf32> to vector<1x8x8x32xf32>
    %84 = vector.extract_strided_slice %81 {offsets = [0, 32], sizes = [64, 32], strides = [1, 1]} : vector<64x64xf32> to vector<64x32xf32>
    %85 = vector.shape_cast %84 : vector<64x32xf32> to vector<1x8x8x32xf32>
    %86 = vector.shape_cast %75 : vector<8x32xf32> to vector<1x8x32xf32>
    %87 = vector.shape_cast %76 : vector<8x32xf32> to vector<1x8x32xf32>
    %88 = vector.shape_cast %77 : vector<8x32xf32> to vector<1x8x32xf32>
    %89 = arith.truncf %86 : vector<1x8x32xf32> to vector<1x8x32xbf16>
    %90 = arith.truncf %87 : vector<1x8x32xf32> to vector<1x8x32xbf16>
    "tpu.trace_start"() <{level = 10 : i32, message = "bid,bjd->bij"}> : () -> ()
    %cst_53 = arith.constant dense<0.000000e+00> : vector<1x8x8xf32>
    %91 = tpu.matmul %89, %90, %cst_53 {dimension_numbers = #tpu.dot_dimension_numbers<[2], [2], [1], [1], [0, 0, 0, 1, 1, 1], [0], [0]>} : vector<1x8x32xbf16>, vector<1x8x32xbf16>, vector<1x8x8xf32> -> vector<1x8x8xf32>
    "tpu.trace_stop"() : () -> ()
    %92 = vector.shape_cast %86 : vector<1x8x32xf32> to vector<1x1x8x32xf32>
    %93 = vector.broadcast %92 : vector<1x1x8x32xf32> to vector<1x8x8x32xf32>
    %94 = arith.mulf %93, %85 : vector<1x8x8x32xf32>
    %95 = vector.shape_cast %87 : vector<1x8x32xf32> to vector<1x8x1x32xf32>
    %96 = vector.broadcast %95 : vector<1x8x1x32xf32> to vector<1x8x8x32xf32>
    %97 = arith.addf %96, %85 : vector<1x8x8x32xf32>
    %98 = arith.mulf %83, %97 : vector<1x8x8x32xf32>
    %99 = arith.addf %94, %98 : vector<1x8x8x32xf32>
    %cst_54 = arith.constant dense<0.000000e+00> : vector<1x8x8xf32>
    %100 = vector.multi_reduction <add>, %99, %cst_54 [3] : vector<1x8x8x32xf32> to vector<1x8x8xf32>
    %101 = vector.shape_cast %100 : vector<1x8x8xf32> to vector<8x8xf32>
    %102 = tpu.transpose %101, [1, 0] : vector<8x8xf32> -> vector<8x8xf32>
    %103 = vector.shape_cast %102 : vector<8x8xf32> to vector<1x8x8xf32>
    %104 = arith.addf %91, %103 : vector<1x8x8xf32>
    %cst_55 = arith.constant 3.125000e-02 : f32
    %105 = vector.broadcast %cst_55 : f32 to vector<1x8x8xf32>
    %106 = arith.mulf %104, %105 : vector<1x8x8xf32>
    %cst_56 = arith.constant 0xFF800000 : f32
    %107 = vector.broadcast %cst_56 : f32 to vector<1x8x8xf32>
    %108 = arith.select %3, %107, %106 : vector<1x8x8xi1>, vector<1x8x8xf32>
    %cst_57 = arith.constant 0.000000e+00 : f32
    %109 = vector.broadcast %cst_57 : f32 to vector<1x8x8xf32>
    %110 = arith.cmpf oeq, %9, %109 : vector<1x8x8xf32>
    %cst_58 = arith.constant 0xFF800000 : f32
    %111 = vector.broadcast %cst_58 : f32 to vector<1x8x8xf32>
    %112 = arith.select %110, %111, %108 : vector<1x8x8xi1>, vector<1x8x8xf32>
    %cst_59 = arith.constant dense<0xFF800000> : vector<1x8xf32>
    %113 = vector.multi_reduction <maximumf>, %112, %cst_59 [2] : vector<1x8x8xf32> to vector<1x8xf32>
    %114 = vector.shape_cast %113 : vector<1x8xf32> to vector<1x8x1xf32>
    %115 = vector.broadcast %114 : vector<1x8x1xf32> to vector<1x8x8xf32>
    %116 = arith.subf %112, %115 : vector<1x8x8xf32>
    %117 = math.exp %116 : vector<1x8x8xf32>
    %cst_60 = arith.constant dense<0.000000e+00> : vector<1x8xf32>
    %118 = vector.multi_reduction <add>, %117, %cst_60 [2] : vector<1x8x8xf32> to vector<1x8xf32>
    %119 = vector.shape_cast %118 : vector<1x8xf32> to vector<1x8x1xf32>
    %120 = tpu.reciprocal %119 {approx = true} : vector<1x8x1xf32> -> vector<1x8x1xf32>
    %121 = vector.broadcast %120 : vector<1x8x1xf32> to vector<1x8x8xf32>
    %122 = arith.mulf %117, %121 : vector<1x8x8xf32>
    %123 = arith.mulf %122, %9 : vector<1x8x8xf32>
    %124 = arith.truncf %123 : vector<1x8x8xf32> to vector<1x8x8xbf16>
    %125 = arith.truncf %88 : vector<1x8x32xf32> to vector<1x8x32xbf16>
    "tpu.trace_start"() <{level = 10 : i32, message = "bij,bjd->bid"}> : () -> ()
    %cst_61 = arith.constant dense<0.000000e+00> : vector<1x8x32xf32>
    %126 = tpu.matmul %124, %125, %cst_61 {dimension_numbers = #tpu.dot_dimension_numbers<[2], [1], [1], [2], [0, 0, 0, 1, 1, 2], [0], [0]>} : vector<1x8x8xbf16>, vector<1x8x32xbf16>, vector<1x8x32xf32> -> vector<1x8x32xf32>
    "tpu.trace_stop"() : () -> ()
    %127 = vector.shape_cast %126 : vector<1x8x32xf32> to vector<8x32xf32>
    %128 = arith.truncf %127 : vector<8x32xf32> to vector<8x32xbf16>
    %cst_62 = arith.constant dense<0.000000e+00> : vector<8x32xf32>
    %129 = tpu.matmul %128, %67, %cst_62 {dimension_numbers = #tpu.dot_dimension_numbers<[1], [0], [0], [1], [0, 0, 1, 1], [], []>} : vector<8x32xbf16>, vector<32x32xbf16>, vector<8x32xf32> -> vector<8x32xf32>
    %130 = vector.broadcast %69 : vector<1x32xf32> to vector<8x32xf32>
    %131 = arith.addf %129, %130 : vector<8x32xf32>
    %132 = vector.shape_cast %131 : vector<8x32xf32> to vector<1x8x32xf32>
    %133 = arith.addf %56, %132 : vector<1x8x32xf32>
    %c0_63 = arith.constant 0 : index
    %c0_64 = arith.constant 0 : index
    %c0_65 = arith.constant 0 : index
    %c0_66 = arith.constant 0 : index
    %134 = vector.load %arg14[%c0_63, %c0_64, %c0_65, %c0_66] : memref<2x3x1x32xf32, #tpu.memory_space<vmem>>, vector<1x1x1x32xf32>
    %135 = vector.shape_cast %134 : vector<1x1x1x32xf32> to vector<1x32xf32>
    %c0_67 = arith.constant 0 : index
    %c0_68 = arith.constant 0 : index
    %c0_69 = arith.constant 0 : index
    %c0_70 = arith.constant 0 : index
    %136 = vector.load %arg15[%c0_67, %c0_68, %c0_69, %c0_70] : memref<2x3x1x32xf32, #tpu.memory_space<vmem>>, vector<1x1x1x32xf32>
    %137 = vector.shape_cast %136 : vector<1x1x1x32xf32> to vector<1x32xf32>
    %cst_71 = arith.constant dense<0.000000e+00> : vector<1x8xf32>
    %138 = vector.multi_reduction <add>, %133, %cst_71 [2] : vector<1x8x32xf32> to vector<1x8xf32>
    %139 = vector.shape_cast %138 : vector<1x8xf32> to vector<1x8x1xf32>
    %cst_72 = arith.constant 3.200000e+01 : f32
    %140 = vector.broadcast %cst_72 : f32 to vector<1x8x1xf32>
    %141 = arith.divf %139, %140 : vector<1x8x1xf32>
    %142 = vector.broadcast %141 : vector<1x8x1xf32> to vector<1x8x32xf32>
    %143 = arith.subf %133, %142 : vector<1x8x32xf32>
    %144 = arith.mulf %143, %143 : vector<1x8x32xf32>
    %cst_73 = arith.constant dense<0.000000e+00> : vector<1x8xf32>
    %145 = vector.multi_reduction <add>, %144, %cst_73 [2] : vector<1x8x32xf32> to vector<1x8xf32>
    %146 = vector.shape_cast %145 : vector<1x8xf32> to vector<1x8x1xf32>
    %cst_74 = arith.constant 3.200000e+01 : f32
    %147 = vector.broadcast %cst_74 : f32 to vector<1x8x1xf32>
    %148 = arith.divf %146, %147 : vector<1x8x1xf32>
    %149 = vector.broadcast %141 : vector<1x8x1xf32> to vector<1x8x32xf32>
    %150 = arith.subf %133, %149 : vector<1x8x32xf32>
    %cst_75 = arith.constant 9.99999974E-6 : f32
    %151 = vector.broadcast %cst_75 : f32 to vector<1x8x1xf32>
    %152 = arith.addf %148, %151 : vector<1x8x1xf32>
    %153 = math.rsqrt %152 : vector<1x8x1xf32>
    %154 = vector.broadcast %153 : vector<1x8x1xf32> to vector<1x8x32xf32>
    %155 = arith.mulf %150, %154 : vector<1x8x32xf32>
    %156 = vector.shape_cast %135 : vector<1x32xf32> to vector<1x1x32xf32>
    %157 = vector.broadcast %156 : vector<1x1x32xf32> to vector<1x8x32xf32>
    %158 = arith.mulf %155, %157 : vector<1x8x32xf32>
    %159 = vector.shape_cast %137 : vector<1x32xf32> to vector<1x1x32xf32>
    %160 = vector.broadcast %159 : vector<1x1x32xf32> to vector<1x8x32xf32>
    %161 = arith.addf %158, %160 : vector<1x8x32xf32>
    %c0_76 = arith.constant 0 : index
    %c1 = arith.constant 1 : index
    %c0_77 = arith.constant 0 : index
    %c0_78 = arith.constant 0 : index
    %162 = vector.load %arg8[%c0_76, %c1, %c0_77, %c0_78] : memref<2x2x32x96xbf16, #tpu.memory_space<vmem>>, vector<1x1x32x96xbf16>
    %163 = vector.shape_cast %162 : vector<1x1x32x96xbf16> to vector<32x96xbf16>
    %c0_79 = arith.constant 0 : index
    %c1_80 = arith.constant 1 : index
    %c0_81 = arith.constant 0 : index
    %c0_82 = arith.constant 0 : index
    %164 = vector.load %arg9[%c0_79, %c1_80, %c0_81, %c0_82] : memref<2x2x1x96xf32, #tpu.memory_space<vmem>>, vector<1x1x1x96xf32>
    %165 = vector.shape_cast %164 : vector<1x1x1x96xf32> to vector<1x96xf32>
    %c0_83 = arith.constant 0 : index
    %c1_84 = arith.constant 1 : index
    %c0_85 = arith.constant 0 : index
    %c0_86 = arith.constant 0 : index
    %166 = vector.load %arg10[%c0_83, %c1_84, %c0_85, %c0_86] : memref<2x2x32x64xbf16, #tpu.memory_space<vmem>>, vector<1x1x32x64xbf16>
    %167 = vector.shape_cast %166 : vector<1x1x32x64xbf16> to vector<32x64xbf16>
    %c0_87 = arith.constant 0 : index
    %c1_88 = arith.constant 1 : index
    %c0_89 = arith.constant 0 : index
    %c0_90 = arith.constant 0 : index
    %168 = vector.load %arg11[%c0_87, %c1_88, %c0_89, %c0_90] : memref<2x2x1x64xf32, #tpu.memory_space<vmem>>, vector<1x1x1x64xf32>
    %169 = vector.shape_cast %168 : vector<1x1x1x64xf32> to vector<1x64xf32>
    %c0_91 = arith.constant 0 : index
    %c1_92 = arith.constant 1 : index
    %c0_93 = arith.constant 0 : index
    %c0_94 = arith.constant 0 : index
    %170 = vector.load %arg12[%c0_91, %c1_92, %c0_93, %c0_94] : memref<2x2x32x32xbf16, #tpu.memory_space<vmem>>, vector<1x1x32x32xbf16>
    %171 = vector.shape_cast %170 : vector<1x1x32x32xbf16> to vector<32x32xbf16>
    %c0_95 = arith.constant 0 : index
    %c1_96 = arith.constant 1 : index
    %c0_97 = arith.constant 0 : index
    %c0_98 = arith.constant 0 : index
    %172 = vector.load %arg13[%c0_95, %c1_96, %c0_97, %c0_98] : memref<2x2x1x32xf32, #tpu.memory_space<vmem>>, vector<1x1x1x32xf32>
    %173 = vector.shape_cast %172 : vector<1x1x1x32xf32> to vector<1x32xf32>
    %174 = vector.shape_cast %57 : vector<1x8x32xf32> to vector<8x32xf32>
    %175 = vector.shape_cast %161 : vector<1x8x32xf32> to vector<8x32xf32>
    %176 = vector.extract_strided_slice %163 {offsets = [0, 0], sizes = [32, 32], strides = [1, 1]} : vector<32x96xbf16> to vector<32x32xbf16>
    %177 = arith.truncf %174 : vector<8x32xf32> to vector<8x32xbf16>
    %cst_99 = arith.constant dense<0.000000e+00> : vector<8x32xf32>
    %178 = tpu.matmul %177, %176, %cst_99 {dimension_numbers = #tpu.dot_dimension_numbers<[1], [0], [0], [1], [0, 0, 1, 1], [], []>} : vector<8x32xbf16>, vector<32x32xbf16>, vector<8x32xf32> -> vector<8x32xf32>
    %179 = vector.extract_strided_slice %165 {offsets = [0, 0], sizes = [1, 32], strides = [1, 1]} : vector<1x96xf32> to vector<1x32xf32>
    %180 = vector.broadcast %179 : vector<1x32xf32> to vector<8x32xf32>
    %181 = arith.addf %178, %180 : vector<8x32xf32>
    %182 = vector.extract_strided_slice %163 {offsets = [0, 32], sizes = [32, 64], strides = [1, 1]} : vector<32x96xbf16> to vector<32x64xbf16>
    %183 = arith.truncf %175 : vector<8x32xf32> to vector<8x32xbf16>
    %cst_100 = arith.constant dense<0.000000e+00> : vector<8x64xf32>
    %184 = tpu.matmul %183, %182, %cst_100 {dimension_numbers = #tpu.dot_dimension_numbers<[1], [0], [0], [1], [0, 0, 1, 1], [], []>} : vector<8x32xbf16>, vector<32x64xbf16>, vector<8x64xf32> -> vector<8x64xf32>
    %185 = vector.extract_strided_slice %165 {offsets = [0, 32], sizes = [1, 64], strides = [1, 1]} : vector<1x96xf32> to vector<1x64xf32>
    %186 = vector.broadcast %185 : vector<1x64xf32> to vector<8x64xf32>
    %187 = arith.addf %184, %186 : vector<8x64xf32>
    %188 = vector.extract_strided_slice %187 {offsets = [0, 0], sizes = [8, 32], strides = [1, 1]} : vector<8x64xf32> to vector<8x32xf32>
    %189 = vector.extract_strided_slice %187 {offsets = [0, 32], sizes = [8, 32], strides = [1, 1]} : vector<8x64xf32> to vector<8x32xf32>
    %190 = arith.truncf %11 : vector<64x32xf32> to vector<64x32xbf16>
    %cst_101 = arith.constant dense<0.000000e+00> : vector<64x64xf32>
    %191 = tpu.matmul %190, %167, %cst_101 {dimension_numbers = #tpu.dot_dimension_numbers<[1], [0], [0], [1], [0, 0, 1, 1], [], []>} : vector<64x32xbf16>, vector<32x64xbf16>, vector<64x64xf32> -> vector<64x64xf32>
    %192 = vector.broadcast %169 : vector<1x64xf32> to vector<64x64xf32>
    %193 = arith.addf %191, %192 : vector<64x64xf32>
    %194 = vector.extract_strided_slice %193 {offsets = [0, 0], sizes = [64, 32], strides = [1, 1]} : vector<64x64xf32> to vector<64x32xf32>
    %195 = vector.shape_cast %194 : vector<64x32xf32> to vector<1x8x8x32xf32>
    %196 = vector.extract_strided_slice %193 {offsets = [0, 32], sizes = [64, 32], strides = [1, 1]} : vector<64x64xf32> to vector<64x32xf32>
    %197 = vector.shape_cast %196 : vector<64x32xf32> to vector<1x8x8x32xf32>
    %198 = vector.shape_cast %181 : vector<8x32xf32> to vector<1x8x32xf32>
    %199 = vector.shape_cast %188 : vector<8x32xf32> to vector<1x8x32xf32>
    %200 = vector.shape_cast %189 : vector<8x32xf32> to vector<1x8x32xf32>
    %201 = arith.truncf %198 : vector<1x8x32xf32> to vector<1x8x32xbf16>
    %202 = arith.truncf %199 : vector<1x8x32xf32> to vector<1x8x32xbf16>
    "tpu.trace_start"() <{level = 10 : i32, message = "bid,bjd->bij"}> : () -> ()
    %cst_102 = arith.constant dense<0.000000e+00> : vector<1x8x8xf32>
    %203 = tpu.matmul %201, %202, %cst_102 {dimension_numbers = #tpu.dot_dimension_numbers<[2], [2], [1], [1], [0, 0, 0, 1, 1, 1], [0], [0]>} : vector<1x8x32xbf16>, vector<1x8x32xbf16>, vector<1x8x8xf32> -> vector<1x8x8xf32>
    "tpu.trace_stop"() : () -> ()
    %204 = vector.shape_cast %198 : vector<1x8x32xf32> to vector<1x1x8x32xf32>
    %205 = vector.broadcast %204 : vector<1x1x8x32xf32> to vector<1x8x8x32xf32>
    %206 = arith.mulf %205, %197 : vector<1x8x8x32xf32>
    %207 = vector.shape_cast %199 : vector<1x8x32xf32> to vector<1x8x1x32xf32>
    %208 = vector.broadcast %207 : vector<1x8x1x32xf32> to vector<1x8x8x32xf32>
    %209 = arith.addf %208, %197 : vector<1x8x8x32xf32>
    %210 = arith.mulf %195, %209 : vector<1x8x8x32xf32>
    %211 = arith.addf %206, %210 : vector<1x8x8x32xf32>
    %cst_103 = arith.constant dense<0.000000e+00> : vector<1x8x8xf32>
    %212 = vector.multi_reduction <add>, %211, %cst_103 [3] : vector<1x8x8x32xf32> to vector<1x8x8xf32>
    %213 = vector.shape_cast %212 : vector<1x8x8xf32> to vector<8x8xf32>
    %214 = tpu.transpose %213, [1, 0] : vector<8x8xf32> -> vector<8x8xf32>
    %215 = vector.shape_cast %214 : vector<8x8xf32> to vector<1x8x8xf32>
    %216 = arith.addf %203, %215 : vector<1x8x8xf32>
    %cst_104 = arith.constant 3.125000e-02 : f32
    %217 = vector.broadcast %cst_104 : f32 to vector<1x8x8xf32>
    %218 = arith.mulf %216, %217 : vector<1x8x8xf32>
    %cst_105 = arith.constant 0xFF800000 : f32
    %219 = vector.broadcast %cst_105 : f32 to vector<1x8x8xf32>
    %220 = arith.select %3, %219, %218 : vector<1x8x8xi1>, vector<1x8x8xf32>
    %cst_106 = arith.constant 0.000000e+00 : f32
    %221 = vector.broadcast %cst_106 : f32 to vector<1x8x8xf32>
    %222 = arith.cmpf oeq, %9, %221 : vector<1x8x8xf32>
    %cst_107 = arith.constant 0xFF800000 : f32
    %223 = vector.broadcast %cst_107 : f32 to vector<1x8x8xf32>
    %224 = arith.select %222, %223, %220 : vector<1x8x8xi1>, vector<1x8x8xf32>
    %cst_108 = arith.constant dense<0xFF800000> : vector<1x8xf32>
    %225 = vector.multi_reduction <maximumf>, %224, %cst_108 [2] : vector<1x8x8xf32> to vector<1x8xf32>
    %226 = vector.shape_cast %225 : vector<1x8xf32> to vector<1x8x1xf32>
    %227 = vector.broadcast %226 : vector<1x8x1xf32> to vector<1x8x8xf32>
    %228 = arith.subf %224, %227 : vector<1x8x8xf32>
    %229 = math.exp %228 : vector<1x8x8xf32>
    %cst_109 = arith.constant dense<0.000000e+00> : vector<1x8xf32>
    %230 = vector.multi_reduction <add>, %229, %cst_109 [2] : vector<1x8x8xf32> to vector<1x8xf32>
    %231 = vector.shape_cast %230 : vector<1x8xf32> to vector<1x8x1xf32>
    %232 = tpu.reciprocal %231 {approx = true} : vector<1x8x1xf32> -> vector<1x8x1xf32>
    %233 = vector.broadcast %232 : vector<1x8x1xf32> to vector<1x8x8xf32>
    %234 = arith.mulf %229, %233 : vector<1x8x8xf32>
    %235 = arith.mulf %234, %9 : vector<1x8x8xf32>
    %236 = arith.truncf %235 : vector<1x8x8xf32> to vector<1x8x8xbf16>
    %237 = arith.truncf %200 : vector<1x8x32xf32> to vector<1x8x32xbf16>
    "tpu.trace_start"() <{level = 10 : i32, message = "bij,bjd->bid"}> : () -> ()
    %cst_110 = arith.constant dense<0.000000e+00> : vector<1x8x32xf32>
    %238 = tpu.matmul %236, %237, %cst_110 {dimension_numbers = #tpu.dot_dimension_numbers<[2], [1], [1], [2], [0, 0, 0, 1, 1, 2], [0], [0]>} : vector<1x8x8xbf16>, vector<1x8x32xbf16>, vector<1x8x32xf32> -> vector<1x8x32xf32>
    "tpu.trace_stop"() : () -> ()
    %239 = vector.shape_cast %238 : vector<1x8x32xf32> to vector<8x32xf32>
    %240 = arith.truncf %239 : vector<8x32xf32> to vector<8x32xbf16>
    %cst_111 = arith.constant dense<0.000000e+00> : vector<8x32xf32>
    %241 = tpu.matmul %240, %171, %cst_111 {dimension_numbers = #tpu.dot_dimension_numbers<[1], [0], [0], [1], [0, 0, 1, 1], [], []>} : vector<8x32xbf16>, vector<32x32xbf16>, vector<8x32xf32> -> vector<8x32xf32>
    %242 = vector.broadcast %173 : vector<1x32xf32> to vector<8x32xf32>
    %243 = arith.addf %241, %242 : vector<8x32xf32>
    %244 = vector.shape_cast %243 : vector<8x32xf32> to vector<1x8x32xf32>
    %245 = arith.addf %57, %244 : vector<1x8x32xf32>
    %c0_112 = arith.constant 0 : index
    %c1_113 = arith.constant 1 : index
    %c0_114 = arith.constant 0 : index
    %c0_115 = arith.constant 0 : index
    %246 = vector.load %arg14[%c0_112, %c1_113, %c0_114, %c0_115] : memref<2x3x1x32xf32, #tpu.memory_space<vmem>>, vector<1x1x1x32xf32>
    %247 = vector.shape_cast %246 : vector<1x1x1x32xf32> to vector<1x32xf32>
    %c0_116 = arith.constant 0 : index
    %c1_117 = arith.constant 1 : index
    %c0_118 = arith.constant 0 : index
    %c0_119 = arith.constant 0 : index
    %248 = vector.load %arg15[%c0_116, %c1_117, %c0_118, %c0_119] : memref<2x3x1x32xf32, #tpu.memory_space<vmem>>, vector<1x1x1x32xf32>
    %249 = vector.shape_cast %248 : vector<1x1x1x32xf32> to vector<1x32xf32>
    %cst_120 = arith.constant dense<0.000000e+00> : vector<1x8xf32>
    %250 = vector.multi_reduction <add>, %245, %cst_120 [2] : vector<1x8x32xf32> to vector<1x8xf32>
    %251 = vector.shape_cast %250 : vector<1x8xf32> to vector<1x8x1xf32>
    %cst_121 = arith.constant 3.200000e+01 : f32
    %252 = vector.broadcast %cst_121 : f32 to vector<1x8x1xf32>
    %253 = arith.divf %251, %252 : vector<1x8x1xf32>
    %254 = vector.broadcast %253 : vector<1x8x1xf32> to vector<1x8x32xf32>
    %255 = arith.subf %245, %254 : vector<1x8x32xf32>
    %256 = arith.mulf %255, %255 : vector<1x8x32xf32>
    %cst_122 = arith.constant dense<0.000000e+00> : vector<1x8xf32>
    %257 = vector.multi_reduction <add>, %256, %cst_122 [2] : vector<1x8x32xf32> to vector<1x8xf32>
    %258 = vector.shape_cast %257 : vector<1x8xf32> to vector<1x8x1xf32>
    %cst_123 = arith.constant 3.200000e+01 : f32
    %259 = vector.broadcast %cst_123 : f32 to vector<1x8x1xf32>
    %260 = arith.divf %258, %259 : vector<1x8x1xf32>
    %261 = vector.broadcast %253 : vector<1x8x1xf32> to vector<1x8x32xf32>
    %262 = arith.subf %245, %261 : vector<1x8x32xf32>
    %cst_124 = arith.constant 9.99999974E-6 : f32
    %263 = vector.broadcast %cst_124 : f32 to vector<1x8x1xf32>
    %264 = arith.addf %260, %263 : vector<1x8x1xf32>
    %265 = math.rsqrt %264 : vector<1x8x1xf32>
    %266 = vector.broadcast %265 : vector<1x8x1xf32> to vector<1x8x32xf32>
    %267 = arith.mulf %262, %266 : vector<1x8x32xf32>
    %268 = vector.shape_cast %247 : vector<1x32xf32> to vector<1x1x32xf32>
    %269 = vector.broadcast %268 : vector<1x1x32xf32> to vector<1x8x32xf32>
    %270 = arith.mulf %267, %269 : vector<1x8x32xf32>
    %271 = vector.shape_cast %249 : vector<1x32xf32> to vector<1x1x32xf32>
    %272 = vector.broadcast %271 : vector<1x1x32xf32> to vector<1x8x32xf32>
    %273 = arith.addf %270, %272 : vector<1x8x32xf32>
    %274 = vector.shape_cast %273 : vector<1x8x32xf32> to vector<8x32xf32>
    %c0_125 = arith.constant 0 : index
    %c0_126 = arith.constant 0 : index
    %c0_127 = arith.constant 0 : index
    %275 = vector.load %arg16[%c0_125, %c0_126, %c0_127] : memref<2x32x32xbf16, #tpu.memory_space<vmem>>, vector<1x32x32xbf16>
    %276 = vector.shape_cast %275 : vector<1x32x32xbf16> to vector<32x32xbf16>
    %277 = arith.truncf %274 : vector<8x32xf32> to vector<8x32xbf16>
    %cst_128 = arith.constant dense<0.000000e+00> : vector<8x32xf32>
    %278 = tpu.matmul %277, %276, %cst_128 {dimension_numbers = #tpu.dot_dimension_numbers<[1], [0], [0], [1], [0, 0, 1, 1], [], []>} : vector<8x32xbf16>, vector<32x32xbf16>, vector<8x32xf32> -> vector<8x32xf32>
    %c0_129 = arith.constant 0 : index
    %c0_130 = arith.constant 0 : index
    %c0_131 = arith.constant 0 : index
    %279 = vector.load %arg17[%c0_129, %c0_130, %c0_131] : memref<2x1x32xf32, #tpu.memory_space<vmem>>, vector<1x1x32xf32>
    %280 = vector.shape_cast %279 : vector<1x1x32xf32> to vector<1x32xf32>
    %281 = vector.broadcast %280 : vector<1x32xf32> to vector<8x32xf32>
    %282 = arith.addf %278, %281 : vector<8x32xf32>
    %cst_132 = arith.constant 5.000000e-01 : f32
    %283 = vector.broadcast %cst_132 : f32 to vector<8x32xf32>
    %284 = arith.mulf %283, %282 : vector<8x32xf32>
    %cst_133 = arith.constant 4.471500e-02 : f32
    %285 = vector.broadcast %cst_133 : f32 to vector<8x32xf32>
    %286 = arith.mulf %285, %282 : vector<8x32xf32>
    %287 = arith.mulf %286, %282 : vector<8x32xf32>
    %288 = arith.mulf %287, %282 : vector<8x32xf32>
    %289 = arith.addf %282, %288 : vector<8x32xf32>
    %cst_134 = arith.constant 0.797884583 : f32
    %290 = vector.broadcast %cst_134 : f32 to vector<8x32xf32>
    %291 = arith.mulf %290, %289 : vector<8x32xf32>
    %292 = math.tanh %291 : vector<8x32xf32>
    %cst_135 = arith.constant 1.000000e+00 : f32
    %293 = vector.broadcast %cst_135 : f32 to vector<8x32xf32>
    %294 = arith.addf %293, %292 : vector<8x32xf32>
    %295 = arith.mulf %284, %294 : vector<8x32xf32>
    %c0_136 = arith.constant 0 : index
    %c0_137 = arith.constant 0 : index
    %c0_138 = arith.constant 0 : index
    %296 = vector.load %arg18[%c0_136, %c0_137, %c0_138] : memref<2x32x32xbf16, #tpu.memory_space<vmem>>, vector<1x32x32xbf16>
    %297 = vector.shape_cast %296 : vector<1x32x32xbf16> to vector<32x32xbf16>
    %298 = arith.truncf %295 : vector<8x32xf32> to vector<8x32xbf16>
    %cst_139 = arith.constant dense<0.000000e+00> : vector<8x32xf32>
    %299 = tpu.matmul %298, %297, %cst_139 {dimension_numbers = #tpu.dot_dimension_numbers<[1], [0], [0], [1], [0, 0, 1, 1], [], []>} : vector<8x32xbf16>, vector<32x32xbf16>, vector<8x32xf32> -> vector<8x32xf32>
    %c0_140 = arith.constant 0 : index
    %c0_141 = arith.constant 0 : index
    %c0_142 = arith.constant 0 : index
    %300 = vector.load %arg19[%c0_140, %c0_141, %c0_142] : memref<2x1x32xf32, #tpu.memory_space<vmem>>, vector<1x1x32xf32>
    %301 = vector.shape_cast %300 : vector<1x1x32xf32> to vector<1x32xf32>
    %302 = vector.broadcast %301 : vector<1x32xf32> to vector<8x32xf32>
    %303 = arith.addf %299, %302 : vector<8x32xf32>
    %304 = vector.shape_cast %303 : vector<8x32xf32> to vector<1x8x32xf32>
    %305 = arith.addf %273, %304 : vector<1x8x32xf32>
    %c0_143 = arith.constant 0 : index
    %c2 = arith.constant 2 : index
    %c0_144 = arith.constant 0 : index
    %c0_145 = arith.constant 0 : index
    %306 = vector.load %arg14[%c0_143, %c2, %c0_144, %c0_145] : memref<2x3x1x32xf32, #tpu.memory_space<vmem>>, vector<1x1x1x32xf32>
    %307 = vector.shape_cast %306 : vector<1x1x1x32xf32> to vector<1x32xf32>
    %c0_146 = arith.constant 0 : index
    %c2_147 = arith.constant 2 : index
    %c0_148 = arith.constant 0 : index
    %c0_149 = arith.constant 0 : index
    %308 = vector.load %arg15[%c0_146, %c2_147, %c0_148, %c0_149] : memref<2x3x1x32xf32, #tpu.memory_space<vmem>>, vector<1x1x1x32xf32>
    %309 = vector.shape_cast %308 : vector<1x1x1x32xf32> to vector<1x32xf32>
    %cst_150 = arith.constant dense<0.000000e+00> : vector<1x8xf32>
    %310 = vector.multi_reduction <add>, %305, %cst_150 [2] : vector<1x8x32xf32> to vector<1x8xf32>
    %311 = vector.shape_cast %310 : vector<1x8xf32> to vector<1x8x1xf32>
    %cst_151 = arith.constant 3.200000e+01 : f32
    %312 = vector.broadcast %cst_151 : f32 to vector<1x8x1xf32>
    %313 = arith.divf %311, %312 : vector<1x8x1xf32>
    %314 = vector.broadcast %313 : vector<1x8x1xf32> to vector<1x8x32xf32>
    %315 = arith.subf %305, %314 : vector<1x8x32xf32>
    %316 = arith.mulf %315, %315 : vector<1x8x32xf32>
    %cst_152 = arith.constant dense<0.000000e+00> : vector<1x8xf32>
    %317 = vector.multi_reduction <add>, %316, %cst_152 [2] : vector<1x8x32xf32> to vector<1x8xf32>
    %318 = vector.shape_cast %317 : vector<1x8xf32> to vector<1x8x1xf32>
    %cst_153 = arith.constant 3.200000e+01 : f32
    %319 = vector.broadcast %cst_153 : f32 to vector<1x8x1xf32>
    %320 = arith.divf %318, %319 : vector<1x8x1xf32>
    %321 = vector.broadcast %313 : vector<1x8x1xf32> to vector<1x8x32xf32>
    %322 = arith.subf %305, %321 : vector<1x8x32xf32>
    %cst_154 = arith.constant 9.99999974E-6 : f32
    %323 = vector.broadcast %cst_154 : f32 to vector<1x8x1xf32>
    %324 = arith.addf %320, %323 : vector<1x8x1xf32>
    %325 = math.rsqrt %324 : vector<1x8x1xf32>
    %326 = vector.broadcast %325 : vector<1x8x1xf32> to vector<1x8x32xf32>
    %327 = arith.mulf %322, %326 : vector<1x8x32xf32>
    %328 = vector.shape_cast %307 : vector<1x32xf32> to vector<1x1x32xf32>
    %329 = vector.broadcast %328 : vector<1x1x32xf32> to vector<1x8x32xf32>
    %330 = arith.mulf %327, %329 : vector<1x8x32xf32>
    %331 = vector.shape_cast %309 : vector<1x32xf32> to vector<1x1x32xf32>
    %332 = vector.broadcast %331 : vector<1x1x32xf32> to vector<1x8x32xf32>
    %333 = arith.addf %330, %332 : vector<1x8x32xf32>
    %c1_155 = arith.constant 1 : index
    %c0_156 = arith.constant 0 : index
    %c0_157 = arith.constant 0 : index
    %c0_158 = arith.constant 0 : index
    %334 = vector.load %arg8[%c1_155, %c0_156, %c0_157, %c0_158] : memref<2x2x32x96xbf16, #tpu.memory_space<vmem>>, vector<1x1x32x96xbf16>
    %335 = vector.shape_cast %334 : vector<1x1x32x96xbf16> to vector<32x96xbf16>
    %c1_159 = arith.constant 1 : index
    %c0_160 = arith.constant 0 : index
    %c0_161 = arith.constant 0 : index
    %c0_162 = arith.constant 0 : index
    %336 = vector.load %arg9[%c1_159, %c0_160, %c0_161, %c0_162] : memref<2x2x1x96xf32, #tpu.memory_space<vmem>>, vector<1x1x1x96xf32>
    %337 = vector.shape_cast %336 : vector<1x1x1x96xf32> to vector<1x96xf32>
    %c1_163 = arith.constant 1 : index
    %c0_164 = arith.constant 0 : index
    %c0_165 = arith.constant 0 : index
    %c0_166 = arith.constant 0 : index
    %338 = vector.load %arg10[%c1_163, %c0_164, %c0_165, %c0_166] : memref<2x2x32x64xbf16, #tpu.memory_space<vmem>>, vector<1x1x32x64xbf16>
    %339 = vector.shape_cast %338 : vector<1x1x32x64xbf16> to vector<32x64xbf16>
    %c1_167 = arith.constant 1 : index
    %c0_168 = arith.constant 0 : index
    %c0_169 = arith.constant 0 : index
    %c0_170 = arith.constant 0 : index
    %340 = vector.load %arg11[%c1_167, %c0_168, %c0_169, %c0_170] : memref<2x2x1x64xf32, #tpu.memory_space<vmem>>, vector<1x1x1x64xf32>
    %341 = vector.shape_cast %340 : vector<1x1x1x64xf32> to vector<1x64xf32>
    %c1_171 = arith.constant 1 : index
    %c0_172 = arith.constant 0 : index
    %c0_173 = arith.constant 0 : index
    %c0_174 = arith.constant 0 : index
    %342 = vector.load %arg12[%c1_171, %c0_172, %c0_173, %c0_174] : memref<2x2x32x32xbf16, #tpu.memory_space<vmem>>, vector<1x1x32x32xbf16>
    %343 = vector.shape_cast %342 : vector<1x1x32x32xbf16> to vector<32x32xbf16>
    %c1_175 = arith.constant 1 : index
    %c0_176 = arith.constant 0 : index
    %c0_177 = arith.constant 0 : index
    %c0_178 = arith.constant 0 : index
    %344 = vector.load %arg13[%c1_175, %c0_176, %c0_177, %c0_178] : memref<2x2x1x32xf32, #tpu.memory_space<vmem>>, vector<1x1x1x32xf32>
    %345 = vector.shape_cast %344 : vector<1x1x1x32xf32> to vector<1x32xf32>
    %346 = vector.shape_cast %333 : vector<1x8x32xf32> to vector<8x32xf32>
    %347 = arith.truncf %346 : vector<8x32xf32> to vector<8x32xbf16>
    %cst_179 = arith.constant dense<0.000000e+00> : vector<8x96xf32>
    %348 = tpu.matmul %347, %335, %cst_179 {dimension_numbers = #tpu.dot_dimension_numbers<[1], [0], [0], [1], [0, 0, 1, 1], [], []>} : vector<8x32xbf16>, vector<32x96xbf16>, vector<8x96xf32> -> vector<8x96xf32>
    %349 = vector.broadcast %337 : vector<1x96xf32> to vector<8x96xf32>
    %350 = arith.addf %348, %349 : vector<8x96xf32>
    %351 = vector.extract_strided_slice %350 {offsets = [0, 0], sizes = [8, 32], strides = [1, 1]} : vector<8x96xf32> to vector<8x32xf32>
    %352 = vector.extract_strided_slice %350 {offsets = [0, 32], sizes = [8, 32], strides = [1, 1]} : vector<8x96xf32> to vector<8x32xf32>
    %353 = vector.extract_strided_slice %350 {offsets = [0, 64], sizes = [8, 32], strides = [1, 1]} : vector<8x96xf32> to vector<8x32xf32>
    %354 = arith.truncf %11 : vector<64x32xf32> to vector<64x32xbf16>
    %cst_180 = arith.constant dense<0.000000e+00> : vector<64x64xf32>
    %355 = tpu.matmul %354, %339, %cst_180 {dimension_numbers = #tpu.dot_dimension_numbers<[1], [0], [0], [1], [0, 0, 1, 1], [], []>} : vector<64x32xbf16>, vector<32x64xbf16>, vector<64x64xf32> -> vector<64x64xf32>
    %356 = vector.broadcast %341 : vector<1x64xf32> to vector<64x64xf32>
    %357 = arith.addf %355, %356 : vector<64x64xf32>
    %358 = vector.extract_strided_slice %357 {offsets = [0, 0], sizes = [64, 32], strides = [1, 1]} : vector<64x64xf32> to vector<64x32xf32>
    %359 = vector.shape_cast %358 : vector<64x32xf32> to vector<1x8x8x32xf32>
    %360 = vector.extract_strided_slice %357 {offsets = [0, 32], sizes = [64, 32], strides = [1, 1]} : vector<64x64xf32> to vector<64x32xf32>
    %361 = vector.shape_cast %360 : vector<64x32xf32> to vector<1x8x8x32xf32>
    %362 = vector.shape_cast %351 : vector<8x32xf32> to vector<1x8x32xf32>
    %363 = vector.shape_cast %352 : vector<8x32xf32> to vector<1x8x32xf32>
    %364 = vector.shape_cast %353 : vector<8x32xf32> to vector<1x8x32xf32>
    %365 = arith.truncf %362 : vector<1x8x32xf32> to vector<1x8x32xbf16>
    %366 = arith.truncf %363 : vector<1x8x32xf32> to vector<1x8x32xbf16>
    "tpu.trace_start"() <{level = 10 : i32, message = "bid,bjd->bij"}> : () -> ()
    %cst_181 = arith.constant dense<0.000000e+00> : vector<1x8x8xf32>
    %367 = tpu.matmul %365, %366, %cst_181 {dimension_numbers = #tpu.dot_dimension_numbers<[2], [2], [1], [1], [0, 0, 0, 1, 1, 1], [0], [0]>} : vector<1x8x32xbf16>, vector<1x8x32xbf16>, vector<1x8x8xf32> -> vector<1x8x8xf32>
    "tpu.trace_stop"() : () -> ()
    %368 = vector.shape_cast %362 : vector<1x8x32xf32> to vector<1x1x8x32xf32>
    %369 = vector.broadcast %368 : vector<1x1x8x32xf32> to vector<1x8x8x32xf32>
    %370 = arith.mulf %369, %361 : vector<1x8x8x32xf32>
    %371 = vector.shape_cast %363 : vector<1x8x32xf32> to vector<1x8x1x32xf32>
    %372 = vector.broadcast %371 : vector<1x8x1x32xf32> to vector<1x8x8x32xf32>
    %373 = arith.addf %372, %361 : vector<1x8x8x32xf32>
    %374 = arith.mulf %359, %373 : vector<1x8x8x32xf32>
    %375 = arith.addf %370, %374 : vector<1x8x8x32xf32>
    %cst_182 = arith.constant dense<0.000000e+00> : vector<1x8x8xf32>
    %376 = vector.multi_reduction <add>, %375, %cst_182 [3] : vector<1x8x8x32xf32> to vector<1x8x8xf32>
    %377 = vector.shape_cast %376 : vector<1x8x8xf32> to vector<8x8xf32>
    %378 = tpu.transpose %377, [1, 0] : vector<8x8xf32> -> vector<8x8xf32>
    %379 = vector.shape_cast %378 : vector<8x8xf32> to vector<1x8x8xf32>
    %380 = arith.addf %367, %379 : vector<1x8x8xf32>
    %cst_183 = arith.constant 3.125000e-02 : f32
    %381 = vector.broadcast %cst_183 : f32 to vector<1x8x8xf32>
    %382 = arith.mulf %380, %381 : vector<1x8x8xf32>
    %cst_184 = arith.constant 0xFF800000 : f32
    %383 = vector.broadcast %cst_184 : f32 to vector<1x8x8xf32>
    %384 = arith.select %3, %383, %382 : vector<1x8x8xi1>, vector<1x8x8xf32>
    %cst_185 = arith.constant 0.000000e+00 : f32
    %385 = vector.broadcast %cst_185 : f32 to vector<1x8x8xf32>
    %386 = arith.cmpf oeq, %9, %385 : vector<1x8x8xf32>
    %cst_186 = arith.constant 0xFF800000 : f32
    %387 = vector.broadcast %cst_186 : f32 to vector<1x8x8xf32>
    %388 = arith.select %386, %387, %384 : vector<1x8x8xi1>, vector<1x8x8xf32>
    %cst_187 = arith.constant dense<0xFF800000> : vector<1x8xf32>
    %389 = vector.multi_reduction <maximumf>, %388, %cst_187 [2] : vector<1x8x8xf32> to vector<1x8xf32>
    %390 = vector.shape_cast %389 : vector<1x8xf32> to vector<1x8x1xf32>
    %391 = vector.broadcast %390 : vector<1x8x1xf32> to vector<1x8x8xf32>
    %392 = arith.subf %388, %391 : vector<1x8x8xf32>
    %393 = math.exp %392 : vector<1x8x8xf32>
    %cst_188 = arith.constant dense<0.000000e+00> : vector<1x8xf32>
    %394 = vector.multi_reduction <add>, %393, %cst_188 [2] : vector<1x8x8xf32> to vector<1x8xf32>
    %395 = vector.shape_cast %394 : vector<1x8xf32> to vector<1x8x1xf32>
    %396 = tpu.reciprocal %395 {approx = true} : vector<1x8x1xf32> -> vector<1x8x1xf32>
    %397 = vector.broadcast %396 : vector<1x8x1xf32> to vector<1x8x8xf32>
    %398 = arith.mulf %393, %397 : vector<1x8x8xf32>
    %399 = arith.mulf %398, %9 : vector<1x8x8xf32>
    %400 = arith.truncf %399 : vector<1x8x8xf32> to vector<1x8x8xbf16>
    %401 = arith.truncf %364 : vector<1x8x32xf32> to vector<1x8x32xbf16>
    "tpu.trace_start"() <{level = 10 : i32, message = "bij,bjd->bid"}> : () -> ()
    %cst_189 = arith.constant dense<0.000000e+00> : vector<1x8x32xf32>
    %402 = tpu.matmul %400, %401, %cst_189 {dimension_numbers = #tpu.dot_dimension_numbers<[2], [1], [1], [2], [0, 0, 0, 1, 1, 2], [0], [0]>} : vector<1x8x8xbf16>, vector<1x8x32xbf16>, vector<1x8x32xf32> -> vector<1x8x32xf32>
    "tpu.trace_stop"() : () -> ()
    %403 = vector.shape_cast %402 : vector<1x8x32xf32> to vector<8x32xf32>
    %404 = arith.truncf %403 : vector<8x32xf32> to vector<8x32xbf16>
    %cst_190 = arith.constant dense<0.000000e+00> : vector<8x32xf32>
    %405 = tpu.matmul %404, %343, %cst_190 {dimension_numbers = #tpu.dot_dimension_numbers<[1], [0], [0], [1], [0, 0, 1, 1], [], []>} : vector<8x32xbf16>, vector<32x32xbf16>, vector<8x32xf32> -> vector<8x32xf32>
    %406 = vector.broadcast %345 : vector<1x32xf32> to vector<8x32xf32>
    %407 = arith.addf %405, %406 : vector<8x32xf32>
    %408 = vector.shape_cast %407 : vector<8x32xf32> to vector<1x8x32xf32>
    %409 = arith.addf %333, %408 : vector<1x8x32xf32>
    %c1_191 = arith.constant 1 : index
    %c0_192 = arith.constant 0 : index
    %c0_193 = arith.constant 0 : index
    %c0_194 = arith.constant 0 : index
    %410 = vector.load %arg14[%c1_191, %c0_192, %c0_193, %c0_194] : memref<2x3x1x32xf32, #tpu.memory_space<vmem>>, vector<1x1x1x32xf32>
    %411 = vector.shape_cast %410 : vector<1x1x1x32xf32> to vector<1x32xf32>
    %c1_195 = arith.constant 1 : index
    %c0_196 = arith.constant 0 : index
    %c0_197 = arith.constant 0 : index
    %c0_198 = arith.constant 0 : index
    %412 = vector.load %arg15[%c1_195, %c0_196, %c0_197, %c0_198] : memref<2x3x1x32xf32, #tpu.memory_space<vmem>>, vector<1x1x1x32xf32>
    %413 = vector.shape_cast %412 : vector<1x1x1x32xf32> to vector<1x32xf32>
    %cst_199 = arith.constant dense<0.000000e+00> : vector<1x8xf32>
    %414 = vector.multi_reduction <add>, %409, %cst_199 [2] : vector<1x8x32xf32> to vector<1x8xf32>
    %415 = vector.shape_cast %414 : vector<1x8xf32> to vector<1x8x1xf32>
    %cst_200 = arith.constant 3.200000e+01 : f32
    %416 = vector.broadcast %cst_200 : f32 to vector<1x8x1xf32>
    %417 = arith.divf %415, %416 : vector<1x8x1xf32>
    %418 = vector.broadcast %417 : vector<1x8x1xf32> to vector<1x8x32xf32>
    %419 = arith.subf %409, %418 : vector<1x8x32xf32>
    %420 = arith.mulf %419, %419 : vector<1x8x32xf32>
    %cst_201 = arith.constant dense<0.000000e+00> : vector<1x8xf32>
    %421 = vector.multi_reduction <add>, %420, %cst_201 [2] : vector<1x8x32xf32> to vector<1x8xf32>
    %422 = vector.shape_cast %421 : vector<1x8xf32> to vector<1x8x1xf32>
    %cst_202 = arith.constant 3.200000e+01 : f32
    %423 = vector.broadcast %cst_202 : f32 to vector<1x8x1xf32>
    %424 = arith.divf %422, %423 : vector<1x8x1xf32>
    %425 = vector.broadcast %417 : vector<1x8x1xf32> to vector<1x8x32xf32>
    %426 = arith.subf %409, %425 : vector<1x8x32xf32>
    %cst_203 = arith.constant 9.99999974E-6 : f32
    %427 = vector.broadcast %cst_203 : f32 to vector<1x8x1xf32>
    %428 = arith.addf %424, %427 : vector<1x8x1xf32>
    %429 = math.rsqrt %428 : vector<1x8x1xf32>
    %430 = vector.broadcast %429 : vector<1x8x1xf32> to vector<1x8x32xf32>
    %431 = arith.mulf %426, %430 : vector<1x8x32xf32>
    %432 = vector.shape_cast %411 : vector<1x32xf32> to vector<1x1x32xf32>
    %433 = vector.broadcast %432 : vector<1x1x32xf32> to vector<1x8x32xf32>
    %434 = arith.mulf %431, %433 : vector<1x8x32xf32>
    %435 = vector.shape_cast %413 : vector<1x32xf32> to vector<1x1x32xf32>
    %436 = vector.broadcast %435 : vector<1x1x32xf32> to vector<1x8x32xf32>
    %437 = arith.addf %434, %436 : vector<1x8x32xf32>
    %c1_204 = arith.constant 1 : index
    %c1_205 = arith.constant 1 : index
    %c0_206 = arith.constant 0 : index
    %c0_207 = arith.constant 0 : index
    %438 = vector.load %arg8[%c1_204, %c1_205, %c0_206, %c0_207] : memref<2x2x32x96xbf16, #tpu.memory_space<vmem>>, vector<1x1x32x96xbf16>
    %439 = vector.shape_cast %438 : vector<1x1x32x96xbf16> to vector<32x96xbf16>
    %c1_208 = arith.constant 1 : index
    %c1_209 = arith.constant 1 : index
    %c0_210 = arith.constant 0 : index
    %c0_211 = arith.constant 0 : index
    %440 = vector.load %arg9[%c1_208, %c1_209, %c0_210, %c0_211] : memref<2x2x1x96xf32, #tpu.memory_space<vmem>>, vector<1x1x1x96xf32>
    %441 = vector.shape_cast %440 : vector<1x1x1x96xf32> to vector<1x96xf32>
    %c1_212 = arith.constant 1 : index
    %c1_213 = arith.constant 1 : index
    %c0_214 = arith.constant 0 : index
    %c0_215 = arith.constant 0 : index
    %442 = vector.load %arg10[%c1_212, %c1_213, %c0_214, %c0_215] : memref<2x2x32x64xbf16, #tpu.memory_space<vmem>>, vector<1x1x32x64xbf16>
    %443 = vector.shape_cast %442 : vector<1x1x32x64xbf16> to vector<32x64xbf16>
    %c1_216 = arith.constant 1 : index
    %c1_217 = arith.constant 1 : index
    %c0_218 = arith.constant 0 : index
    %c0_219 = arith.constant 0 : index
    %444 = vector.load %arg11[%c1_216, %c1_217, %c0_218, %c0_219] : memref<2x2x1x64xf32, #tpu.memory_space<vmem>>, vector<1x1x1x64xf32>
    %445 = vector.shape_cast %444 : vector<1x1x1x64xf32> to vector<1x64xf32>
    %c1_220 = arith.constant 1 : index
    %c1_221 = arith.constant 1 : index
    %c0_222 = arith.constant 0 : index
    %c0_223 = arith.constant 0 : index
    %446 = vector.load %arg12[%c1_220, %c1_221, %c0_222, %c0_223] : memref<2x2x32x32xbf16, #tpu.memory_space<vmem>>, vector<1x1x32x32xbf16>
    %447 = vector.shape_cast %446 : vector<1x1x32x32xbf16> to vector<32x32xbf16>
    %c1_224 = arith.constant 1 : index
    %c1_225 = arith.constant 1 : index
    %c0_226 = arith.constant 0 : index
    %c0_227 = arith.constant 0 : index
    %448 = vector.load %arg13[%c1_224, %c1_225, %c0_226, %c0_227] : memref<2x2x1x32xf32, #tpu.memory_space<vmem>>, vector<1x1x1x32xf32>
    %449 = vector.shape_cast %448 : vector<1x1x1x32xf32> to vector<1x32xf32>
    %450 = vector.shape_cast %57 : vector<1x8x32xf32> to vector<8x32xf32>
    %451 = vector.shape_cast %437 : vector<1x8x32xf32> to vector<8x32xf32>
    %452 = vector.extract_strided_slice %439 {offsets = [0, 0], sizes = [32, 32], strides = [1, 1]} : vector<32x96xbf16> to vector<32x32xbf16>
    %453 = arith.truncf %450 : vector<8x32xf32> to vector<8x32xbf16>
    %cst_228 = arith.constant dense<0.000000e+00> : vector<8x32xf32>
    %454 = tpu.matmul %453, %452, %cst_228 {dimension_numbers = #tpu.dot_dimension_numbers<[1], [0], [0], [1], [0, 0, 1, 1], [], []>} : vector<8x32xbf16>, vector<32x32xbf16>, vector<8x32xf32> -> vector<8x32xf32>
    %455 = vector.extract_strided_slice %441 {offsets = [0, 0], sizes = [1, 32], strides = [1, 1]} : vector<1x96xf32> to vector<1x32xf32>
    %456 = vector.broadcast %455 : vector<1x32xf32> to vector<8x32xf32>
    %457 = arith.addf %454, %456 : vector<8x32xf32>
    %458 = vector.extract_strided_slice %439 {offsets = [0, 32], sizes = [32, 64], strides = [1, 1]} : vector<32x96xbf16> to vector<32x64xbf16>
    %459 = arith.truncf %451 : vector<8x32xf32> to vector<8x32xbf16>
    %cst_229 = arith.constant dense<0.000000e+00> : vector<8x64xf32>
    %460 = tpu.matmul %459, %458, %cst_229 {dimension_numbers = #tpu.dot_dimension_numbers<[1], [0], [0], [1], [0, 0, 1, 1], [], []>} : vector<8x32xbf16>, vector<32x64xbf16>, vector<8x64xf32> -> vector<8x64xf32>
    %461 = vector.extract_strided_slice %441 {offsets = [0, 32], sizes = [1, 64], strides = [1, 1]} : vector<1x96xf32> to vector<1x64xf32>
    %462 = vector.broadcast %461 : vector<1x64xf32> to vector<8x64xf32>
    %463 = arith.addf %460, %462 : vector<8x64xf32>
    %464 = vector.extract_strided_slice %463 {offsets = [0, 0], sizes = [8, 32], strides = [1, 1]} : vector<8x64xf32> to vector<8x32xf32>
    %465 = vector.extract_strided_slice %463 {offsets = [0, 32], sizes = [8, 32], strides = [1, 1]} : vector<8x64xf32> to vector<8x32xf32>
    %466 = arith.truncf %11 : vector<64x32xf32> to vector<64x32xbf16>
    %cst_230 = arith.constant dense<0.000000e+00> : vector<64x64xf32>
    %467 = tpu.matmul %466, %443, %cst_230 {dimension_numbers = #tpu.dot_dimension_numbers<[1], [0], [0], [1], [0, 0, 1, 1], [], []>} : vector<64x32xbf16>, vector<32x64xbf16>, vector<64x64xf32> -> vector<64x64xf32>
    %468 = vector.broadcast %445 : vector<1x64xf32> to vector<64x64xf32>
    %469 = arith.addf %467, %468 : vector<64x64xf32>
    %470 = vector.extract_strided_slice %469 {offsets = [0, 0], sizes = [64, 32], strides = [1, 1]} : vector<64x64xf32> to vector<64x32xf32>
    %471 = vector.shape_cast %470 : vector<64x32xf32> to vector<1x8x8x32xf32>
    %472 = vector.extract_strided_slice %469 {offsets = [0, 32], sizes = [64, 32], strides = [1, 1]} : vector<64x64xf32> to vector<64x32xf32>
    %473 = vector.shape_cast %472 : vector<64x32xf32> to vector<1x8x8x32xf32>
    %474 = vector.shape_cast %457 : vector<8x32xf32> to vector<1x8x32xf32>
    %475 = vector.shape_cast %464 : vector<8x32xf32> to vector<1x8x32xf32>
    %476 = vector.shape_cast %465 : vector<8x32xf32> to vector<1x8x32xf32>
    %477 = arith.truncf %474 : vector<1x8x32xf32> to vector<1x8x32xbf16>
    %478 = arith.truncf %475 : vector<1x8x32xf32> to vector<1x8x32xbf16>
    "tpu.trace_start"() <{level = 10 : i32, message = "bid,bjd->bij"}> : () -> ()
    %cst_231 = arith.constant dense<0.000000e+00> : vector<1x8x8xf32>
    %479 = tpu.matmul %477, %478, %cst_231 {dimension_numbers = #tpu.dot_dimension_numbers<[2], [2], [1], [1], [0, 0, 0, 1, 1, 1], [0], [0]>} : vector<1x8x32xbf16>, vector<1x8x32xbf16>, vector<1x8x8xf32> -> vector<1x8x8xf32>
    "tpu.trace_stop"() : () -> ()
    %480 = vector.shape_cast %474 : vector<1x8x32xf32> to vector<1x1x8x32xf32>
    %481 = vector.broadcast %480 : vector<1x1x8x32xf32> to vector<1x8x8x32xf32>
    %482 = arith.mulf %481, %473 : vector<1x8x8x32xf32>
    %483 = vector.shape_cast %475 : vector<1x8x32xf32> to vector<1x8x1x32xf32>
    %484 = vector.broadcast %483 : vector<1x8x1x32xf32> to vector<1x8x8x32xf32>
    %485 = arith.addf %484, %473 : vector<1x8x8x32xf32>
    %486 = arith.mulf %471, %485 : vector<1x8x8x32xf32>
    %487 = arith.addf %482, %486 : vector<1x8x8x32xf32>
    %cst_232 = arith.constant dense<0.000000e+00> : vector<1x8x8xf32>
    %488 = vector.multi_reduction <add>, %487, %cst_232 [3] : vector<1x8x8x32xf32> to vector<1x8x8xf32>
    %489 = vector.shape_cast %488 : vector<1x8x8xf32> to vector<8x8xf32>
    %490 = tpu.transpose %489, [1, 0] : vector<8x8xf32> -> vector<8x8xf32>
    %491 = vector.shape_cast %490 : vector<8x8xf32> to vector<1x8x8xf32>
    %492 = arith.addf %479, %491 : vector<1x8x8xf32>
    %cst_233 = arith.constant 3.125000e-02 : f32
    %493 = vector.broadcast %cst_233 : f32 to vector<1x8x8xf32>
    %494 = arith.mulf %492, %493 : vector<1x8x8xf32>
    %cst_234 = arith.constant 0xFF800000 : f32
    %495 = vector.broadcast %cst_234 : f32 to vector<1x8x8xf32>
    %496 = arith.select %3, %495, %494 : vector<1x8x8xi1>, vector<1x8x8xf32>
    %cst_235 = arith.constant 0.000000e+00 : f32
    %497 = vector.broadcast %cst_235 : f32 to vector<1x8x8xf32>
    %498 = arith.cmpf oeq, %9, %497 : vector<1x8x8xf32>
    %cst_236 = arith.constant 0xFF800000 : f32
    %499 = vector.broadcast %cst_236 : f32 to vector<1x8x8xf32>
    %500 = arith.select %498, %499, %496 : vector<1x8x8xi1>, vector<1x8x8xf32>
    %cst_237 = arith.constant dense<0xFF800000> : vector<1x8xf32>
    %501 = vector.multi_reduction <maximumf>, %500, %cst_237 [2] : vector<1x8x8xf32> to vector<1x8xf32>
    %502 = vector.shape_cast %501 : vector<1x8xf32> to vector<1x8x1xf32>
    %503 = vector.broadcast %502 : vector<1x8x1xf32> to vector<1x8x8xf32>
    %504 = arith.subf %500, %503 : vector<1x8x8xf32>
    %505 = math.exp %504 : vector<1x8x8xf32>
    %cst_238 = arith.constant dense<0.000000e+00> : vector<1x8xf32>
    %506 = vector.multi_reduction <add>, %505, %cst_238 [2] : vector<1x8x8xf32> to vector<1x8xf32>
    %507 = vector.shape_cast %506 : vector<1x8xf32> to vector<1x8x1xf32>
    %508 = tpu.reciprocal %507 {approx = true} : vector<1x8x1xf32> -> vector<1x8x1xf32>
    %509 = vector.broadcast %508 : vector<1x8x1xf32> to vector<1x8x8xf32>
    %510 = arith.mulf %505, %509 : vector<1x8x8xf32>
    %511 = arith.mulf %510, %9 : vector<1x8x8xf32>
    %512 = arith.truncf %511 : vector<1x8x8xf32> to vector<1x8x8xbf16>
    %513 = arith.truncf %476 : vector<1x8x32xf32> to vector<1x8x32xbf16>
    "tpu.trace_start"() <{level = 10 : i32, message = "bij,bjd->bid"}> : () -> ()
    %cst_239 = arith.constant dense<0.000000e+00> : vector<1x8x32xf32>
    %514 = tpu.matmul %512, %513, %cst_239 {dimension_numbers = #tpu.dot_dimension_numbers<[2], [1], [1], [2], [0, 0, 0, 1, 1, 2], [0], [0]>} : vector<1x8x8xbf16>, vector<1x8x32xbf16>, vector<1x8x32xf32> -> vector<1x8x32xf32>
    "tpu.trace_stop"() : () -> ()
    %515 = vector.shape_cast %514 : vector<1x8x32xf32> to vector<8x32xf32>
    %516 = arith.truncf %515 : vector<8x32xf32> to vector<8x32xbf16>
    %cst_240 = arith.constant dense<0.000000e+00> : vector<8x32xf32>
    %517 = tpu.matmul %516, %447, %cst_240 {dimension_numbers = #tpu.dot_dimension_numbers<[1], [0], [0], [1], [0, 0, 1, 1], [], []>} : vector<8x32xbf16>, vector<32x32xbf16>, vector<8x32xf32> -> vector<8x32xf32>
    %518 = vector.broadcast %449 : vector<1x32xf32> to vector<8x32xf32>
    %519 = arith.addf %517, %518 : vector<8x32xf32>
    %520 = vector.shape_cast %519 : vector<8x32xf32> to vector<1x8x32xf32>
    %521 = arith.addf %57, %520 : vector<1x8x32xf32>
    %c1_241 = arith.constant 1 : index
    %c1_242 = arith.constant 1 : index
    %c0_243 = arith.constant 0 : index
    %c0_244 = arith.constant 0 : index
    %522 = vector.load %arg14[%c1_241, %c1_242, %c0_243, %c0_244] : memref<2x3x1x32xf32, #tpu.memory_space<vmem>>, vector<1x1x1x32xf32>
    %523 = vector.shape_cast %522 : vector<1x1x1x32xf32> to vector<1x32xf32>
    %c1_245 = arith.constant 1 : index
    %c1_246 = arith.constant 1 : index
    %c0_247 = arith.constant 0 : index
    %c0_248 = arith.constant 0 : index
    %524 = vector.load %arg15[%c1_245, %c1_246, %c0_247, %c0_248] : memref<2x3x1x32xf32, #tpu.memory_space<vmem>>, vector<1x1x1x32xf32>
    %525 = vector.shape_cast %524 : vector<1x1x1x32xf32> to vector<1x32xf32>
    %cst_249 = arith.constant dense<0.000000e+00> : vector<1x8xf32>
    %526 = vector.multi_reduction <add>, %521, %cst_249 [2] : vector<1x8x32xf32> to vector<1x8xf32>
    %527 = vector.shape_cast %526 : vector<1x8xf32> to vector<1x8x1xf32>
    %cst_250 = arith.constant 3.200000e+01 : f32
    %528 = vector.broadcast %cst_250 : f32 to vector<1x8x1xf32>
    %529 = arith.divf %527, %528 : vector<1x8x1xf32>
    %530 = vector.broadcast %529 : vector<1x8x1xf32> to vector<1x8x32xf32>
    %531 = arith.subf %521, %530 : vector<1x8x32xf32>
    %532 = arith.mulf %531, %531 : vector<1x8x32xf32>
    %cst_251 = arith.constant dense<0.000000e+00> : vector<1x8xf32>
    %533 = vector.multi_reduction <add>, %532, %cst_251 [2] : vector<1x8x32xf32> to vector<1x8xf32>
    %534 = vector.shape_cast %533 : vector<1x8xf32> to vector<1x8x1xf32>
    %cst_252 = arith.constant 3.200000e+01 : f32
    %535 = vector.broadcast %cst_252 : f32 to vector<1x8x1xf32>
    %536 = arith.divf %534, %535 : vector<1x8x1xf32>
    %537 = vector.broadcast %529 : vector<1x8x1xf32> to vector<1x8x32xf32>
    %538 = arith.subf %521, %537 : vector<1x8x32xf32>
    %cst_253 = arith.constant 9.99999974E-6 : f32
    %539 = vector.broadcast %cst_253 : f32 to vector<1x8x1xf32>
    %540 = arith.addf %536, %539 : vector<1x8x1xf32>
    %541 = math.rsqrt %540 : vector<1x8x1xf32>
    %542 = vector.broadcast %541 : vector<1x8x1xf32> to vector<1x8x32xf32>
    %543 = arith.mulf %538, %542 : vector<1x8x32xf32>
    %544 = vector.shape_cast %523 : vector<1x32xf32> to vector<1x1x32xf32>
    %545 = vector.broadcast %544 : vector<1x1x32xf32> to vector<1x8x32xf32>
    %546 = arith.mulf %543, %545 : vector<1x8x32xf32>
    %547 = vector.shape_cast %525 : vector<1x32xf32> to vector<1x1x32xf32>
    %548 = vector.broadcast %547 : vector<1x1x32xf32> to vector<1x8x32xf32>
    %549 = arith.addf %546, %548 : vector<1x8x32xf32>
    %550 = vector.shape_cast %549 : vector<1x8x32xf32> to vector<8x32xf32>
    %c1_254 = arith.constant 1 : index
    %c0_255 = arith.constant 0 : index
    %c0_256 = arith.constant 0 : index
    %551 = vector.load %arg16[%c1_254, %c0_255, %c0_256] : memref<2x32x32xbf16, #tpu.memory_space<vmem>>, vector<1x32x32xbf16>
    %552 = vector.shape_cast %551 : vector<1x32x32xbf16> to vector<32x32xbf16>
    %553 = arith.truncf %550 : vector<8x32xf32> to vector<8x32xbf16>
    %cst_257 = arith.constant dense<0.000000e+00> : vector<8x32xf32>
    %554 = tpu.matmul %553, %552, %cst_257 {dimension_numbers = #tpu.dot_dimension_numbers<[1], [0], [0], [1], [0, 0, 1, 1], [], []>} : vector<8x32xbf16>, vector<32x32xbf16>, vector<8x32xf32> -> vector<8x32xf32>
    %c1_258 = arith.constant 1 : index
    %c0_259 = arith.constant 0 : index
    %c0_260 = arith.constant 0 : index
    %555 = vector.load %arg17[%c1_258, %c0_259, %c0_260] : memref<2x1x32xf32, #tpu.memory_space<vmem>>, vector<1x1x32xf32>
    %556 = vector.shape_cast %555 : vector<1x1x32xf32> to vector<1x32xf32>
    %557 = vector.broadcast %556 : vector<1x32xf32> to vector<8x32xf32>
    %558 = arith.addf %554, %557 : vector<8x32xf32>
    %cst_261 = arith.constant 5.000000e-01 : f32
    %559 = vector.broadcast %cst_261 : f32 to vector<8x32xf32>
    %560 = arith.mulf %559, %558 : vector<8x32xf32>
    %cst_262 = arith.constant 4.471500e-02 : f32
    %561 = vector.broadcast %cst_262 : f32 to vector<8x32xf32>
    %562 = arith.mulf %561, %558 : vector<8x32xf32>
    %563 = arith.mulf %562, %558 : vector<8x32xf32>
    %564 = arith.mulf %563, %558 : vector<8x32xf32>
    %565 = arith.addf %558, %564 : vector<8x32xf32>
    %cst_263 = arith.constant 0.797884583 : f32
    %566 = vector.broadcast %cst_263 : f32 to vector<8x32xf32>
    %567 = arith.mulf %566, %565 : vector<8x32xf32>
    %568 = math.tanh %567 : vector<8x32xf32>
    %cst_264 = arith.constant 1.000000e+00 : f32
    %569 = vector.broadcast %cst_264 : f32 to vector<8x32xf32>
    %570 = arith.addf %569, %568 : vector<8x32xf32>
    %571 = arith.mulf %560, %570 : vector<8x32xf32>
    %c1_265 = arith.constant 1 : index
    %c0_266 = arith.constant 0 : index
    %c0_267 = arith.constant 0 : index
    %572 = vector.load %arg18[%c1_265, %c0_266, %c0_267] : memref<2x32x32xbf16, #tpu.memory_space<vmem>>, vector<1x32x32xbf16>
    %573 = vector.shape_cast %572 : vector<1x32x32xbf16> to vector<32x32xbf16>
    %574 = arith.truncf %571 : vector<8x32xf32> to vector<8x32xbf16>
    %cst_268 = arith.constant dense<0.000000e+00> : vector<8x32xf32>
    %575 = tpu.matmul %574, %573, %cst_268 {dimension_numbers = #tpu.dot_dimension_numbers<[1], [0], [0], [1], [0, 0, 1, 1], [], []>} : vector<8x32xbf16>, vector<32x32xbf16>, vector<8x32xf32> -> vector<8x32xf32>
    %c1_269 = arith.constant 1 : index
    %c0_270 = arith.constant 0 : index
    %c0_271 = arith.constant 0 : index
    %576 = vector.load %arg19[%c1_269, %c0_270, %c0_271] : memref<2x1x32xf32, #tpu.memory_space<vmem>>, vector<1x1x32xf32>
    %577 = vector.shape_cast %576 : vector<1x1x32xf32> to vector<1x32xf32>
    %578 = vector.broadcast %577 : vector<1x32xf32> to vector<8x32xf32>
    %579 = arith.addf %575, %578 : vector<8x32xf32>
    %580 = vector.shape_cast %579 : vector<8x32xf32> to vector<1x8x32xf32>
    %581 = arith.addf %549, %580 : vector<1x8x32xf32>
    %c1_272 = arith.constant 1 : index
    %c2_273 = arith.constant 2 : index
    %c0_274 = arith.constant 0 : index
    %c0_275 = arith.constant 0 : index
    %582 = vector.load %arg14[%c1_272, %c2_273, %c0_274, %c0_275] : memref<2x3x1x32xf32, #tpu.memory_space<vmem>>, vector<1x1x1x32xf32>
    %583 = vector.shape_cast %582 : vector<1x1x1x32xf32> to vector<1x32xf32>
    %c1_276 = arith.constant 1 : index
    %c2_277 = arith.constant 2 : index
    %c0_278 = arith.constant 0 : index
    %c0_279 = arith.constant 0 : index
    %584 = vector.load %arg15[%c1_276, %c2_277, %c0_278, %c0_279] : memref<2x3x1x32xf32, #tpu.memory_space<vmem>>, vector<1x1x1x32xf32>
    %585 = vector.shape_cast %584 : vector<1x1x1x32xf32> to vector<1x32xf32>
    %cst_280 = arith.constant dense<0.000000e+00> : vector<1x8xf32>
    %586 = vector.multi_reduction <add>, %581, %cst_280 [2] : vector<1x8x32xf32> to vector<1x8xf32>
    %587 = vector.shape_cast %586 : vector<1x8xf32> to vector<1x8x1xf32>
    %cst_281 = arith.constant 3.200000e+01 : f32
    %588 = vector.broadcast %cst_281 : f32 to vector<1x8x1xf32>
    %589 = arith.divf %587, %588 : vector<1x8x1xf32>
    %590 = vector.broadcast %589 : vector<1x8x1xf32> to vector<1x8x32xf32>
    %591 = arith.subf %581, %590 : vector<1x8x32xf32>
    %592 = arith.mulf %591, %591 : vector<1x8x32xf32>
    %cst_282 = arith.constant dense<0.000000e+00> : vector<1x8xf32>
    %593 = vector.multi_reduction <add>, %592, %cst_282 [2] : vector<1x8x32xf32> to vector<1x8xf32>
    %594 = vector.shape_cast %593 : vector<1x8xf32> to vector<1x8x1xf32>
    %cst_283 = arith.constant 3.200000e+01 : f32
    %595 = vector.broadcast %cst_283 : f32 to vector<1x8x1xf32>
    %596 = arith.divf %594, %595 : vector<1x8x1xf32>
    %597 = vector.broadcast %589 : vector<1x8x1xf32> to vector<1x8x32xf32>
    %598 = arith.subf %581, %597 : vector<1x8x32xf32>
    %cst_284 = arith.constant 9.99999974E-6 : f32
    %599 = vector.broadcast %cst_284 : f32 to vector<1x8x1xf32>
    %600 = arith.addf %596, %599 : vector<1x8x1xf32>
    %601 = math.rsqrt %600 : vector<1x8x1xf32>
    %602 = vector.broadcast %601 : vector<1x8x1xf32> to vector<1x8x32xf32>
    %603 = arith.mulf %598, %602 : vector<1x8x32xf32>
    %604 = vector.shape_cast %583 : vector<1x32xf32> to vector<1x1x32xf32>
    %605 = vector.broadcast %604 : vector<1x1x32xf32> to vector<1x8x32xf32>
    %606 = arith.mulf %603, %605 : vector<1x8x32xf32>
    %607 = vector.shape_cast %585 : vector<1x32xf32> to vector<1x1x32xf32>
    %608 = vector.broadcast %607 : vector<1x1x32xf32> to vector<1x8x32xf32>
    %609 = arith.addf %606, %608 : vector<1x8x32xf32>
    %610 = vector.shape_cast %609 : vector<1x8x32xf32> to vector<8x32xf32>
    %c0_285 = arith.constant 0 : index
    %c0_286 = arith.constant 0 : index
    %611 = vector.load %arg20[%c0_285, %c0_286] : memref<32x32xbf16, #tpu.memory_space<vmem>>, vector<32x32xbf16>
    %612 = arith.truncf %610 : vector<8x32xf32> to vector<8x32xbf16>
    %cst_287 = arith.constant dense<0.000000e+00> : vector<8x32xf32>
    %613 = tpu.matmul %612, %611, %cst_287 {dimension_numbers = #tpu.dot_dimension_numbers<[1], [0], [0], [1], [0, 0, 1, 1], [], []>} : vector<8x32xbf16>, vector<32x32xbf16>, vector<8x32xf32> -> vector<8x32xf32>
    %c0_288 = arith.constant 0 : index
    %c0_289 = arith.constant 0 : index
    %614 = vector.load %arg21[%c0_288, %c0_289] : memref<1x32xf32, #tpu.memory_space<vmem>>, vector<1x32xf32>
    %615 = vector.broadcast %614 : vector<1x32xf32> to vector<8x32xf32>
    %616 = arith.addf %613, %615 : vector<8x32xf32>
    %cst_290 = arith.constant 5.000000e-01 : f32
    %617 = vector.broadcast %cst_290 : f32 to vector<8x32xf32>
    %618 = arith.mulf %617, %616 : vector<8x32xf32>
    %cst_291 = arith.constant 4.471500e-02 : f32
    %619 = vector.broadcast %cst_291 : f32 to vector<8x32xf32>
    %620 = arith.mulf %619, %616 : vector<8x32xf32>
    %621 = arith.mulf %620, %616 : vector<8x32xf32>
    %622 = arith.mulf %621, %616 : vector<8x32xf32>
    %623 = arith.addf %616, %622 : vector<8x32xf32>
    %cst_292 = arith.constant 0.797884583 : f32
    %624 = vector.broadcast %cst_292 : f32 to vector<8x32xf32>
    %625 = arith.mulf %624, %623 : vector<8x32xf32>
    %626 = math.tanh %625 : vector<8x32xf32>
    %cst_293 = arith.constant 1.000000e+00 : f32
    %627 = vector.broadcast %cst_293 : f32 to vector<8x32xf32>
    %628 = arith.addf %627, %626 : vector<8x32xf32>
    %629 = arith.mulf %618, %628 : vector<8x32xf32>
    %c0_294 = arith.constant 0 : index
    %c0_295 = arith.constant 0 : index
    %630 = vector.load %arg22[%c0_294, %c0_295] : memref<1x32xf32, #tpu.memory_space<vmem>>, vector<1x32xf32>
    %c0_296 = arith.constant 0 : index
    %c0_297 = arith.constant 0 : index
    %631 = vector.load %arg23[%c0_296, %c0_297] : memref<1x32xf32, #tpu.memory_space<vmem>>, vector<1x32xf32>
    %cst_298 = arith.constant dense<0.000000e+00> : vector<8xf32>
    %632 = vector.multi_reduction <add>, %629, %cst_298 [1] : vector<8x32xf32> to vector<8xf32>
    %633 = vector.shape_cast %632 : vector<8xf32> to vector<8x1xf32>
    %cst_299 = arith.constant 3.200000e+01 : f32
    %634 = vector.broadcast %cst_299 : f32 to vector<8x1xf32>
    %635 = arith.divf %633, %634 : vector<8x1xf32>
    %636 = vector.broadcast %635 : vector<8x1xf32> to vector<8x32xf32>
    %637 = arith.subf %629, %636 : vector<8x32xf32>
    %638 = arith.mulf %637, %637 : vector<8x32xf32>
    %cst_300 = arith.constant dense<0.000000e+00> : vector<8xf32>
    %639 = vector.multi_reduction <add>, %638, %cst_300 [1] : vector<8x32xf32> to vector<8xf32>
    %640 = vector.shape_cast %639 : vector<8xf32> to vector<8x1xf32>
    %cst_301 = arith.constant 3.200000e+01 : f32
    %641 = vector.broadcast %cst_301 : f32 to vector<8x1xf32>
    %642 = arith.divf %640, %641 : vector<8x1xf32>
    %643 = vector.broadcast %635 : vector<8x1xf32> to vector<8x32xf32>
    %644 = arith.subf %629, %643 : vector<8x32xf32>
    %cst_302 = arith.constant 9.99999974E-6 : f32
    %645 = vector.broadcast %cst_302 : f32 to vector<8x1xf32>
    %646 = arith.addf %642, %645 : vector<8x1xf32>
    %647 = math.rsqrt %646 : vector<8x1xf32>
    %648 = vector.broadcast %647 : vector<8x1xf32> to vector<8x32xf32>
    %649 = arith.mulf %644, %648 : vector<8x32xf32>
    %650 = vector.broadcast %630 : vector<1x32xf32> to vector<8x32xf32>
    %651 = arith.mulf %649, %650 : vector<8x32xf32>
    %652 = vector.broadcast %631 : vector<1x32xf32> to vector<8x32xf32>
    %653 = arith.addf %651, %652 : vector<8x32xf32>
    %c0_303 = arith.constant 0 : index
    %c0_304 = arith.constant 0 : index
    %654 = vector.load %arg24[%c0_303, %c0_304] : memref<32x16xbf16, #tpu.memory_space<vmem>>, vector<32x16xbf16>
    %655 = arith.truncf %653 : vector<8x32xf32> to vector<8x32xbf16>
    %cst_305 = arith.constant dense<0.000000e+00> : vector<8x16xf32>
    %656 = tpu.matmul %655, %654, %cst_305 {dimension_numbers = #tpu.dot_dimension_numbers<[1], [0], [0], [1], [0, 0, 1, 1], [], []>} : vector<8x32xbf16>, vector<32x16xbf16>, vector<8x16xf32> -> vector<8x16xf32>
    %c0_306 = arith.constant 0 : index
    %c0_307 = arith.constant 0 : index
    %657 = vector.load %arg25[%c0_306, %c0_307] : memref<1x16xf32, #tpu.memory_space<vmem>>, vector<1x16xf32>
    %658 = vector.broadcast %657 : vector<1x16xf32> to vector<8x16xf32>
    %659 = arith.addf %656, %658 : vector<8x16xf32>
    %660 = vector.shape_cast %659 : vector<8x16xf32> to vector<1x8x16xf32>
    %c0_308 = arith.constant 0 : index
    %c0_309 = arith.constant 0 : index
    %c0_310 = arith.constant 0 : index
    %661 = vector.load %arg26[%c0_308, %c0_309, %c0_310] : memref<1x8x16xf32, #tpu.memory_space<vmem>>, vector<1x8x16xf32>
    tpu.vector_store %arg26[%c0_308, %c0_309, %c0_310], %660 {strides = array<i32>} : memref<1x8x16xf32, #tpu.memory_space<vmem>>, vector<1x8x16xf32>,
    return
  }
  func.func @transform_0(%arg0: i32) -> (i32, i32, i32) {
    %c0_i32 = arith.constant 0 : i32
    %c0_i32_0 = arith.constant 0 : i32
    %c0_i32_1 = arith.constant 0 : i32
    return %arg0, %c0_i32, %c0_i32_0 : i32, i32, i32
  }
  func.func @transform_1(%arg0: i32) -> (i32, i32, i32) {
    %c0_i32 = arith.constant 0 : i32
    %c0_i32_0 = arith.constant 0 : i32
    %c0_i32_1 = arith.constant 0 : i32
    return %arg0, %c0_i32, %c0_i32_0 : i32, i32, i32
  }
  func.func @transform_2(%arg0: i32) -> (i32, i32, i32, i32) {
    %c0_i32 = arith.constant 0 : i32
    %c0_i32_0 = arith.constant 0 : i32
    %c0_i32_1 = arith.constant 0 : i32
    %c0_i32_2 = arith.constant 0 : i32
    return %arg0, %c0_i32, %c0_i32_0, %c0_i32_1 : i32, i32, i32, i32
  }
  func.func @transform_3(%arg0: i32) -> (i32, i32, i32) {
    %c0_i32 = arith.constant 0 : i32
    %c0_i32_0 = arith.constant 0 : i32
    %c0_i32_1 = arith.constant 0 : i32
    return %arg0, %c0_i32, %c0_i32_0 : i32, i32, i32
  }
  func.func @transform_4(%arg0: i32) -> (i32, i32) {
    %c0_i32 = arith.constant 0 : i32
    %c0_i32_0 = arith.constant 0 : i32
    %c0_i32_1 = arith.constant 0 : i32
    return %c0_i32, %c0_i32_0 : i32, i32
  }
  func.func @transform_5(%arg0: i32) -> (i32, i32) {
    %c0_i32 = arith.constant 0 : i32
    %c0_i32_0 = arith.constant 0 : i32
    %c0_i32_1 = arith.constant 0 : i32
    return %c0_i32, %c0_i32_0 : i32, i32
  }
  func.func @transform_6(%arg0: i32) -> (i32, i32) {
    %c0_i32 = arith.constant 0 : i32
    %c0_i32_0 = arith.constant 0 : i32
    %c0_i32_1 = arith.constant 0 : i32
    return %c0_i32, %c0_i32_0 : i32, i32
  }
  func.func @transform_7(%arg0: i32) -> (i32, i32, i32, i32) {
    %c0_i32 = arith.constant 0 : i32
    %c0_i32_0 = arith.constant 0 : i32
    %c0_i32_1 = arith.constant 0 : i32
    %c0_i32_2 = arith.constant 0 : i32
    %c0_i32_3 = arith.constant 0 : i32
    return %c0_i32, %c0_i32_0, %c0_i32_1, %c0_i32_2 : i32, i32, i32, i32
  }
  func.func @transform_8(%arg0: i32) -> (i32, i32, i32, i32) {
    %c0_i32 = arith.constant 0 : i32
    %c0_i32_0 = arith.constant 0 : i32
    %c0_i32_1 = arith.constant 0 : i32
    %c0_i32_2 = arith.constant 0 : i32
    %c0_i32_3 = arith.constant 0 : i32
    return %c0_i32, %c0_i32_0, %c0_i32_1, %c0_i32_2 : i32, i32, i32, i32
  }
  func.func @transform_9(%arg0: i32) -> (i32, i32, i32, i32) {
    %c0_i32 = arith.constant 0 : i32
    %c0_i32_0 = arith.constant 0 : i32
    %c0_i32_1 = arith.constant 0 : i32
    %c0_i32_2 = arith.constant 0 : i32
    %c0_i32_3 = arith.constant 0 : i32
    return %c0_i32, %c0_i32_0, %c0_i32_1, %c0_i32_2 : i32, i32, i32, i32
  }
  func.func @transform_10(%arg0: i32) -> (i32, i32, i32, i32) {
    %c0_i32 = arith.constant 0 : i32
    %c0_i32_0 = arith.constant 0 : i32
    %c0_i32_1 = arith.constant 0 : i32
    %c0_i32_2 = arith.constant 0 : i32
    %c0_i32_3 = arith.constant 0 : i32
    return %c0_i32, %c0_i32_0, %c0_i32_1, %c0_i32_2 : i32, i32, i32, i32
  }
  func.func @transform_11(%arg0: i32) -> (i32, i32, i32, i32) {
    %c0_i32 = arith.constant 0 : i32
    %c0_i32_0 = arith.constant 0 : i32
    %c0_i32_1 = arith.constant 0 : i32
    %c0_i32_2 = arith.constant 0 : i32
    %c0_i32_3 = arith.constant 0 : i32
    return %c0_i32, %c0_i32_0, %c0_i32_1, %c0_i32_2 : i32, i32, i32, i32
  }
  func.func @transform_12(%arg0: i32) -> (i32, i32, i32, i32) {
    %c0_i32 = arith.constant 0 : i32
    %c0_i32_0 = arith.constant 0 : i32
    %c0_i32_1 = arith.constant 0 : i32
    %c0_i32_2 = arith.constant 0 : i32
    %c0_i32_3 = arith.constant 0 : i32
    return %c0_i32, %c0_i32_0, %c0_i32_1, %c0_i32_2 : i32, i32, i32, i32
  }
  func.func @transform_13(%arg0: i32) -> (i32, i32, i32, i32) {
    %c0_i32 = arith.constant 0 : i32
    %c0_i32_0 = arith.constant 0 : i32
    %c0_i32_1 = arith.constant 0 : i32
    %c0_i32_2 = arith.constant 0 : i32
    %c0_i32_3 = arith.constant 0 : i32
    return %c0_i32, %c0_i32_0, %c0_i32_1, %c0_i32_2 : i32, i32, i32, i32
  }
  func.func @transform_14(%arg0: i32) -> (i32, i32, i32, i32) {
    %c0_i32 = arith.constant 0 : i32
    %c0_i32_0 = arith.constant 0 : i32
    %c0_i32_1 = arith.constant 0 : i32
    %c0_i32_2 = arith.constant 0 : i32
    %c0_i32_3 = arith.constant 0 : i32
    return %c0_i32, %c0_i32_0, %c0_i32_1, %c0_i32_2 : i32, i32, i32, i32
  }
  func.func @transform_15(%arg0: i32) -> (i32, i32, i32) {
    %c0_i32 = arith.constant 0 : i32
    %c0_i32_0 = arith.constant 0 : i32
    %c0_i32_1 = arith.constant 0 : i32
    %c0_i32_2 = arith.constant 0 : i32
    return %c0_i32, %c0_i32_0, %c0_i32_1 : i32, i32, i32
  }
  func.func @transform_16(%arg0: i32) -> (i32, i32, i32) {
    %c0_i32 = arith.constant 0 : i32
    %c0_i32_0 = arith.constant 0 : i32
    %c0_i32_1 = arith.constant 0 : i32
    %c0_i32_2 = arith.constant 0 : i32
    return %c0_i32, %c0_i32_0, %c0_i32_1 : i32, i32, i32
  }
  func.func @transform_17(%arg0: i32) -> (i32, i32, i32) {
    %c0_i32 = arith.constant 0 : i32
    %c0_i32_0 = arith.constant 0 : i32
    %c0_i32_1 = arith.constant 0 : i32
    %c0_i32_2 = arith.constant 0 : i32
    return %c0_i32, %c0_i32_0, %c0_i32_1 : i32, i32, i32
  }
  func.func @transform_18(%arg0: i32) -> (i32, i32, i32) {
    %c0_i32 = arith.constant 0 : i32
    %c0_i32_0 = arith.constant 0 : i32
    %c0_i32_1 = arith.constant 0 : i32
    %c0_i32_2 = arith.constant 0 : i32
    return %c0_i32, %c0_i32_0, %c0_i32_1 : i32, i32, i32
  }
  func.func @transform_19(%arg0: i32) -> (i32, i32) {
    %c0_i32 = arith.constant 0 : i32
    %c0_i32_0 = arith.constant 0 : i32
    %c0_i32_1 = arith.constant 0 : i32
    return %c0_i32, %c0_i32_0 : i32, i32
  }
  func.func @transform_20(%arg0: i32) -> (i32, i32) {
    %c0_i32 = arith.constant 0 : i32
    %c0_i32_0 = arith.constant 0 : i32
    %c0_i32_1 = arith.constant 0 : i32
    return %c0_i32, %c0_i32_0 : i32, i32
  }
  func.func @transform_21(%arg0: i32) -> (i32, i32) {
    %c0_i32 = arith.constant 0 : i32
    %c0_i32_0 = arith.constant 0 : i32
    %c0_i32_1 = arith.constant 0 : i32
    return %c0_i32, %c0_i32_0 : i32, i32
  }
  func.func @transform_22(%arg0: i32) -> (i32, i32) {
    %c0_i32 = arith.constant 0 : i32
    %c0_i32_0 = arith.constant 0 : i32
    %c0_i32_1 = arith.constant 0 : i32
    return %c0_i32, %c0_i32_0 : i32, i32
  }
  func.func @transform_23(%arg0: i32) -> (i32, i32) {
    %c0_i32 = arith.constant 0 : i32
    %c0_i32_0 = arith.constant 0 : i32
    %c0_i32_1 = arith.constant 0 : i32
    return %c0_i32, %c0_i32_0 : i32, i32
  }
  func.func @transform_24(%arg0: i32) -> (i32, i32) {
    %c0_i32 = arith.constant 0 : i32
    %c0_i32_0 = arith.constant 0 : i32
    %c0_i32_1 = arith.constant 0 : i32
    return %c0_i32, %c0_i32_0 : i32, i32
  }
  func.func @transform_25(%arg0: i32) -> (i32, i32, i32) {
    %c0_i32 = arith.constant 0 : i32
    %c0_i32_0 = arith.constant 0 : i32
    %c0_i32_1 = arith.constant 0 : i32
    return %arg0, %c0_i32, %c0_i32_0 : i32, i32, i32
  }
}

</mosaic_0001>

<llo_original>
// kernel: decoder_forward.1
$region0: #{decoder_forward.1}
  #allocation0 [shape = 'u32[]', space=smem, size = 0x4, offset = 0x4, fixed_abs, tag = 'smem constant byte address 0x4 - core index']
  #allocation1 [shape = 'u32[144,128]{1,0:T(1,128)}', space=vmem, size = 0x12000, scoped, tag = 'internal scratch']
  %s0 = inlined_call_operand.vmem [shape: f32[2,8,17], index: 0, kind: input, shape index: {}]
  %s1 = inlined_call_operand.vmem [shape: f32[2,8,32], index: 1, kind: input, shape index: {}]
  %s2 = inlined_call_operand.hbm [shape: f32[2,8,8,32], index: 2, kind: input, shape index: {}]
  %s3 = inlined_call_operand.hbm [shape: f32[2,8,8], index: 3, kind: input, shape index: {}]
  %s4 = inlined_call_operand.hbm [shape: bf16[17,32], index: 4, kind: input, shape index: {}]
  %s5 = inlined_call_operand.hbm [shape: f32[1,32], index: 5, kind: input, shape index: {}]
  %s6 = inlined_call_operand.hbm [shape: f32[1,32], index: 6, kind: input, shape index: {}]
  %s7 = inlined_call_operand.hbm [shape: bf16[2,2,32,96], index: 7, kind: input, shape index: {}]
  %s8 = inlined_call_operand.hbm [shape: f32[2,2,1,96], index: 8, kind: input, shape index: {}]
  %s9 = inlined_call_operand.hbm [shape: bf16[2,2,32,64], index: 9, kind: input, shape index: {}]
  %s10 = inlined_call_operand.hbm [shape: f32[2,2,1,64], index: 10, kind: input, shape index: {}]
  %s11 = inlined_call_operand.hbm [shape: bf16[2,2,32,32], index: 11, kind: input, shape index: {}]
  %s12 = inlined_call_operand.hbm [shape: f32[2,2,1,32], index: 12, kind: input, shape index: {}]
  %s13 = inlined_call_operand.hbm [shape: f32[2,3,1,32], index: 13, kind: input, shape index: {}]
  %s14 = inlined_call_operand.hbm [shape: f32[2,3,1,32], index: 14, kind: input, shape index: {}]
  %s15 = inlined_call_operand.vmem [shape: bf16[2,32,32], index: 15, kind: input, shape index: {}]
  %s16 = inlined_call_operand.hbm [shape: f32[2,1,32], index: 16, kind: input, shape index: {}]
  %s17 = inlined_call_operand.hbm [shape: bf16[2,32,32], index: 17, kind: input, shape index: {}]
  %s18 = inlined_call_operand.hbm [shape: f32[2,1,32], index: 18, kind: input, shape index: {}]
  %s19 = inlined_call_operand.hbm [shape: bf16[32,32], index: 19, kind: input, shape index: {}]
  %s20 = inlined_call_operand.hbm [shape: f32[1,32], index: 20, kind: input, shape index: {}]
  %s21 = inlined_call_operand.hbm [shape: f32[1,32], index: 21, kind: input, shape index: {}]
  %s22 = inlined_call_operand.hbm [shape: f32[1,32], index: 22, kind: input, shape index: {}]
  %s23 = inlined_call_operand.vmem [shape: bf16[32,16], index: 23, kind: input, shape index: {}]
  %s24 = inlined_call_operand.hbm [shape: f32[1,16], index: 24, kind: input, shape index: {}]
  %s25 = inlined_call_operand.hbm [shape: f32[2,8,16], index: 25, kind: output, shape index: {}]
  %s26 = sld [smem:[#allocation0]]
  $region217: #{decoder_forward.1} parent=0
    _
  %s28 = ssub.s32 1, %s26
  %s29 = scalar_select 0, %s28, %s26
  $region1: #{decoder_forward.1} parent=0
    #allocation2 [shape = 'u8[65536]{0}', space=vmem, size = 0x10000, scoped, tag = 'input window, operand 2']
    #allocation3 [shape = 's32[2]{0}', space=sflag, size = 0x8, scoped, tag = 'scoped memory for decoder_forward.1']
    #allocation4 [shape = 's32[2]{0}', space=sflag, size = 0x8, scoped, tag = 'scoped memory for decoder_forward.1']
    #allocation5 [shape = 'u8[8192]{0}', space=vmem, size = 0x2000, scoped, tag = 'input window, operand 3']
    #allocation6 [shape = 's32[2]{0}', space=sflag, size = 0x8, scoped, tag = 'scoped memory for decoder_forward.1']
    #allocation7 [shape = 'u8[6144]{0}', space=vmem, size = 0x1800, scoped, tag = 'input window, operand 4, single buffered']
    #allocation8 [shape = 'u8[512]{0}', space=vmem, size = 0x400, scoped, tag = 'input window, operand 5, single buffered']
    #allocation9 [shape = 's32[1]{0}', space=sflag, size = 0x4, scoped, tag = 'scoped memory for decoder_forward.1']
    #allocation10 [shape = 'u8[512]{0}', space=vmem, size = 0x400, scoped, tag = 'input window, operand 6, single buffered']
    #allocation11 [shape = 'u8[32768]{0}', space=vmem, size = 0x8000, scoped, tag = 'input window, operand 7, single buffered']
    #allocation12 [shape = 's32[1]{0}', space=sflag, size = 0x4, scoped, tag = 'scoped memory for decoder_forward.1']
    #allocation13 [shape = 'u8[2048]{0}', space=vmem, size = 0x800, scoped, tag = 'input window, operand 8, single buffered']
    #allocation14 [shape = 'u8[32768]{0}', space=vmem, size = 0x8000, scoped, tag = 'input window, operand 9, single buffered']
    #allocation15 [shape = 's32[1]{0}', space=sflag, size = 0x4, scoped, tag = 'scoped memory for decoder_forward.1']
    #allocation16 [shape = 'u8[2048]{0}', space=vmem, size = 0x800, scoped, tag = 'input window, operand 10, single buffered']
    #allocation17 [shape = 'u8[32768]{0}', space=vmem, size = 0x8000, scoped, tag = 'input window, operand 11, single buffered']
    #allocation18 [shape = 's32[1]{0}', space=sflag, size = 0x4, scoped, tag = 'scoped memory for decoder_forward.1']
    #allocation19 [shape = 'u8[2048]{0}', space=vmem, size = 0x800, scoped, tag = 'input window, operand 12, single buffered']
    #allocation20 [shape = 'u8[3072]{0}', space=vmem, size = 0xc00, scoped, tag = 'input window, operand 13, single buffered']
    #allocation21 [shape = 's32[1]{0}', space=sflag, size = 0x4, scoped, tag = 'scoped memory for decoder_forward.1']
    #allocation22 [shape = 'u8[3072]{0}', space=vmem, size = 0xc00, scoped, tag = 'input window, operand 14, single buffered']
    #allocation23 [shape = 'u8[1024]{0}', space=vmem, size = 0x400, scoped, tag = 'input window, operand 16, single buffered']
    #allocation24 [shape = 's32[1]{0}', space=sflag, size = 0x4, scoped, tag = 'scoped memory for decoder_forward.1']
    #allocation25 [shape = 'u8[16384]{0}', space=vmem, size = 0x4000, scoped, tag = 'input window, operand 17, single buffered']
    #allocation26 [shape = 'u8[1024]{0}', space=vmem, size = 0x400, scoped, tag = 'input window, operand 18, single buffered']
    #allocation27 [shape = 's32[1]{0}', space=sflag, size = 0x4, scoped, tag = 'scoped memory for decoder_forward.1']
    #allocation28 [shape = 'u8[8192]{0}', space=vmem, size = 0x2000, scoped, tag = 'input window, operand 19, single buffered']
    #allocation29 [shape = 'u8[512]{0}', space=vmem, size = 0x400, scoped, tag = 'input window, operand 20, single buffered']
    #allocation30 [shape = 's32[1]{0}', space=sflag, size = 0x4, scoped, tag = 'scoped memory for decoder_forward.1']
    #allocation31 [shape = 'u8[512]{0}', space=vmem, size = 0x400, scoped, tag = 'input window, operand 21, single buffered']
    #allocation32 [shape = 'u8[512]{0}', space=vmem, size = 0x400, scoped, tag = 'input window, operand 22, single buffered']
    #allocation33 [shape = 's32[1]{0}', space=sflag, size = 0x4, scoped, tag = 'scoped memory for decoder_forward.1']
    #allocation34 [shape = 'u8[512]{0}', space=vmem, size = 0x400, scoped, tag = 'input window, operand 24, single buffered']
    #allocation35 [shape = 'u8[8192]{0}', space=vmem, size = 0x2000, scoped, tag = 'output window, operand 0']
    %30 = vsyncpa [#allocation3], 0
    %s31 = scalar_lea.sflag [#allocation3], 1
    %32 = vsyncpa %s31, 0
    %33 = vsyncpa [#allocation6], 0
    %s34 = scalar_lea.sflag [#allocation6], 1
    %35 = vsyncpa %s34, 0
    %36 = vsyncpa [#allocation9], 0
    %37 = vsyncpa [#allocation12], 0
    %38 = vsyncpa [#allocation15], 0
    %39 = vsyncpa [#allocation18], 0
    %40 = vsyncpa [#allocation21], 0
    %41 = vsyncpa [#allocation24], 0
    %42 = vsyncpa [#allocation27], 0
    %43 = vsyncpa [#allocation30], 0
    %44 = vsyncpa [#allocation33], 0
    %45 = vsyncpa [#allocation4], 0
    %s46 = scalar_lea.sflag [#allocation4], 1
    %47 = vsyncpa %s46, 0
    loop: start=0, step=1, limit=4
    $region2: #{decoder_forward.1} parent=1 // loop_pre_header
      _
    $region3: #{decoder_forward.1} parent=1 // loop_header
      %s49 = sphi 0, %s53
      %p50 = scmp.ge.s32.totalorder %s49, 4
      %s59 = sphi 0, %s61
      %s62 = sphi 0, %s59
      %s63 = sphi 0, %s62
      %s79 = sphi 0, %s63
      %s85 = sphi 0, %s87
      %s88 = sphi 0, %s85
      %s89 = sphi 0, %s88
      %s105 = sphi 0, %s89
      %s111 = sphi 0, %s113
      %s114 = sphi 0, %s111
      %s115 = sphi 0, %s114
      %s131 = sphi 0, %s115
      %s137 = sphi 0, %s139
      %s140 = sphi 0, %s137
      %s141 = sphi 0, %s140
      %s157 = sphi 0, %s141
      %s161 = sphi 0, %s161
      %s163 = sphi 0, %s161
      %s164 = sphi 0, %s163
      %s178 = sphi 0, %s164
      %s182 = sphi 0, %s182
      %s184 = sphi 0, %s182
      %s185 = sphi 0, %s184
      %s199 = sphi 0, %s185
      %s203 = sphi 0, %s203
      %s205 = sphi 0, %s203
      %s206 = sphi 0, %s205
      %s220 = sphi 0, %s206
      %s224 = sphi 0, %s224
      %s226 = sphi 0, %s224
      %s227 = sphi 0, %s226
      %s241 = sphi 0, %s227
      %s245 = sphi 0, %s245
      %s247 = sphi 0, %s245
      %s248 = sphi 0, %s247
      %s262 = sphi 0, %s248
      %s266 = sphi 0, %s266
      %s268 = sphi 0, %s266
      %s269 = sphi 0, %s268
      %s283 = sphi 0, %s269
      %s287 = sphi 0, %s287
      %s289 = sphi 0, %s287
      %s290 = sphi 0, %s289
      %s304 = sphi 0, %s290
      %s308 = sphi 0, %s308
      %s310 = sphi 0, %s308
      %s311 = sphi 0, %s310
      %s325 = sphi 0, %s311
      %s329 = sphi 0, %s329
      %s331 = sphi 0, %s329
      %s332 = sphi 0, %s331
      %s346 = sphi 0, %s332
      %s350 = sphi 0, %s350
      %s352 = sphi 0, %s350
      %s353 = sphi 0, %s352
      %s367 = sphi 0, %s353
      %s371 = sphi 0, %s371
      %s373 = sphi 0, %s371
      %s374 = sphi 0, %s373
      %s388 = sphi 0, %s374
      %s392 = sphi 0, %s392
      %s394 = sphi 0, %s392
      %s395 = sphi 0, %s394
      %s409 = sphi 0, %s395
      %s413 = sphi 0, %s413
      %s415 = sphi 0, %s413
      %s416 = sphi 0, %s415
      %s430 = sphi 0, %s416
      %s434 = sphi 0, %s434
      %s436 = sphi 0, %s434
      %s437 = sphi 0, %s436
      %s451 = sphi 0, %s437
      %s455 = sphi 0, %s455
      %s457 = sphi 0, %s455
      %s458 = sphi 0, %s457
      %s472 = sphi 0, %s458
      %s476 = sphi 0, %s476
      %s478 = sphi 0, %s476
      %s479 = sphi 0, %s478
      %s493 = sphi 0, %s479
      %s497 = sphi 0, %s497
      %s499 = sphi 0, %s497
      %s500 = sphi 0, %s499
      %s514 = sphi 0, %s500
      %s518 = sphi 0, %s518
      %s520 = sphi 0, %s518
      %s521 = sphi 0, %s520
      %s535 = sphi 0, %s521
      %s539 = sphi 0, %s539
      %s541 = sphi 0, %s539
      %s542 = sphi 0, %s541
      %s556 = sphi 0, %s542
      %s560 = sphi 0, %s560
      %s562 = sphi 0, %s560
      %s563 = sphi 0, %s562
      %s577 = sphi 0, %s563
      %s581 = sphi 0, %s581
      %s583 = sphi 0, %s581
      %s584 = sphi 0, %s583
      %s598 = sphi 0, %s584
      %s604 = sphi 0, %s606
      %s607 = sphi 0, %s604
      %s608 = sphi 0, %s607
      %s624 = sphi 0, %s608
    $region4: #{decoder_forward.1} parent=1 // loop_header_branch
      %52 = sbr.rel (%p50) target = $region8
    $region5: #{decoder_forward.1} parent=1 // loop_body
      %s54 = ssub.s32 %s49, 1
      %s55 = ssub.s32 %s49, 2
      %s56 = sadd.s32 %s49, 1
      %s57 = ssub.s32 %s49, %s56
      %p58 = scmp.eq.s32.totalorder %s57, 0
      %s60 = sadd.s32 %s59, 1
      %s61 = scalar_select %p58, %s59, %s60
      %p64 = pneg %p58
      %p65 = scmp.eq.s32.totalorder %s49, 1
      %p66 = por %p64, %p65
      %p67 = scmp.ne.s32.totalorder %s59, %s62
      %p68 = scmp.eq.s32.totalorder %s49, 0
      %p69 = por %p67, %p68
      %p70 = scmp.ne.s32.totalorder %s59, %s62
      %p71 = scmp.eq.s32.totalorder %s54, 1
      %p72 = por %p70, %p71
      %p73 = scmp.ne.s32.totalorder %s62, %s63
      %p74 = scmp.eq.s32.totalorder %s54, 0
      %p75 = por %p73, %p74
      %p76 = scmp.ne.s32.totalorder %s62, %s63
      %p77 = scmp.eq.s32.totalorder %s55, 1
      %p78 = por %p76, %p77
      %p80 = scmp.ne.s32.totalorder %s63, %s79
      %p81 = scmp.eq.s32.totalorder %s55, 0
      %p82 = por %p80, %p81
      %s83 = ssub.s32 %s49, %s56
      %p84 = scmp.eq.s32.totalorder %s83, 0
      %s86 = sadd.s32 %s85, 1
      %s87 = scalar_select %p84, %s85, %s86
      %p90 = pneg %p84
      %p91 = scmp.eq.s32.totalorder %s49, 1
      %p92 = por %p90, %p91
      %p93 = scmp.ne.s32.totalorder %s85, %s88
      %p94 = scmp.eq.s32.totalorder %s49, 0
      %p95 = por %p93, %p94
      %p96 = scmp.ne.s32.totalorder %s85, %s88
      %p97 = scmp.eq.s32.totalorder %s54, 1
      %p98 = por %p96, %p97
      %p99 = scmp.ne.s32.totalorder %s88, %s89
      %p100 = scmp.eq.s32.totalorder %s54, 0
      %p101 = por %p99, %p100
      %p102 = scmp.ne.s32.totalorder %s88, %s89
      %p103 = scmp.eq.s32.totalorder %s55, 1
      %p104 = por %p102, %p103
      %p106 = scmp.ne.s32.totalorder %s89, %s105
      %p107 = scmp.eq.s32.totalorder %s55, 0
      %p108 = por %p106, %p107
      %s109 = ssub.s32 %s49, %s56
      %p110 = scmp.eq.s32.totalorder %s109, 0
      %s112 = sadd.s32 %s111, 1
      %s113 = scalar_select %p110, %s111, %s112
      %p116 = pneg %p110
      %p117 = scmp.eq.s32.totalorder %s49, 1
      %p118 = por %p116, %p117
      %p119 = scmp.ne.s32.totalorder %s111, %s114
      %p120 = scmp.eq.s32.totalorder %s49, 0
      %p121 = por %p119, %p120
      %p122 = scmp.ne.s32.totalorder %s111, %s114
      %p123 = scmp.eq.s32.totalorder %s54, 1
      %p124 = por %p122, %p123
      %p125 = scmp.ne.s32.totalorder %s114, %s115
      %p126 = scmp.eq.s32.totalorder %s54, 0
      %p127 = por %p125, %p126
      %p128 = scmp.ne.s32.totalorder %s114, %s115
      %p129 = scmp.eq.s32.totalorder %s55, 1
      %p130 = por %p128, %p129
      %p132 = scmp.ne.s32.totalorder %s115, %s131
      %p133 = scmp.eq.s32.totalorder %s55, 0
      %p134 = por %p132, %p133
      %s135 = ssub.s32 %s49, %s56
      %p136 = scmp.eq.s32.totalorder %s135, 0
      %s138 = sadd.s32 %s137, 1
      %s139 = scalar_select %p136, %s137, %s138
      %p142 = pneg %p136
      %p143 = scmp.eq.s32.totalorder %s49, 1
      %p144 = por %p142, %p143
      %p145 = scmp.ne.s32.totalorder %s137, %s140
      %p146 = scmp.eq.s32.totalorder %s49, 0
      %p147 = por %p145, %p146
      %p148 = scmp.ne.s32.totalorder %s137, %s140
      %p149 = scmp.eq.s32.totalorder %s54, 1
      %p150 = por %p148, %p149
      %p151 = scmp.ne.s32.totalorder %s140, %s141
      %p152 = scmp.eq.s32.totalorder %s54, 0
      %p153 = por %p151, %p152
      %p154 = scmp.ne.s32.totalorder %s140, %s141
      %p155 = scmp.eq.s32.totalorder %s55, 1
      %p156 = por %p154, %p155
      %p158 = scmp.ne.s32.totalorder %s141, %s157
      %p159 = scmp.eq.s32.totalorder %s55, 0
      %p160 = por %p158, %p159
      %s162 = sadd.s32 %s161, 1
      %p165 = scmp.eq.s32.totalorder %s49, 1
      %p166 = scmp.ne.s32.totalorder %s161, %s163
      %p167 = scmp.eq.s32.totalorder %s49, 0
      %p168 = por %p166, %p167
      %p169 = scmp.ne.s32.totalorder %s161, %s163
      %p170 = scmp.eq.s32.totalorder %s54, 1
      %p171 = por %p169, %p170
      %p172 = scmp.ne.s32.totalorder %s163, %s164
      %p173 = scmp.eq.s32.totalorder %s54, 0
      %p174 = por %p172, %p173
      %p175 = scmp.ne.s32.totalorder %s163, %s164
      %p176 = scmp.eq.s32.totalorder %s55, 1
      %p177 = por %p175, %p176
      %p179 = scmp.ne.s32.totalorder %s164, %s178
      %p180 = scmp.eq.s32.totalorder %s55, 0
      %p181 = por %p179, %p180
      %s183 = sadd.s32 %s182, 1
      %p186 = scmp.eq.s32.totalorder %s49, 1
      %p187 = scmp.ne.s32.totalorder %s182, %s184
      %p188 = scmp.eq.s32.totalorder %s49, 0
      %p189 = por %p187, %p188
      %p190 = scmp.ne.s32.totalorder %s182, %s184
      %p191 = scmp.eq.s32.totalorder %s54, 1
      %p192 = por %p190, %p191
      %p193 = scmp.ne.s32.totalorder %s184, %s185
      %p194 = scmp.eq.s32.totalorder %s54, 0
      %p195 = por %p193, %p194
      %p196 = scmp.ne.s32.totalorder %s184, %s185
      %p197 = scmp.eq.s32.totalorder %s55, 1
      %p198 = por %p196, %p197
      %p200 = scmp.ne.s32.totalorder %s185, %s199
      %p201 = scmp.eq.s32.totalorder %s55, 0
      %p202 = por %p200, %p201
      %s204 = sadd.s32 %s203, 1
      %p207 = scmp.eq.s32.totalorder %s49, 1
      %p208 = scmp.ne.s32.totalorder %s203, %s205
      %p209 = scmp.eq.s32.totalorder %s49, 0
      %p210 = por %p208, %p209
      %p211 = scmp.ne.s32.totalorder %s203, %s205
      %p212 = scmp.eq.s32.totalorder %s54, 1
      %p213 = por %p211, %p212
      %p214 = scmp.ne.s32.totalorder %s205, %s206
      %p215 = scmp.eq.s32.totalorder %s54, 0
      %p216 = por %p214, %p215
      %p217 = scmp.ne.s32.totalorder %s205, %s206
      %p218 = scmp.eq.s32.totalorder %s55, 1
      %p219 = por %p217, %p218
      %p221 = scmp.ne.s32.totalorder %s206, %s220
      %p222 = scmp.eq.s32.totalorder %s55, 0
      %p223 = por %p221, %p222
      %s225 = sadd.s32 %s224, 1
      %p228 = scmp.eq.s32.totalorder %s49, 1
      %p229 = scmp.ne.s32.totalorder %s224, %s226
      %p230 = scmp.eq.s32.totalorder %s49, 0
      %p231 = por %p229, %p230
      %p232 = scmp.ne.s32.totalorder %s224, %s226
      %p233 = scmp.eq.s32.totalorder %s54, 1
      %p234 = por %p232, %p233
      %p235 = scmp.ne.s32.totalorder %s226, %s227
      %p236 = scmp.eq.s32.totalorder %s54, 0
      %p237 = por %p235, %p236
      %p238 = scmp.ne.s32.totalorder %s226, %s227
      %p239 = scmp.eq.s32.totalorder %s55, 1
      %p240 = por %p238, %p239
      %p242 = scmp.ne.s32.totalorder %s227, %s241
      %p243 = scmp.eq.s32.totalorder %s55, 0
      %p244 = por %p242, %p243
      %s246 = sadd.s32 %s245, 1
      %p249 = scmp.eq.s32.totalorder %s49, 1
      %p250 = scmp.ne.s32.totalorder %s245, %s247
      %p251 = scmp.eq.s32.totalorder %s49, 0
      %p252 = por %p250, %p251
      %p253 = scmp.ne.s32.totalorder %s245, %s247
      %p254 = scmp.eq.s32.totalorder %s54, 1
      %p255 = por %p253, %p254
      %p256 = scmp.ne.s32.totalorder %s247, %s248
      %p257 = scmp.eq.s32.totalorder %s54, 0
      %p258 = por %p256, %p257
      %p259 = scmp.ne.s32.totalorder %s247, %s248
      %p260 = scmp.eq.s32.totalorder %s55, 1
      %p261 = por %p259, %p260
      %p263 = scmp.ne.s32.totalorder %s248, %s262
      %p264 = scmp.eq.s32.totalorder %s55, 0
      %p265 = por %p263, %p264
      %s267 = sadd.s32 %s266, 1
      %p270 = scmp.eq.s32.totalorder %s49, 1
      %p271 = scmp.ne.s32.totalorder %s266, %s268
      %p272 = scmp.eq.s32.totalorder %s49, 0
      %p273 = por %p271, %p272
      %p274 = scmp.ne.s32.totalorder %s266, %s268
      %p275 = scmp.eq.s32.totalorder %s54, 1
      %p276 = por %p274, %p275
      %p277 = scmp.ne.s32.totalorder %s268, %s269
      %p278 = scmp.eq.s32.totalorder %s54, 0
      %p279 = por %p277, %p278
      %p280 = scmp.ne.s32.totalorder %s268, %s269
      %p281 = scmp.eq.s32.totalorder %s55, 1
      %p282 = por %p280, %p281
      %p284 = scmp.ne.s32.totalorder %s269, %s283
      %p285 = scmp.eq.s32.totalorder %s55, 0
      %p286 = por %p284, %p285
      %s288 = sadd.s32 %s287, 1
      %p291 = scmp.eq.s32.totalorder %s49, 1
      %p292 = scmp.ne.s32.totalorder %s287, %s289
      %p293 = scmp.eq.s32.totalorder %s49, 0
      %p294 = por %p292, %p293
      %p295 = scmp.ne.s32.totalorder %s287, %s289
      %p296 = scmp.eq.s32.totalorder %s54, 1
      %p297 = por %p295, %p296
      %p298 = scmp.ne.s32.totalorder %s289, %s290
      %p299 = scmp.eq.s32.totalorder %s54, 0
      %p300 = por %p298, %p299
      %p301 = scmp.ne.s32.totalorder %s289, %s290
      %p302 = scmp.eq.s32.totalorder %s55, 1
      %p303 = por %p301, %p302
      %p305 = scmp.ne.s32.totalorder %s290, %s304
      %p306 = scmp.eq.s32.totalorder %s55, 0
      %p307 = por %p305, %p306
      %s309 = sadd.s32 %s308, 1
      %p312 = scmp.eq.s32.totalorder %s49, 1
      %p313 = scmp.ne.s32.totalorder %s308, %s310
      %p314 = scmp.eq.s32.totalorder %s49, 0
      %p315 = por %p313, %p314
      %p316 = scmp.ne.s32.totalorder %s308, %s310
      %p317 = scmp.eq.s32.totalorder %s54, 1
      %p318 = por %p316, %p317
      %p319 = scmp.ne.s32.totalorder %s310, %s311
      %p320 = scmp.eq.s32.totalorder %s54, 0
      %p321 = por %p319, %p320
      %p322 = scmp.ne.s32.totalorder %s310, %s311
      %p323 = scmp.eq.s32.totalorder %s55, 1
      %p324 = por %p322, %p323
      %p326 = scmp.ne.s32.totalorder %s311, %s325
      %p327 = scmp.eq.s32.totalorder %s55, 0
      %p328 = por %p326, %p327
      %s330 = sadd.s32 %s329, 1
      %p333 = scmp.eq.s32.totalorder %s49, 1
      %p334 = scmp.ne.s32.totalorder %s329, %s331
      %p335 = scmp.eq.s32.totalorder %s49, 0
      %p336 = por %p334, %p335
      %p337 = scmp.ne.s32.totalorder %s329, %s331
      %p338 = scmp.eq.s32.totalorder %s54, 1
      %p339 = por %p337, %p338
      %p340 = scmp.ne.s32.totalorder %s331, %s332
      %p341 = scmp.eq.s32.totalorder %s54, 0
      %p342 = por %p340, %p341
      %p343 = scmp.ne.s32.totalorder %s331, %s332
      %p344 = scmp.eq.s32.totalorder %s55, 1
      %p345 = por %p343, %p344
      %p347 = scmp.ne.s32.totalorder %s332, %s346
      %p348 = scmp.eq.s32.totalorder %s55, 0
      %p349 = por %p347, %p348
      %s351 = sadd.s32 %s350, 1
      %p354 = scmp.eq.s32.totalorder %s49, 1
      %p355 = scmp.ne.s32.totalorder %s350, %s352
      %p356 = scmp.eq.s32.totalorder %s49, 0
      %p357 = por %p355, %p356
      %p358 = scmp.ne.s32.totalorder %s350, %s352
      %p359 = scmp.eq.s32.totalorder %s54, 1
      %p360 = por %p358, %p359
      %p361 = scmp.ne.s32.totalorder %s352, %s353
      %p362 = scmp.eq.s32.totalorder %s54, 0
      %p363 = por %p361, %p362
      %p364 = scmp.ne.s32.totalorder %s352, %s353
      %p365 = scmp.eq.s32.totalorder %s55, 1
      %p366 = por %p364, %p365
      %p368 = scmp.ne.s32.totalorder %s353, %s367
      %p369 = scmp.eq.s32.totalorder %s55, 0
      %p370 = por %p368, %p369
      %s372 = sadd.s32 %s371, 1
      %p375 = scmp.eq.s32.totalorder %s49, 1
      %p376 = scmp.ne.s32.totalorder %s371, %s373
      %p377 = scmp.eq.s32.totalorder %s49, 0
      %p378 = por %p376, %p377
      %p379 = scmp.ne.s32.totalorder %s371, %s373
      %p380 = scmp.eq.s32.totalorder %s54, 1
      %p381 = por %p379, %p380
      %p382 = scmp.ne.s32.totalorder %s373, %s374
      %p383 = scmp.eq.s32.totalorder %s54, 0
      %p384 = por %p382, %p383
      %p385 = scmp.ne.s32.totalorder %s373, %s374
      %p386 = scmp.eq.s32.totalorder %s55, 1
      %p387 = por %p385, %p386
      %p389 = scmp.ne.s32.totalorder %s374, %s388
      %p390 = scmp.eq.s32.totalorder %s55, 0
      %p391 = por %p389, %p390
      %s393 = sadd.s32 %s392, 1
      %p396 = scmp.eq.s32.totalorder %s49, 1
      %p397 = scmp.ne.s32.totalorder %s392, %s394
      %p398 = scmp.eq.s32.totalorder %s49, 0
      %p399 = por %p397, %p398
      %p400 = scmp.ne.s32.totalorder %s392, %s394
      %p401 = scmp.eq.s32.totalorder %s54, 1
      %p402 = por %p400, %p401
      %p403 = scmp.ne.s32.totalorder %s394, %s395
      %p404 = scmp.eq.s32.totalorder %s54, 0
      %p405 = por %p403, %p404
      %p406 = scmp.ne.s32.totalorder %s394, %s395
      %p407 = scmp.eq.s32.totalorder %s55, 1
      %p408 = por %p406, %p407
      %p410 = scmp.ne.s32.totalorder %s395, %s409
      %p411 = scmp.eq.s32.totalorder %s55, 0
      %p412 = por %p410, %p411
      %s414 = sadd.s32 %s413, 1
      %p417 = scmp.eq.s32.totalorder %s49, 1
      %p418 = scmp.ne.s32.totalorder %s413, %s415
      %p419 = scmp.eq.s32.totalorder %s49, 0
      %p420 = por %p418, %p419
      %p421 = scmp.ne.s32.totalorder %s413, %s415
      %p422 = scmp.eq.s32.totalorder %s54, 1
      %p423 = por %p421, %p422
      %p424 = scmp.ne.s32.totalorder %s415, %s416
      %p425 = scmp.eq.s32.totalorder %s54, 0
      %p426 = por %p424, %p425
      %p427 = scmp.ne.s32.totalorder %s415, %s416
      %p428 = scmp.eq.s32.totalorder %s55, 1
      %p429 = por %p427, %p428
      %p431 = scmp.ne.s32.totalorder %s416, %s430
      %p432 = scmp.eq.s32.totalorder %s55, 0
      %p433 = por %p431, %p432
      %s435 = sadd.s32 %s434, 1
      %p438 = scmp.eq.s32.totalorder %s49, 1
      %p439 = scmp.ne.s32.totalorder %s434, %s436
      %p440 = scmp.eq.s32.totalorder %s49, 0
      %p441 = por %p439, %p440
      %p442 = scmp.ne.s32.totalorder %s434, %s436
      %p443 = scmp.eq.s32.totalorder %s54, 1
      %p444 = por %p442, %p443
      %p445 = scmp.ne.s32.totalorder %s436, %s437
      %p446 = scmp.eq.s32.totalorder %s54, 0
      %p447 = por %p445, %p446
      %p448 = scmp.ne.s32.totalorder %s436, %s437
      %p449 = scmp.eq.s32.totalorder %s55, 1
      %p450 = por %p448, %p449
      %p452 = scmp.ne.s32.totalorder %s437, %s451
      %p453 = scmp.eq.s32.totalorder %s55, 0
      %p454 = por %p452, %p453
      %s456 = sadd.s32 %s455, 1
      %p459 = scmp.eq.s32.totalorder %s49, 1
      %p460 = scmp.ne.s32.totalorder %s455, %s457
      %p461 = scmp.eq.s32.totalorder %s49, 0
      %p462 = por %p460, %p461
      %p463 = scmp.ne.s32.totalorder %s455, %s457
      %p464 = scmp.eq.s32.totalorder %s54, 1
      %p465 = por %p463, %p464
      %p466 = scmp.ne.s32.totalorder %s457, %s458
      %p467 = scmp.eq.s32.totalorder %s54, 0
      %p468 = por %p466, %p467
      %p469 = scmp.ne.s32.totalorder %s457, %s458
      %p470 = scmp.eq.s32.totalorder %s55, 1
      %p471 = por %p469, %p470
      %p473 = scmp.ne.s32.totalorder %s458, %s472
      %p474 = scmp.eq.s32.totalorder %s55, 0
      %p475 = por %p473, %p474
      %s477 = sadd.s32 %s476, 1
      %p480 = scmp.eq.s32.totalorder %s49, 1
      %p481 = scmp.ne.s32.totalorder %s476, %s478
      %p482 = scmp.eq.s32.totalorder %s49, 0
      %p483 = por %p481, %p482
      %p484 = scmp.ne.s32.totalorder %s476, %s478
      %p485 = scmp.eq.s32.totalorder %s54, 1
      %p486 = por %p484, %p485
      %p487 = scmp.ne.s32.totalorder %s478, %s479
      %p488 = scmp.eq.s32.totalorder %s54, 0
      %p489 = por %p487, %p488
      %p490 = scmp.ne.s32.totalorder %s478, %s479
      %p491 = scmp.eq.s32.totalorder %s55, 1
      %p492 = por %p490, %p491
      %p494 = scmp.ne.s32.totalorder %s479, %s493
      %p495 = scmp.eq.s32.totalorder %s55, 0
      %p496 = por %p494, %p495
      %s498 = sadd.s32 %s497, 1
      %p501 = scmp.eq.s32.totalorder %s49, 1
      %p502 = scmp.ne.s32.totalorder %s497, %s499
      %p503 = scmp.eq.s32.totalorder %s49, 0
      %p504 = por %p502, %p503
      %p505 = scmp.ne.s32.totalorder %s497, %s499
      %p506 = scmp.eq.s32.totalorder %s54, 1
      %p507 = por %p505, %p506
      %p508 = scmp.ne.s32.totalorder %s499, %s500
      %p509 = scmp.eq.s32.totalorder %s54, 0
      %p510 = por %p508, %p509
      %p511 = scmp.ne.s32.totalorder %s499, %s500
      %p512 = scmp.eq.s32.totalorder %s55, 1
      %p513 = por %p511, %p512
      %p515 = scmp.ne.s32.totalorder %s500, %s514
      %p516 = scmp.eq.s32.totalorder %s55, 0
      %p517 = por %p515, %p516
      %s519 = sadd.s32 %s518, 1
      %p522 = scmp.eq.s32.totalorder %s49, 1
      %p523 = scmp.ne.s32.totalorder %s518, %s520
      %p524 = scmp.eq.s32.totalorder %s49, 0
      %p525 = por %p523, %p524
      %p526 = scmp.ne.s32.totalorder %s518, %s520
      %p527 = scmp.eq.s32.totalorder %s54, 1
      %p528 = por %p526, %p527
      %p529 = scmp.ne.s32.totalorder %s520, %s521
      %p530 = scmp.eq.s32.totalorder %s54, 0
      %p531 = por %p529, %p530
      %p532 = scmp.ne.s32.totalorder %s520, %s521
      %p533 = scmp.eq.s32.totalorder %s55, 1
      %p534 = por %p532, %p533
      %p536 = scmp.ne.s32.totalorder %s521, %s535
      %p537 = scmp.eq.s32.totalorder %s55, 0
      %p538 = por %p536, %p537
      %s540 = sadd.s32 %s539, 1
      %p543 = scmp.eq.s32.totalorder %s49, 1
      %p544 = scmp.ne.s32.totalorder %s539, %s541
      %p545 = scmp.eq.s32.totalorder %s49, 0
      %p546 = por %p544, %p545
      %p547 = scmp.ne.s32.totalorder %s539, %s541
      %p548 = scmp.eq.s32.totalorder %s54, 1
      %p549 = por %p547, %p548
      %p550 = scmp.ne.s32.totalorder %s541, %s542
      %p551 = scmp.eq.s32.totalorder %s54, 0
      %p552 = por %p550, %p551
      %p553 = scmp.ne.s32.totalorder %s541, %s542
      %p554 = scmp.eq.s32.totalorder %s55, 1
      %p555 = por %p553, %p554
      %p557 = scmp.ne.s32.totalorder %s542, %s556
      %p558 = scmp.eq.s32.totalorder %s55, 0
      %p559 = por %p557, %p558
      %s561 = sadd.s32 %s560, 1
      %p564 = scmp.eq.s32.totalorder %s49, 1
      %p565 = scmp.ne.s32.totalorder %s560, %s562
      %p566 = scmp.eq.s32.totalorder %s49, 0
      %p567 = por %p565, %p566
      %p568 = scmp.ne.s32.totalorder %s560, %s562
      %p569 = scmp.eq.s32.totalorder %s54, 1
      %p570 = por %p568, %p569
      %p571 = scmp.ne.s32.totalorder %s562, %s563
      %p572 = scmp.eq.s32.totalorder %s54, 0
      %p573 = por %p571, %p572
      %p574 = scmp.ne.s32.totalorder %s562, %s563
      %p575 = scmp.eq.s32.totalorder %s55, 1
      %p576 = por %p574, %p575
      %p578 = scmp.ne.s32.totalorder %s563, %s577
      %p579 = scmp.eq.s32.totalorder %s55, 0
      %p580 = por %p578, %p579
      %s582 = sadd.s32 %s581, 1
      %p585 = scmp.eq.s32.totalorder %s49, 1
      %p586 = scmp.ne.s32.totalorder %s581, %s583
      %p587 = scmp.eq.s32.totalorder %s49, 0
      %p588 = por %p586, %p587
      %p589 = scmp.ne.s32.totalorder %s581, %s583
      %p590 = scmp.eq.s32.totalorder %s54, 1
      %p591 = por %p589, %p590
      %p592 = scmp.ne.s32.totalorder %s583, %s584
      %p593 = scmp.eq.s32.totalorder %s54, 0
      %p594 = por %p592, %p593
      %p595 = scmp.ne.s32.totalorder %s583, %s584
      %p596 = scmp.eq.s32.totalorder %s55, 1
      %p597 = por %p595, %p596
      %p599 = scmp.ne.s32.totalorder %s584, %s598
      %p600 = scmp.eq.s32.totalorder %s55, 0
      %p601 = por %p599, %p600
      %s602 = ssub.s32 %s49, %s56
      %p603 = scmp.eq.s32.totalorder %s602, 0
      %s605 = sadd.s32 %s604, 1
      %s606 = scalar_select %p603, %s604, %s605
      %p609 = pneg %p603
      %p610 = scmp.eq.s32.totalorder %s49, 1
      %p611 = por %p609, %p610
      %p612 = scmp.ne.s32.totalorder %s604, %s607
      %p613 = scmp.eq.s32.totalorder %s49, 0
      %p614 = por %p612, %p613
      %p615 = scmp.ne.s32.totalorder %s604, %s607
      %p616 = scmp.eq.s32.totalorder %s54, 1
      %p617 = por %p615, %p616
      %p618 = scmp.ne.s32.totalorder %s607, %s608
      %p619 = scmp.eq.s32.totalorder %s54, 0
      %p620 = por %p618, %p619
      %p621 = scmp.ne.s32.totalorder %s607, %s608
      %p622 = scmp.eq.s32.totalorder %s55, 1
      %p623 = por %p621, %p622
      %p625 = scmp.ne.s32.totalorder %s608, %s624
      %p626 = scmp.eq.s32.totalorder %s55, 0
      %p627 = por %p625, %p626
      %p628 = scmp.le.s32.totalorder 1, %s49
      %p629 = scmp.lt.s32.totalorder %s49, 3
      %p630 = pnand %p628, %p629
      %p631 = pneg %p630
      // Predicated region
      $region9: #{decoder_forward.1} parent=5 // pred_check
        _
      $region10: #{decoder_forward.1} parent=5 // pred_check_branch
        %633 = sbr.rel (%p630) target = $region12
      $region11: #{decoder_forward.1} parent=5 // pred_region
        %s634 = ssub.s32 %s49, 1
        // Predicated region
        $region13: #{decoder_forward.1} parent=11 // pred_check
          %p635 = pneg %p174
        $region14: #{decoder_forward.1} parent=11 // pred_check_branch
          %637 = sbr.rel (%p635) target = $region16
        $region15: #{decoder_forward.1} parent=11 // pred_region
          %s639 = ssub.s32 192, 192
          %640 = vsyncadd [#allocation6], %s639
          %s641 = sshll.u32 [#allocation7], 4
          %s642 = int_to_ptr.vmem [resolvable:$true] %s641
          %647 = dma.hbm_to_vmem [thread:$0]  %s4, 192, %s642, [#allocation6], 64, 64, 4
        $region16: #{decoder_forward.1} parent=11 // pred_fallthru
          _
        // Predicated region
        $region17: #{decoder_forward.1} parent=11 // pred_check
          %p648 = pneg %p195
        $region18: #{decoder_forward.1} parent=11 // pred_check_branch
          %650 = sbr.rel (%p648) target = $region20
        $region19: #{decoder_forward.1} parent=11 // pred_region
          %s652 = ssub.s32 16, 16
          %653 = vsyncadd [#allocation9], %s652
          %s655 = sshll.u32 [#allocation8], 4
          %s656 = int_to_ptr.vmem [resolvable:$true] %s655
          %658 = dma.hbm_to_vmem [thread:$0]  %s5, 16, %s656, [#allocation9]
        $region20: #{decoder_forward.1} parent=11 // pred_fallthru
          _
        // Predicated region
        $region21: #{decoder_forward.1} parent=11 // pred_check
          %p659 = pneg %p216
        $region22: #{decoder_forward.1} parent=11 // pred_check_branch
          %661 = sbr.rel (%p659) target = $region24
        $region23: #{decoder_forward.1} parent=11 // pred_region
          %s663 = ssub.s32 16, 16
          %664 = vsyncadd [#allocation9], %s663
          %s666 = sshll.u32 [#allocation10], 4
          %s667 = int_to_ptr.vmem [resolvable:$true] %s666
          %669 = dma.hbm_to_vmem [thread:$0]  %s6, 16, %s667, [#allocation9]
        $region24: #{decoder_forward.1} parent=11 // pred_fallthru
          _
        // Predicated region
        $region25: #{decoder_forward.1} parent=11 // pred_check
          %p670 = pneg %p237
        $region26: #{decoder_forward.1} parent=11 // pred_check_branch
          %672 = sbr.rel (%p670) target = $region28
        $region27: #{decoder_forward.1} parent=11 // pred_region
          %s674 = ssub.s32 1024, 1024
          %675 = vsyncadd [#allocation12], %s674
          %s676 = sshll.u32 [#allocation11], 4
          %s677 = int_to_ptr.vmem [resolvable:$true] %s676
          %682 = dma.hbm_to_vmem [thread:$0]  %s7, 1024, %s677, [#allocation12], 64, 64, 4
        $region28: #{decoder_forward.1} parent=11 // pred_fallthru
          _
        // Predicated region
        $region29: #{decoder_forward.1} parent=11 // pred_check
          %p683 = pneg %p258
        $region30: #{decoder_forward.1} parent=11 // pred_check_branch
          %685 = sbr.rel (%p683) target = $region32
        $region31: #{decoder_forward.1} parent=11 // pred_region
          %s687 = ssub.s32 64, 64
          %688 = vsyncadd [#allocation12], %s687
          %s689 = sshll.u32 [#allocation13], 4
          %s690 = int_to_ptr.vmem [resolvable:$true] %s689
          %695 = dma.hbm_to_vmem [thread:$0]  %s8, 64, %s690, [#allocation12], 16, 16, 1
        $region32: #{decoder_forward.1} parent=11 // pred_fallthru
          _
        // Predicated region
        $region33: #{decoder_forward.1} parent=11 // pred_check
          %p696 = pneg %p279
        $region34: #{decoder_forward.1} parent=11 // pred_check_branch
          %698 = sbr.rel (%p696) target = $region36
        $region35: #{decoder_forward.1} parent=11 // pred_region
          %s700 = ssub.s32 1024, 1024
          %701 = vsyncadd [#allocation15], %s700
          %s702 = sshll.u32 [#allocation14], 4
          %s703 = int_to_ptr.vmem [resolvable:$true] %s702
          %708 = dma.hbm_to_vmem [thread:$0]  %s9, 1024, %s703, [#allocation15], 64, 64, 4
        $region36: #{decoder_forward.1} parent=11 // pred_fallthru
          _
        // Predicated region
        $region37: #{decoder_forward.1} parent=11 // pred_check
          %p709 = pneg %p300
        $region38: #{decoder_forward.1} parent=11 // pred_check_branch
          %711 = sbr.rel (%p709) target = $region40
        $region39: #{decoder_forward.1} parent=11 // pred_region
          %s713 = ssub.s32 64, 64
          %714 = vsyncadd [#allocation15], %s713
          %s715 = sshll.u32 [#allocation16], 4
          %s716 = int_to_ptr.vmem [resolvable:$true] %s715
          %721 = dma.hbm_to_vmem [thread:$0]  %s10, 64, %s716, [#allocation15], 16, 16, 1
        $region40: #{decoder_forward.1} parent=11 // pred_fallthru
          _
        // Predicated region
        $region41: #{decoder_forward.1} parent=11 // pred_check
          %p722 = pneg %p321
        $region42: #{decoder_forward.1} parent=11 // pred_check_branch
          %724 = sbr.rel (%p722) target = $region44
        $region43: #{decoder_forward.1} parent=11 // pred_region
          %s726 = ssub.s32 1024, 1024
          %727 = vsyncadd [#allocation18], %s726
          %s728 = sshll.u32 [#allocation17], 4
          %s729 = int_to_ptr.vmem [resolvable:$true] %s728
          %734 = dma.hbm_to_vmem [thread:$0]  %s11, 1024, %s729, [#allocation18], 64, 64, 4
        $region44: #{decoder_forward.1} parent=11 // pred_fallthru
          _
        // Predicated region
        $region45: #{decoder_forward.1} parent=11 // pred_check
          %p735 = pneg %p342
        $region46: #{decoder_forward.1} parent=11 // pred_check_branch
          %737 = sbr.rel (%p735) target = $region48
        $region47: #{decoder_forward.1} parent=11 // pred_region
          %s739 = ssub.s32 64, 64
          %740 = vsyncadd [#allocation18], %s739
          %s741 = sshll.u32 [#allocation19], 4
          %s742 = int_to_ptr.vmem [resolvable:$true] %s741
          %747 = dma.hbm_to_vmem [thread:$0]  %s12, 64, %s742, [#allocation18], 16, 16, 1
        $region48: #{decoder_forward.1} parent=11 // pred_fallthru
          _
        // Predicated region
        $region49: #{decoder_forward.1} parent=11 // pred_check
          %p748 = pneg %p363
        $region50: #{decoder_forward.1} parent=11 // pred_check_branch
          %750 = sbr.rel (%p748) target = $region52
        $region51: #{decoder_forward.1} parent=11 // pred_region
          %s752 = ssub.s32 96, 96
          %753 = vsyncadd [#allocation21], %s752
          %s754 = sshll.u32 [#allocation20], 4
          %s755 = int_to_ptr.vmem [resolvable:$true] %s754
          %760 = dma.hbm_to_vmem [thread:$0]  %s13, 96, %s755, [#allocation21], 16, 16, 1
        $region52: #{decoder_forward.1} parent=11 // pred_fallthru
          _
        // Predicated region
        $region53: #{decoder_forward.1} parent=11 // pred_check
          %p761 = pneg %p384
        $region54: #{decoder_forward.1} parent=11 // pred_check_branch
          %763 = sbr.rel (%p761) target = $region56
        $region55: #{decoder_forward.1} parent=11 // pred_region
          %s765 = ssub.s32 96, 96
          %766 = vsyncadd [#allocation21], %s765
          %s767 = sshll.u32 [#allocation22], 4
          %s768 = int_to_ptr.vmem [resolvable:$true] %s767
          %773 = dma.hbm_to_vmem [thread:$0]  %s14, 96, %s768, [#allocation21], 16, 16, 1
        $region56: #{decoder_forward.1} parent=11 // pred_fallthru
          _
        // Predicated region
        $region57: #{decoder_forward.1} parent=11 // pred_check
          %p774 = pneg %p405
        $region58: #{decoder_forward.1} parent=11 // pred_check_branch
          %776 = sbr.rel (%p774) target = $region60
        $region59: #{decoder_forward.1} parent=11 // pred_region
          _
        $region60: #{decoder_forward.1} parent=11 // pred_fallthru
          _
        // Predicated region
        $region61: #{decoder_forward.1} parent=11 // pred_check
          %p777 = pneg %p426
        $region62: #{decoder_forward.1} parent=11 // pred_check_branch
          %779 = sbr.rel (%p777) target = $region64
        $region63: #{decoder_forward.1} parent=11 // pred_region
          %s781 = ssub.s32 32, 32
          %782 = vsyncadd [#allocation24], %s781
          %s783 = sshll.u32 [#allocation23], 4
          %s784 = int_to_ptr.vmem [resolvable:$true] %s783
          %789 = dma.hbm_to_vmem [thread:$0]  %s16, 32, %s784, [#allocation24], 16, 16, 1
        $region64: #{decoder_forward.1} parent=11 // pred_fallthru
          _
        // Predicated region
        $region65: #{decoder_forward.1} parent=11 // pred_check
          %p790 = pneg %p447
        $region66: #{decoder_forward.1} parent=11 // pred_check_branch
          %792 = sbr.rel (%p790) target = $region68
        $region67: #{decoder_forward.1} parent=11 // pred_region
          %s794 = ssub.s32 512, 512
          %795 = vsyncadd [#allocation24], %s794
          %s796 = sshll.u32 [#allocation25], 4
          %s797 = int_to_ptr.vmem [resolvable:$true] %s796
          %802 = dma.hbm_to_vmem [thread:$0]  %s17, 512, %s797, [#allocation24], 64, 64, 4
        $region68: #{decoder_forward.1} parent=11 // pred_fallthru
          _
        // Predicated region
        $region69: #{decoder_forward.1} parent=11 // pred_check
          %p803 = pneg %p468
        $region70: #{decoder_forward.1} parent=11 // pred_check_branch
          %805 = sbr.rel (%p803) target = $region72
        $region71: #{decoder_forward.1} parent=11 // pred_region
          %s807 = ssub.s32 32, 32
          %808 = vsyncadd [#allocation27], %s807
          %s809 = sshll.u32 [#allocation26], 4
          %s810 = int_to_ptr.vmem [resolvable:$true] %s809
          %815 = dma.hbm_to_vmem [thread:$0]  %s18, 32, %s810, [#allocation27], 16, 16, 1
        $region72: #{decoder_forward.1} parent=11 // pred_fallthru
          _
        // Predicated region
        $region73: #{decoder_forward.1} parent=11 // pred_check
          %p816 = pneg %p489
        $region74: #{decoder_forward.1} parent=11 // pred_check_branch
          %818 = sbr.rel (%p816) target = $region76
        $region75: #{decoder_forward.1} parent=11 // pred_region
          %s820 = ssub.s32 256, 256
          %821 = vsyncadd [#allocation27], %s820
          %s822 = sshll.u32 [#allocation28], 4
          %s823 = int_to_ptr.vmem [resolvable:$true] %s822
          %828 = dma.hbm_to_vmem [thread:$0]  %s19, 256, %s823, [#allocation27], 64, 64, 4
        $region76: #{decoder_forward.1} parent=11 // pred_fallthru
          _
        // Predicated region
        $region77: #{decoder_forward.1} parent=11 // pred_check
          %p829 = pneg %p510
        $region78: #{decoder_forward.1} parent=11 // pred_check_branch
          %831 = sbr.rel (%p829) target = $region80
        $region79: #{decoder_forward.1} parent=11 // pred_region
          %s833 = ssub.s32 16, 16
          %834 = vsyncadd [#allocation30], %s833
          %s836 = sshll.u32 [#allocation29], 4
          %s837 = int_to_ptr.vmem [resolvable:$true] %s836
          %839 = dma.hbm_to_vmem [thread:$0]  %s20, 16, %s837, [#allocation30]
        $region80: #{decoder_forward.1} parent=11 // pred_fallthru
          _
        // Predicated region
        $region81: #{decoder_forward.1} parent=11 // pred_check
          %p840 = pneg %p531
        $region82: #{decoder_forward.1} parent=11 // pred_check_branch
          %842 = sbr.rel (%p840) target = $region84
        $region83: #{decoder_forward.1} parent=11 // pred_region
          %s844 = ssub.s32 16, 16
          %845 = vsyncadd [#allocation30], %s844
          %s847 = sshll.u32 [#allocation31], 4
          %s848 = int_to_ptr.vmem [resolvable:$true] %s847
          %850 = dma.hbm_to_vmem [thread:$0]  %s21, 16, %s848, [#allocation30]
        $region84: #{decoder_forward.1} parent=11 // pred_fallthru
          _
        // Predicated region
        $region85: #{decoder_forward.1} parent=11 // pred_check
          %p851 = pneg %p552
        $region86: #{decoder_forward.1} parent=11 // pred_check_branch
          %853 = sbr.rel (%p851) target = $region88
        $region87: #{decoder_forward.1} parent=11 // pred_region
          %s855 = ssub.s32 16, 16
          %856 = vsyncadd [#allocation33], %s855
          %s858 = sshll.u32 [#allocation32], 4
          %s859 = int_to_ptr.vmem [resolvable:$true] %s858
          %861 = dma.hbm_to_vmem [thread:$0]  %s22, 16, %s859, [#allocation33]
        $region88: #{decoder_forward.1} parent=11 // pred_fallthru
          _
        // Predicated region
        $region89: #{decoder_forward.1} parent=11 // pred_check
          %p862 = pneg %p573
        $region90: #{decoder_forward.1} parent=11 // pred_check_branch
          %864 = sbr.rel (%p862) target = $region92
        $region91: #{decoder_forward.1} parent=11 // pred_region
          _
        $region92: #{decoder_forward.1} parent=11 // pred_fallthru
          _
        // Predicated region
        $region93: #{decoder_forward.1} parent=11 // pred_check
          %p865 = pneg %p594
        $region94: #{decoder_forward.1} parent=11 // pred_check_branch
          %867 = sbr.rel (%p865) target = $region96
        $region95: #{decoder_forward.1} parent=11 // pred_region
          %s869 = ssub.s32 16, 16
          %870 = vsyncadd [#allocation33], %s869
          %s872 = sshll.u32 [#allocation34], 4
          %s873 = int_to_ptr.vmem [resolvable:$true] %s872
          %875 = dma.hbm_to_vmem [thread:$0]  %s24, 16, %s873, [#allocation33]
        $region96: #{decoder_forward.1} parent=11 // pred_fallthru
          _
      $region12: #{decoder_forward.1} parent=5 // pred_fallthru
        _
      %p876 = scmp.lt.s32.totalorder %s49, 2
      // Predicated region
      $region97: #{decoder_forward.1} parent=5 // pred_check
        %p877 = pneg %p876
      $region98: #{decoder_forward.1} parent=5 // pred_check_branch
        %879 = sbr.rel (%p877) target = $region100
      $region99: #{decoder_forward.1} parent=5 // pred_region
        // Predicated region
        $region101: #{decoder_forward.1} parent=99 // pred_check
          %p880 = pneg %p69
        $region102: #{decoder_forward.1} parent=99 // pred_check_branch
          %882 = sbr.rel (%p880) target = $region104
        $region103: #{decoder_forward.1} parent=99 // pred_region
          %p883 = scmp.lt.s32.totalorder %s49, 1
          %s884 = scalar_select %p883, %s49, 1
          %s885 = smul.addr %s884, 8
          %s886 = scalar_lea.vmem %s0, %s885
        $region104: #{decoder_forward.1} parent=99 // pred_fallthru
          _
        // Predicated region
        $region105: #{decoder_forward.1} parent=99 // pred_check
          %p887 = pneg %p95
        $region106: #{decoder_forward.1} parent=99 // pred_check_branch
          %889 = sbr.rel (%p887) target = $region108
        $region107: #{decoder_forward.1} parent=99 // pred_region
          %p890 = scmp.lt.s32.totalorder %s49, 1
          %s891 = scalar_select %p890, %s49, 1
          %s892 = smul.addr %s891, 8
          %s893 = scalar_lea.vmem %s1, %s892
        $region108: #{decoder_forward.1} parent=99 // pred_fallthru
          _
        // Predicated region
        $region109: #{decoder_forward.1} parent=99 // pred_check
          %p894 = pneg %p121
        $region110: #{decoder_forward.1} parent=99 // pred_check_branch
          %896 = sbr.rel (%p894) target = $region112
        $region111: #{decoder_forward.1} parent=99 // pred_region
          %s897 = sand.u32 %s111, 1
          %s898 = scalar_lea.sflag [#allocation3], %s897
          %s899 = sand.u32 %s111, 1
          %s900 = smul.addr %s899, 64
          %s901 = scalar_lea.vmem [#allocation2], %s900
          %s903 = ssub.s32 1024, 1024
          %904 = vsyncadd %s898, %s903
          %s905 = smul.addr %s49, 8
          %s906 = smul.addr %s905, 128
          %s907 = scalar_lea.hbm %s2, %s906
          %s908 = sshll.u32 %s901, 4
          %s909 = int_to_ptr.vmem [resolvable:$true] %s908
          %914 = dma.hbm_to_vmem [thread:$0]  %s907, 1024, %s909, %s898, 128, 128, 8
        $region112: #{decoder_forward.1} parent=99 // pred_fallthru
          _
        // Predicated region
        $region113: #{decoder_forward.1} parent=99 // pred_check
          %p915 = pneg %p147
        $region114: #{decoder_forward.1} parent=99 // pred_check_branch
          %917 = sbr.rel (%p915) target = $region116
        $region115: #{decoder_forward.1} parent=99 // pred_region
          %s918 = sand.u32 %s49, 1
          %s919 = scalar_lea.sflag [#allocation6], %s918
          %s920 = sand.u32 %s137, 1
          %s921 = smul.addr %s920, 8
          %s922 = scalar_lea.vmem [#allocation5], %s921
          %s924 = ssub.s32 128, 128
          %925 = vsyncadd %s919, %s924
          %s926 = smul.addr %s49, 128
          %s927 = scalar_lea.hbm %s3, %s926
          %s929 = sshll.u32 %s922, 4
          %s930 = int_to_ptr.vmem [resolvable:$true] %s929
          %932 = dma.hbm_to_vmem [thread:$0]  %s927, 128, %s930, %s919
        $region116: #{decoder_forward.1} parent=99 // pred_fallthru
          _
      $region100: #{decoder_forward.1} parent=5 // pred_fallthru
        _
      %p933 = scmp.le.s32.totalorder 1, %s49
      %p934 = scmp.lt.s32.totalorder %s49, 3
      %p935 = pnand %p933, %p934
      %p936 = pneg %p935
      // Predicated region
      $region117: #{decoder_forward.1} parent=5 // pred_check
        _
      $region118: #{decoder_forward.1} parent=5 // pred_check_branch
        %938 = sbr.rel (%p935) target = $region120
      $region119: #{decoder_forward.1} parent=5 // pred_region
        %s939 = ssub.s32 %s49, 1
        %s940 = sand.u32 %s114, 1
        %s941 = scalar_lea.sflag [#allocation3], %s940
        %s942 = sand.u32 %s114, 1
        %s943 = smul.addr %s942, 64
        %s944 = scalar_lea.vmem [#allocation2], %s943
        // Predicated region
        $region121: #{decoder_forward.1} parent=119 // pred_check
          %p945 = pneg %p127
        $region122: #{decoder_forward.1} parent=119 // pred_check_branch
          %947 = sbr.rel (%p945) target = $region124
        $region123: #{decoder_forward.1} parent=119 // pred_region
          %948 = dma.done %s941, 1024
        $region124: #{decoder_forward.1} parent=119 // pred_fallthru
          _
        %s949 = sand.u32 %s54, 1
        %s950 = scalar_lea.sflag [#allocation6], %s949
        %s951 = sand.u32 %s140, 1
        %s952 = smul.addr %s951, 8
        %s953 = scalar_lea.vmem [#allocation5], %s952
        // Predicated region
        $region125: #{decoder_forward.1} parent=119 // pred_check
          %p954 = pneg %p153
        $region126: #{decoder_forward.1} parent=119 // pred_check_branch
          %956 = sbr.rel (%p954) target = $region128
        $region127: #{decoder_forward.1} parent=119 // pred_region
          %957 = dma.done %s950, 128
        $region128: #{decoder_forward.1} parent=119 // pred_fallthru
          _
        // Predicated region
        $region129: #{decoder_forward.1} parent=119 // pred_check
          %p958 = pneg %p174
        $region130: #{decoder_forward.1} parent=119 // pred_check_branch
          %960 = sbr.rel (%p958) target = $region132
        $region131: #{decoder_forward.1} parent=119 // pred_region
          %961 = dma.done [#allocation6], 192
        $region132: #{decoder_forward.1} parent=119 // pred_fallthru
          _
        // Predicated region
        $region133: #{decoder_forward.1} parent=119 // pred_check
          %p962 = pneg %p195
        $region134: #{decoder_forward.1} parent=119 // pred_check_branch
          %964 = sbr.rel (%p962) target = $region136
        $region135: #{decoder_forward.1} parent=119 // pred_region
          %965 = dma.done [#allocation9], 16
        $region136: #{decoder_forward.1} parent=119 // pred_fallthru
          _
        // Predicated region
        $region137: #{decoder_forward.1} parent=119 // pred_check
          %p966 = pneg %p216
        $region138: #{decoder_forward.1} parent=119 // pred_check_branch
          %968 = sbr.rel (%p966) target = $region140
        $region139: #{decoder_forward.1} parent=119 // pred_region
          %969 = dma.done [#allocation9], 16
        $region140: #{decoder_forward.1} parent=119 // pred_fallthru
          _
        // Predicated region
        $region141: #{decoder_forward.1} parent=119 // pred_check
          %p970 = pneg %p237
        $region142: #{decoder_forward.1} parent=119 // pred_check_branch
          %972 = sbr.rel (%p970) target = $region144
        $region143: #{decoder_forward.1} parent=119 // pred_region
          %973 = dma.done [#allocation12], 1024
        $region144: #{decoder_forward.1} parent=119 // pred_fallthru
          _
        // Predicated region
        $region145: #{decoder_forward.1} parent=119 // pred_check
          %p974 = pneg %p258
        $region146: #{decoder_forward.1} parent=119 // pred_check_branch
          %976 = sbr.rel (%p974) target = $region148
        $region147: #{decoder_forward.1} parent=119 // pred_region
          %977 = dma.done [#allocation12], 64
        $region148: #{decoder_forward.1} parent=119 // pred_fallthru
          _
        // Predicated region
        $region149: #{decoder_forward.1} parent=119 // pred_check
          %p978 = pneg %p279
        $region150: #{decoder_forward.1} parent=119 // pred_check_branch
          %980 = sbr.rel (%p978) target = $region152
        $region151: #{decoder_forward.1} parent=119 // pred_region
          %981 = dma.done [#allocation15], 1024
        $region152: #{decoder_forward.1} parent=119 // pred_fallthru
          _
        // Predicated region
        $region153: #{decoder_forward.1} parent=119 // pred_check
          %p982 = pneg %p300
        $region154: #{decoder_forward.1} parent=119 // pred_check_branch
          %984 = sbr.rel (%p982) target = $region156
        $region155: #{decoder_forward.1} parent=119 // pred_region
          %985 = dma.done [#allocation15], 64
        $region156: #{decoder_forward.1} parent=119 // pred_fallthru
          _
        // Predicated region
        $region157: #{decoder_forward.1} parent=119 // pred_check
          %p986 = pneg %p321
        $region158: #{decoder_forward.1} parent=119 // pred_check_branch
          %988 = sbr.rel (%p986) target = $region160
        $region159: #{decoder_forward.1} parent=119 // pred_region
          %989 = dma.done [#allocation18], 1024
        $region160: #{decoder_forward.1} parent=119 // pred_fallthru
          _
        // Predicated region
        $region161: #{decoder_forward.1} parent=119 // pred_check
          %p990 = pneg %p342
        $region162: #{decoder_forward.1} parent=119 // pred_check_branch
          %992 = sbr.rel (%p990) target = $region164
        $region163: #{decoder_forward.1} parent=119 // pred_region
          %993 = dma.done [#allocation18], 64
        $region164: #{decoder_forward.1} parent=119 // pred_fallthru
          _
        // Predicated region
        $region165: #{decoder_forward.1} parent=119 // pred_check
          %p994 = pneg %p363
        $region166: #{decoder_forward.1} parent=119 // pred_check_branch
          %996 = sbr.rel (%p994) target = $region168
        $region167: #{decoder_forward.1} parent=119 // pred_region
          %997 = dma.done [#allocation21], 96
        $region168: #{decoder_forward.1} parent=119 // pred_fallthru
          _
        // Predicated region
        $region169: #{decoder_forward.1} parent=119 // pred_check
          %p998 = pneg %p384
        $region170: #{decoder_forward.1} parent=119 // pred_check_branch
          %1000 = sbr.rel (%p998) target = $region172
        $region171: #{decoder_forward.1} parent=119 // pred_region
          %1001 = dma.done [#allocation21], 96
        $region172: #{decoder_forward.1} parent=119 // pred_fallthru
          _
        // Predicated region
        $region173: #{decoder_forward.1} parent=119 // pred_check
          %p1002 = pneg %p426
        $region174: #{decoder_forward.1} parent=119 // pred_check_branch
          %1004 = sbr.rel (%p1002) target = $region176
        $region175: #{decoder_forward.1} parent=119 // pred_region
          %1005 = dma.done [#allocation24], 32
        $region176: #{decoder_forward.1} parent=119 // pred_fallthru
          _
        // Predicated region
        $region177: #{decoder_forward.1} parent=119 // pred_check
          %p1006 = pneg %p447
        $region178: #{decoder_forward.1} parent=119 // pred_check_branch
          %1008 = sbr.rel (%p1006) target = $region180
        $region179: #{decoder_forward.1} parent=119 // pred_region
          %1009 = dma.done [#allocation24], 512
        $region180: #{decoder_forward.1} parent=119 // pred_fallthru
          _
        // Predicated region
        $region181: #{decoder_forward.1} parent=119 // pred_check
          %p1010 = pneg %p468
        $region182: #{decoder_forward.1} parent=119 // pred_check_branch
          %1012 = sbr.rel (%p1010) target = $region184
        $region183: #{decoder_forward.1} parent=119 // pred_region
          %1013 = dma.done [#allocation27], 32
        $region184: #{decoder_forward.1} parent=119 // pred_fallthru
          _
        // Predicated region
        $region185: #{decoder_forward.1} parent=119 // pred_check
          %p1014 = pneg %p489
        $region186: #{decoder_forward.1} parent=119 // pred_check_branch
          %1016 = sbr.rel (%p1014) target = $region188
        $region187: #{decoder_forward.1} parent=119 // pred_region
          %1017 = dma.done [#allocation27], 256
        $region188: #{decoder_forward.1} parent=119 // pred_fallthru
          _
        // Predicated region
        $region189: #{decoder_forward.1} parent=119 // pred_check
          %p1018 = pneg %p510
        $region190: #{decoder_forward.1} parent=119 // pred_check_branch
          %1020 = sbr.rel (%p1018) target = $region192
        $region191: #{decoder_forward.1} parent=119 // pred_region
          %1021 = dma.done [#allocation30], 16
        $region192: #{decoder_forward.1} parent=119 // pred_fallthru
          _
        // Predicated region
        $region193: #{decoder_forward.1} parent=119 // pred_check
          %p1022 = pneg %p531
        $region194: #{decoder_forward.1} parent=119 // pred_check_branch
          %1024 = sbr.rel (%p1022) target = $region196
        $region195: #{decoder_forward.1} parent=119 // pred_region
          %1025 = dma.done [#allocation30], 16
        $region196: #{decoder_forward.1} parent=119 // pred_fallthru
          _
        // Predicated region
        $region197: #{decoder_forward.1} parent=119 // pred_check
          %p1026 = pneg %p552
        $region198: #{decoder_forward.1} parent=119 // pred_check_branch
          %1028 = sbr.rel (%p1026) target = $region200
        $region199: #{decoder_forward.1} parent=119 // pred_region
          %1029 = dma.done [#allocation33], 16
        $region200: #{decoder_forward.1} parent=119 // pred_fallthru
          _
        // Predicated region
        $region201: #{decoder_forward.1} parent=119 // pred_check
          %p1030 = pneg %p594
        $region202: #{decoder_forward.1} parent=119 // pred_check_branch
          %1032 = sbr.rel (%p1030) target = $region204
        $region203: #{decoder_forward.1} parent=119 // pred_region
          %1033 = dma.done [#allocation33], 16
        $region204: #{decoder_forward.1} parent=119 // pred_fallthru
          _
        %p1034 = scmp.lt.s32.totalorder %s54, 1
        %s1035 = scalar_select %p1034, %s54, 1
        %s1036 = smul.addr %s1035, 8
        %s1037 = scalar_lea.vmem %s0, %s1036
        %p1038 = pneg %p75
        %p1039 = pneg %p72
        %p1040 = scmp.lt.s32.totalorder %s54, 1
        %s1041 = scalar_select %p1040, %s54, 1
        %s1042 = smul.addr %s1041, 8
        %s1043 = scalar_lea.vmem %s1, %s1042
        %p1044 = pneg %p101
        %p1045 = pneg %p98
        %s1046 = sand.u32 %s114, 1
        %s1047 = scalar_lea.sflag [#allocation3], %s1046
        %s1048 = sand.u32 %s114, 1
        %s1049 = smul.addr %s1048, 64
        %s1050 = scalar_lea.vmem [#allocation2], %s1049
        %p1051 = pneg %p127
        %p1052 = pneg %p124
        %s1053 = sand.u32 %s54, 1
        %s1054 = scalar_lea.sflag [#allocation6], %s1053
        %s1055 = sand.u32 %s140, 1
        %s1056 = smul.addr %s1055, 8
        %s1057 = scalar_lea.vmem [#allocation5], %s1056
        %p1058 = pneg %p153
        %p1059 = pneg %p150
        %p1060 = pneg %p174
        %p1061 = pneg %p171
        %p1062 = pneg %p195
        %p1063 = pneg %p192
        %p1064 = pneg %p216
        %p1065 = pneg %p213
        %p1066 = pneg %p237
        %p1067 = pneg %p234
        %p1068 = pneg %p258
        %p1069 = pneg %p255
        %p1070 = pneg %p279
        %p1071 = pneg %p276
        %p1072 = pneg %p300
        %p1073 = pneg %p297
        %p1074 = pneg %p321
        %p1075 = pneg %p318
        %p1076 = pneg %p342
        %p1077 = pneg %p339
        %p1078 = pneg %p363
        %p1079 = pneg %p360
        %p1080 = pneg %p384
        %p1081 = pneg %p381
        %p1082 = pneg %p405
        %p1083 = pneg %p402
        %p1084 = pneg %p426
        %p1085 = pneg %p423
        %p1086 = pneg %p447
        %p1087 = pneg %p444
        %p1088 = pneg %p468
        %p1089 = pneg %p465
        %p1090 = pneg %p489
        %p1091 = pneg %p486
        %p1092 = pneg %p510
        %p1093 = pneg %p507
        %p1094 = pneg %p531
        %p1095 = pneg %p528
        %p1096 = pneg %p552
        %p1097 = pneg %p549
        %p1098 = pneg %p573
        %p1099 = pneg %p570
        %p1100 = pneg %p594
        %p1101 = pneg %p591
        %p1102 = pneg %p620
        %p1103 = pneg %p617
        %s1104 = sand.u32 %s607, 1
        %s1105 = scalar_lea.sflag [#allocation4], %s1104
        %s1106 = sand.u32 %s607, 1
        %s1107 = smul.addr %s1106, 8
        %s1108 = scalar_lea.vmem [#allocation35], %s1107
        %p1109 = scmp.lt.s32.totalorder %s54, 1
        %s1110 = scalar_select %p1109, %s54, 1
        %s1111 = smul.addr %s1110, 8
        %s1112 = scalar_lea.vmem %s0, %s1111
        %p1113 = scmp.lt.s32.totalorder %s54, 1
        %s1114 = scalar_select %p1113, %s54, 1
        %s1115 = smul.addr %s1114, 8
        %s1116 = scalar_lea.vmem %s1, %s1115
        %v1118 = vlaneseq
        %v1119 = vshrl.u32 %v1118, 7
        %v1120 = vlaneseq
        %v1121 = vand.u32 %v1120, 127
        %vm1122 = vcmp.gt.s32.totalorder %v1121, %v1119
        %vm1123 = vcmp.eq.s32.totalorder %v1119, %v1121
        %v1124 = vsel %vm1123, 1, 0
        %v1125 = vcvt.s32.f32 %v1124
        %v1126 = vld [vmem:[%s953] sm:$0xff]
        %v1127 = vadd.f32 %v1126, %v1125
        %v1128 = vld [vmem:[%s944] sm:$0xff]
        %v1129 = vld [vmem:[%s944 + $0x8] sm:$0xff]
        %v1130 = vld [vmem:[%s944 + $0x10] sm:$0xff]
        %v1131 = vld [vmem:[%s944 + $0x18] sm:$0xff]
        %v1132 = vld [vmem:[%s944 + $0x20] sm:$0xff]
        %v1133 = vld [vmem:[%s944 + $0x28] sm:$0xff]
        %v1134 = vld [vmem:[%s944 + $0x30] sm:$0xff]
        %v1135 = vld [vmem:[%s944 + $0x38] sm:$0xff]
        %v1136 = vld [vmem:[%s1112] sm:$0xff]
        %v1137 = vld [vmem:[#allocation7] sm:$0xf]
        %v1138 = vld [vmem:[#allocation7 + $0x4] sm:$0xf]
        %v1139 = vld [vmem:[#allocation7 + $0x8] sm:$0x1]
        %v1140 = vpack.c.bf16 %v1136, %v1136
        %v1144 = vunpack.c.l.b16 %v1137
        %v1145 = vunpack.c.l.b16 %v1138
        %v1146 = vunpack.c.l.b16 %v1139
        %v1147 = vpack.c.b16 %v1145, %v1144
        %v1148 = vpack.c.b16 %v1146, %v1146
        %vm1150 = vcmask 138240
        %v1152 = vsel %vm1150, %v1140, 0
        %vm1154 = vcmask 1040384
        %v1155 = vsel 0, 4294967295, 65535
        %v1156 = vsel %vm1154, %v1155, 0
        %v1158 = vand.u32 %v1148, %v1156
        %1160 = vmatprep.subr.bf16.mxu0 0
        %1161 = vmatpush1.bf16.msra.mxu0 0
        %1162 = vmatprep.subr.bf16.mxu0 0
        %1163 = vmatpush1.bf16.msra.mxu0 0
        %1164 = vmatprep.subr.bf16.mxu0 0
        %1165 = vmatpush1.bf16.msra.mxu0 0
        %1166 = vmatprep.subr.bf16.mxu0 0
        %1167 = vmatpush1.bf16.msra.mxu0 0
        %1168 = vmatprep.subr.bf16.mxu0 0
        %1169 = vmatpush1.bf16.msra.mxu0 0
        %1170 = vmatprep.subr.bf16.mxu0 0
        %1171 = vmatpush1.bf16.msra.mxu0 0
        %1172 = vmatprep.subr.bf16.mxu0 0
        %1173 = vmatpush1.bf16.msra.mxu0 %v1158
        %1174 = vmatprep.subr.bf16.mxu0 0
        %1175 = vmatpush1.bf16.msra.mxu0 %v1147
        %1176 = vmatprep.subr.bf16.mxu0 0
        %1177 = vmatpush2.bf16.msra.mxu0 0
        %1178 = vmatprep.subr.bf16.mxu0 0
        %1179 = vmatpush2.bf16.msra.mxu0 0
        %1180 = vmatprep.subr.bf16.mxu0 0
        %1181 = vmatpush2.bf16.msra.mxu0 0
        %1182 = vmatprep.subr.bf16.mxu0 0
        %1183 = vmatpush2.bf16.msra.mxu0 0
        %1184 = vmatprep.subr.bf16.mxu0 0
        %1185 = vmatpush2.bf16.msra.mxu0 0
        %1186 = vmatprep.subr.bf16.mxu0 0
        %1187 = vmatpush2.bf16.msra.mxu0 0
        %1188 = vmatprep.subr.bf16.mxu0 0
        %1189 = vmatpush2.bf16.msra.mxu0 0
        %1190 = vmatprep.subr.bf16.mxu0 0
        %1191 = vmatpush2.bf16.msra.mxu0 0
        %1192 = vmatprep.mubr.bf16.mxu0 0
        %1193 = vmatmul.mubr.bf16.gmra.mxu0 %v1152
        %v1194 = vpop.f32.mrf.mxu0
        %v1195 = vadd.f32 0.0, %v1194
        %v1196 = vpop.f32.mrf.mxu0
        %v1197 = vpop.f32.mrf.mxu0
        %v1198 = vpop.f32.mrf.mxu0
        %1199 = vdwg.mxu0
        %v1200 = vmul.f32 %v1195, 0.5
        %v1201 = vmul.f32 %v1195, 0.044715
        %v1202 = vmul.f32 %v1201, %v1195
        %v1203 = vmul.f32 %v1202, %v1195
        %v1204 = vadd.f32 %v1195, %v1203
        %v1205 = vmul.f32 %v1204, 0.7978846
        %v1206 = vtanh.pop %v1205
        %v1207 = vadd.f32 %v1206, 1.0
        %v1208 = vmul.f32 %v1200, %v1207
        %v1209 = vld [vmem:[#allocation8] sm:$0x1]
        %v1210 = vld [vmem:[#allocation10] sm:$0x1]
        %vm1211 = vcmask 261120
        %v1212 = vsel %vm1211, %v1208, 0.0
        %1213 = vadd.xlane.f32.xlu0 %v1212
        %v1214 = vpop.xlane.xlu0 %1213
        %v1215 = vrcp.pop 32.0
        %v1216 = vmul.f32 %v1214, %v1215
        %v1217 = vsub.f32 %v1208, %v1216
        %v1218 = vmul.f32 %v1217, %v1217
        %v1219 = vsel %vm1211, %v1218, 0.0
        %1220 = vadd.xlane.f32.xlu0 %v1219
        %v1221 = vpop.xlane.xlu0 %1220
        %v1222 = vmul.f32 %v1221, %v1215
        %v1223 = vadd.f32 %v1222, 1e-05
        %v1224 = vrsqrt.pop %v1223
        %v1225 = vmul.f32 %v1217, %v1224
        %v1227 = vlaneseq
        %v1228 = vshrl.u32 %v1227, 7
        %v1229 = vsub.s32 0, %v1228
        %v1230 = vrot.slane %v1209, %v1229
        %v1232 = vmul.f32 %v1225, %v1230
        %v1234 = vlaneseq
        %v1235 = vshrl.u32 %v1234, 7
        %v1236 = vsub.s32 0, %v1235
        %v1237 = vrot.slane %v1210, %v1236
        %v1239 = vadd.f32 %v1232, %v1237
        %v1240 = vld [vmem:[%s1116] sm:$0xff]
        %v1241 = vld [vmem:[#allocation11] sm:$0xf]
        %v1242 = vld [vmem:[#allocation11 + $0x4] sm:$0xf]
        %v1243 = vld [vmem:[#allocation11 + $0x8] sm:$0xf]
        %v1244 = vld [vmem:[#allocation11 + $0xc] sm:$0xf]
        %v1245 = vld [vmem:[#allocation13] sm:$0x1]
        %v1246 = vld [vmem:[#allocation14] sm:$0xf]
        %v1247 = vld [vmem:[#allocation14 + $0x4] sm:$0xf]
        %v1248 = vld [vmem:[#allocation14 + $0x8] sm:$0xf]
        %v1249 = vld [vmem:[#allocation14 + $0xc] sm:$0xf]
        %v1250 = vld [vmem:[#allocation16] sm:$0x1]
        %v1251 = vld [vmem:[#allocation17] sm:$0xf]
        %v1252 = vld [vmem:[#allocation17 + $0x4] sm:$0xf]
        %v1253 = vld [vmem:[#allocation17 + $0x8] sm:$0xf]
        %v1254 = vld [vmem:[#allocation17 + $0xc] sm:$0xf]
        %v1255 = vld [vmem:[#allocation19] sm:$0x1]
        %v1256 = vpack.c.bf16 %v1239, %v1239
        %v1258 = vlaneseq
        %v1259 = vshrl.u32 %v1258, 7
        %v1260 = vsub.s32 0, %v1259
        %v1261 = vrot.slane %v1245, %v1260
        %v1267 = vunpack.c.l.b16 %v1241
        %v1268 = vunpack.c.l.b16 %v1242
        %v1269 = vunpack.c.l.b16 %v1243
        %v1270 = vunpack.c.l.b16 %v1244
        %v1271 = vpack.c.b16 %v1268, %v1267
        %v1272 = vpack.c.b16 %v1270, %v1269
        %v1276 = vsel %vm1211, %v1256, 0
        %1278 = vmatprep.subr.bf16.mxu0 0
        %1279 = vmatpush1.bf16.msra.mxu0 0
        %1280 = vmatprep.subr.bf16.mxu0 0
        %1281 = vmatpush1.bf16.msra.mxu0 0
        %1282 = vmatprep.subr.bf16.mxu0 0
        %1283 = vmatpush1.bf16.msra.mxu0 0
        %1284 = vmatprep.subr.bf16.mxu0 0
        %1285 = vmatpush1.bf16.msra.mxu0 0
        %1286 = vmatprep.subr.bf16.mxu0 0
        %1287 = vmatpush1.bf16.msra.mxu0 0
        %1288 = vmatprep.subr.bf16.mxu0 0
        %1289 = vmatpush1.bf16.msra.mxu0 0
        %1290 = vmatprep.subr.bf16.mxu0 0
        %1291 = vmatpush1.bf16.msra.mxu0 %v1272
        %1292 = vmatprep.subr.bf16.mxu0 0
        %1293 = vmatpush1.bf16.msra.mxu0 %v1271
        %1294 = vmatprep.subr.bf16.mxu0 0
        %1295 = vmatpush2.bf16.msra.mxu0 0
        %1296 = vmatprep.subr.bf16.mxu0 0
        %1297 = vmatpush2.bf16.msra.mxu0 0
        %1298 = vmatprep.subr.bf16.mxu0 0
        %1299 = vmatpush2.bf16.msra.mxu0 0
        %1300 = vmatprep.subr.bf16.mxu0 0
        %1301 = vmatpush2.bf16.msra.mxu0 0
        %1302 = vmatprep.subr.bf16.mxu0 0
        %1303 = vmatpush2.bf16.msra.mxu0 0
        %1304 = vmatprep.subr.bf16.mxu0 0
        %1305 = vmatpush2.bf16.msra.mxu0 0
        %1306 = vmatprep.subr.bf16.mxu0 0
        %1307 = vmatpush2.bf16.msra.mxu0 0
        %1308 = vmatprep.subr.bf16.mxu0 0
        %1309 = vmatpush2.bf16.msra.mxu0 0
        %1310 = vmatprep.mubr.bf16.mxu0 0
        %1311 = vmatmul.mubr.bf16.gmra.mxu0 %v1276
        %v1312 = vpop.f32.mrf.mxu0
        %v1313 = vadd.f32 %v1261, %v1312
        %v1314 = vpop.f32.mrf.mxu0
        %v1315 = vpop.f32.mrf.mxu0
        %v1316 = vpop.f32.mrf.mxu0
        %1317 = vdwg.mxu0
        %v1318 = vpack.c.bf16 %v1129, %v1128
        %v1319 = vpack.c.bf16 %v1131, %v1130
        %v1320 = vpack.c.bf16 %v1133, %v1132
        %v1321 = vpack.c.bf16 %v1135, %v1134
        %v1323 = vlaneseq
        %v1324 = vshrl.u32 %v1323, 7
        %v1325 = vsub.s32 0, %v1324
        %v1326 = vrot.slane %v1250, %v1325
        %v1332 = vunpack.c.l.b16 %v1246
        %v1333 = vunpack.c.l.b16 %v1247
        %v1334 = vunpack.c.l.b16 %v1248
        %v1335 = vunpack.c.l.b16 %v1249
        %v1336 = vpack.c.b16 %v1333, %v1332
        %v1337 = vpack.c.b16 %v1335, %v1334
        %v1341 = vsel %vm1211, %v1318, 0
        %v1344 = vsel %vm1211, %v1319, 0
        %v1347 = vsel %vm1211, %v1320, 0
        %v1350 = vsel %vm1211, %v1321, 0
        %1352 = vmatprep.subr.bf16.mxu0 0
        %1353 = vmatpush1.bf16.msra.mxu0 0
        %1354 = vmatprep.subr.bf16.mxu0 0
        %1355 = vmatpush1.bf16.msra.mxu0 0
        %1356 = vmatprep.subr.bf16.mxu0 0
        %1357 = vmatpush1.bf16.msra.mxu0 0
        %1358 = vmatprep.subr.bf16.mxu0 0
        %1359 = vmatpush1.bf16.msra.mxu0 0
        %1360 = vmatprep.subr.bf16.mxu0 0
        %1361 = vmatpush1.bf16.msra.mxu0 0
        %1362 = vmatprep.subr.bf16.mxu0 0
        %1363 = vmatpush1.bf16.msra.mxu0 0
        %1364 = vmatprep.subr.bf16.mxu0 0
        %1365 = vmatpush1.bf16.msra.mxu0 %v1337
        %1366 = vmatprep.subr.bf16.mxu0 0
        %1367 = vmatpush1.bf16.msra.mxu0 %v1336
        %1368 = vmatprep.subr.bf16.mxu0 0
        %1369 = vmatpush2.bf16.msra.mxu0 0
        %1370 = vmatprep.subr.bf16.mxu0 0
        %1371 = vmatpush2.bf16.msra.mxu0 0
        %1372 = vmatprep.subr.bf16.mxu0 0
        %1373 = vmatpush2.bf16.msra.mxu0 0
        %1374 = vmatprep.subr.bf16.mxu0 0
        %1375 = vmatpush2.bf16.msra.mxu0 0
        %1376 = vmatprep.subr.bf16.mxu0 0
        %1377 = vmatpush2.bf16.msra.mxu0 0
        %1378 = vmatprep.subr.bf16.mxu0 0
        %1379 = vmatpush2.bf16.msra.mxu0 0
        %1380 = vmatprep.subr.bf16.mxu0 0
        %1381 = vmatpush2.bf16.msra.mxu0 0
        %1382 = vmatprep.subr.bf16.mxu0 0
        %1383 = vmatpush2.bf16.msra.mxu0 0
        %1384 = vmatprep.mubr.bf16.mxu0 0
        %1385 = vmatmul.mubr.bf16.gmra.mxu0 %v1341
        %v1386 = vpop.f32.mrf.mxu0
        %v1387 = vadd.f32 %v1326, %v1386
        %v1388 = vpop.f32.mrf.mxu0
        %v1389 = vpop.f32.mrf.mxu0
        %v1390 = vadd.f32 %v1326, %v1389
        %v1391 = vpop.f32.mrf.mxu0
        %1392 = vmatprep.mubr.bf16.mxu0 0
        %1393 = vmatmul.mubr.bf16.gmra.mxu0 %v1344
        %v1394 = vpop.f32.mrf.mxu0
        %v1395 = vadd.f32 %v1326, %v1394
        %v1396 = vpop.f32.mrf.mxu0
        %v1397 = vpop.f32.mrf.mxu0
        %v1398 = vadd.f32 %v1326, %v1397
        %v1399 = vpop.f32.mrf.mxu0
        %1400 = vmatprep.mubr.bf16.mxu0 0
        %1401 = vmatmul.mubr.bf16.gmra.mxu0 %v1347
        %v1402 = vpop.f32.mrf.mxu0
        %v1403 = vadd.f32 %v1326, %v1402
        %v1404 = vpop.f32.mrf.mxu0
        %v1405 = vpop.f32.mrf.mxu0
        %v1406 = vadd.f32 %v1326, %v1405
        %v1407 = vpop.f32.mrf.mxu0
        %1408 = vmatprep.mubr.bf16.mxu0 0
        %1409 = vmatmul.mubr.bf16.gmra.mxu0 %v1350
        %v1410 = vpop.f32.mrf.mxu0
        %v1411 = vadd.f32 %v1326, %v1410
        %v1412 = vpop.f32.mrf.mxu0
        %v1413 = vpop.f32.mrf.mxu0
        %v1414 = vadd.f32 %v1326, %v1413
        %v1415 = vpop.f32.mrf.mxu0
        %1416 = vdwg.mxu0
        %v1417 = vpack.c.bf16 %v1313, %v1313
        %1426 = vrot.lane.b32.xlu0 %v1387, 96
        %v1427 = vpop.permute.xlu0 %1426
        %1428 = vrot.lane.b32.xlu0 %v1390, 96
        %v1429 = vpop.permute.xlu0 %1428
        %1430 = vrot.lane.b32.xlu0 %v1395, 96
        %v1431 = vpop.permute.xlu0 %1430
        %1432 = vrot.lane.b32.xlu0 %v1398, 96
        %v1433 = vpop.permute.xlu0 %1432
        %1434 = vrot.lane.b32.xlu0 %v1403, 96
        %v1435 = vpop.permute.xlu0 %1434
        %1436 = vrot.lane.b32.xlu0 %v1406, 96
        %v1437 = vpop.permute.xlu0 %1436
        %1438 = vrot.lane.b32.xlu0 %v1411, 96
        %v1439 = vpop.permute.xlu0 %1438
        %1440 = vrot.lane.b32.xlu0 %v1414, 96
        %v1441 = vpop.permute.xlu0 %1440
        %v1450 = vmul.f32 %v1313, %v1427
        %v1451 = vmul.f32 %v1313, %v1429
        %v1452 = vmul.f32 %v1313, %v1431
        %v1453 = vmul.f32 %v1313, %v1433
        %v1454 = vmul.f32 %v1313, %v1435
        %v1455 = vmul.f32 %v1313, %v1437
        %v1456 = vmul.f32 %v1313, %v1439
        %v1457 = vmul.f32 %v1313, %v1441
        %v1459 = vcombine.high %v1313, %v1313
        %v1461 = vunpack.c.l.s4 1966171168
        %v1462 = vunpack.c.0.s8 %v1461
        %v1463 = vlaneseq
        %v1464 = vshrl.u32 %v1463, 7
        %v1465 = vsub.s32 %v1462, %v1464
        %v1466 = vrot.slane %v1313, %v1465
        %v1468 = vunpack.c.l.s4 1966171168
        %v1469 = vunpack.c.0.s8 %v1468
        %v1470 = vlaneseq
        %v1471 = vshrl.u32 %v1470, 7
        %v1472 = vsub.s32 %v1469, %v1471
        %v1473 = vrot.slane %v1459, %v1472
        %v1474 = vcombine.high %v1466, %v1466
        %v1475 = vcombine.high %v1473, %v1473
        %v1477 = vunpack.c.l.s4 1966171168
        %v1478 = vunpack.c.0.s8 %v1477
        %v1479 = vlaneseq
        %v1480 = vshrl.u32 %v1479, 7
        %v1481 = vsub.s32 %v1478, %v1480
        %v1482 = vrot.slane %v1466, %v1481
        %v1484 = vunpack.c.l.s4 1966171168
        %v1485 = vunpack.c.0.s8 %v1484
        %v1486 = vlaneseq
        %v1487 = vshrl.u32 %v1486, 7
        %v1488 = vsub.s32 %v1485, %v1487
        %v1489 = vrot.slane %v1473, %v1488
        %v1491 = vunpack.c.l.s4 1966171168
        %v1492 = vunpack.c.0.s8 %v1491
        %v1493 = vlaneseq
        %v1494 = vshrl.u32 %v1493, 7
        %v1495 = vsub.s32 %v1492, %v1494
        %v1496 = vrot.slane %v1474, %v1495
        %v1498 = vunpack.c.l.s4 1966171168
        %v1499 = vunpack.c.0.s8 %v1498
        %v1500 = vlaneseq
        %v1501 = vshrl.u32 %v1500, 7
        %v1502 = vsub.s32 %v1499, %v1501
        %v1503 = vrot.slane %v1475, %v1502
        %v1504 = vcombine.high %v1482, %v1482
        %v1505 = vcombine.high %v1489, %v1489
        %v1506 = vcombine.high %v1496, %v1496
        %v1507 = vcombine.high %v1503, %v1503
        %v1508 = vlaneseq
        %v1509 = vshrl.u32 %v1508, 7
        %v1510 = vsub.s32 0, %v1509
        %v1511 = vrot.slane %v1482, %v1510
        %v1512 = vlaneseq
        %v1513 = vshrl.u32 %v1512, 7
        %v1514 = vsub.s32 0, %v1513
        %v1515 = vrot.slane %v1496, %v1514
        %v1516 = vlaneseq
        %v1517 = vshrl.u32 %v1516, 7
        %v1518 = vsub.s32 0, %v1517
        %v1519 = vrot.slane %v1504, %v1518
        %v1520 = vlaneseq
        %v1521 = vshrl.u32 %v1520, 7
        %v1522 = vsub.s32 0, %v1521
        %v1523 = vrot.slane %v1506, %v1522
        %v1524 = vlaneseq
        %v1525 = vshrl.u32 %v1524, 7
        %v1526 = vsub.s32 0, %v1525
        %v1527 = vrot.slane %v1489, %v1526
        %v1528 = vlaneseq
        %v1529 = vshrl.u32 %v1528, 7
        %v1530 = vsub.s32 0, %v1529
        %v1531 = vrot.slane %v1503, %v1530
        %v1532 = vlaneseq
        %v1533 = vshrl.u32 %v1532, 7
        %v1534 = vsub.s32 0, %v1533
        %v1535 = vrot.slane %v1505, %v1534
        %v1536 = vlaneseq
        %v1537 = vshrl.u32 %v1536, 7
        %v1538 = vsub.s32 0, %v1537
        %v1539 = vrot.slane %v1507, %v1538
        %v1548 = vadd.f32 %v1511, %v1387
        %v1549 = vadd.f32 %v1515, %v1390
        %v1550 = vadd.f32 %v1519, %v1395
        %v1551 = vadd.f32 %v1523, %v1398
        %v1552 = vadd.f32 %v1527, %v1403
        %v1553 = vadd.f32 %v1531, %v1406
        %v1554 = vadd.f32 %v1535, %v1411
        %v1555 = vadd.f32 %v1539, %v1414
        %1564 = vrot.lane.b32.xlu0 %v1548, 96
        %v1565 = vpop.permute.xlu0 %1564
        %1566 = vrot.lane.b32.xlu0 %v1549, 96
        %v1567 = vpop.permute.xlu0 %1566
        %1568 = vrot.lane.b32.xlu0 %v1550, 96
        %v1569 = vpop.permute.xlu0 %1568
        %1570 = vrot.lane.b32.xlu0 %v1551, 96
        %v1571 = vpop.permute.xlu0 %1570
        %1572 = vrot.lane.b32.xlu0 %v1552, 96
        %v1573 = vpop.permute.xlu0 %1572
        %1574 = vrot.lane.b32.xlu0 %v1553, 96
        %v1575 = vpop.permute.xlu0 %1574
        %1576 = vrot.lane.b32.xlu0 %v1554, 96
        %v1577 = vpop.permute.xlu0 %1576
        %1578 = vrot.lane.b32.xlu0 %v1555, 96
        %v1579 = vpop.permute.xlu0 %1578
        %v1588 = vmul.f32 %v1387, %v1565
        %v1589 = vmul.f32 %v1390, %v1567
        %v1590 = vmul.f32 %v1395, %v1569
        %v1591 = vmul.f32 %v1398, %v1571
        %v1592 = vmul.f32 %v1403, %v1573
        %v1593 = vmul.f32 %v1406, %v1575
        %v1594 = vmul.f32 %v1411, %v1577
        %v1595 = vmul.f32 %v1414, %v1579
        %v1596 = vadd.f32 %v1450, %v1588
        %v1597 = vadd.f32 %v1451, %v1589
        %v1598 = vadd.f32 %v1452, %v1590
        %v1599 = vadd.f32 %v1453, %v1591
        %v1600 = vadd.f32 %v1454, %v1592
        %v1601 = vadd.f32 %v1455, %v1593
        %v1602 = vadd.f32 %v1456, %v1594
        %v1603 = vadd.f32 %v1457, %v1595
        %v1604 = vsel %vm1211, %v1596, 0.0
        %1605 = vadd.xlane.f32.xlu0 %v1604
        %v1606 = vpop.xlane.xlu0 %1605
        %v1607 = vsel %vm1211, %v1597, 0.0
        %1608 = vadd.xlane.f32.xlu0 %v1607
        %v1609 = vpop.xlane.xlu0 %1608
        %v1610 = vsel %vm1211, %v1598, 0.0
        %1611 = vadd.xlane.f32.xlu0 %v1610
        %v1612 = vpop.xlane.xlu0 %1611
        %v1613 = vsel %vm1211, %v1599, 0.0
        %1614 = vadd.xlane.f32.xlu0 %v1613
        %v1615 = vpop.xlane.xlu0 %1614
        %v1616 = vsel %vm1211, %v1600, 0.0
        %1617 = vadd.xlane.f32.xlu0 %v1616
        %v1618 = vpop.xlane.xlu0 %1617
        %v1619 = vsel %vm1211, %v1601, 0.0
        %1620 = vadd.xlane.f32.xlu0 %v1619
        %v1621 = vpop.xlane.xlu0 %1620
        %v1622 = vsel %vm1211, %v1602, 0.0
        %1623 = vadd.xlane.f32.xlu0 %v1622
        %v1624 = vpop.xlane.xlu0 %1623
        %v1625 = vsel %vm1211, %v1603, 0.0
        %1626 = vadd.xlane.f32.xlu0 %v1625
        %v1627 = vpop.xlane.xlu0 %1626
        %v1636 = vlaneseq
        %v1637 = vshrl.u32 %v1636, 7
        %v1638 = vsub.s32 %v1121, %v1637
        %v1639 = vrot.slane %v1606, %v1638
        %v1640 = vlaneseq
        %v1641 = vshrl.u32 %v1640, 7
        %v1642 = vsub.s32 %v1121, %v1641
        %v1643 = vrot.slane %v1609, %v1642
        %v1644 = vlaneseq
        %v1645 = vshrl.u32 %v1644, 7
        %v1646 = vsub.s32 %v1121, %v1645
        %v1647 = vrot.slane %v1612, %v1646
        %v1648 = vlaneseq
        %v1649 = vshrl.u32 %v1648, 7
        %v1650 = vsub.s32 %v1121, %v1649
        %v1651 = vrot.slane %v1615, %v1650
        %v1652 = vlaneseq
        %v1653 = vshrl.u32 %v1652, 7
        %v1654 = vsub.s32 %v1121, %v1653
        %v1655 = vrot.slane %v1618, %v1654
        %v1656 = vlaneseq
        %v1657 = vshrl.u32 %v1656, 7
        %v1658 = vsub.s32 %v1121, %v1657
        %v1659 = vrot.slane %v1621, %v1658
        %v1660 = vlaneseq
        %v1661 = vshrl.u32 %v1660, 7
        %v1662 = vsub.s32 %v1121, %v1661
        %v1663 = vrot.slane %v1624, %v1662
        %v1664 = vlaneseq
        %v1665 = vshrl.u32 %v1664, 7
        %v1666 = vsub.s32 %v1121, %v1665
        %v1667 = vrot.slane %v1627, %v1666
        %vm1668 = vcmask 1041409
        %v1669 = vsel %vm1668, %v1643, %v1639
        %vm1670 = vcmask 1042434
        %v1671 = vsel %vm1670, %v1647, %v1669
        %vm1672 = vcmask 1043459
        %v1673 = vsel %vm1672, %v1651, %v1671
        %vm1674 = vcmask 1044484
        %v1675 = vsel %vm1674, %v1655, %v1673
        %vm1676 = vcmask 1045509
        %v1677 = vsel %vm1676, %v1659, %v1675
        %vm1678 = vcmask 1046534
        %v1679 = vsel %vm1678, %v1663, %v1677
        %vm1680 = vcmask 1047559
        %v1681 = vsel %vm1680, %v1667, %v1679
        %1683 = vxpose.xlu0.b32.start [1/16] %v1681, 128
        %1684 = vxpose.xlu0.b32.cont [2/16] 0.0, 128
        %1685 = vxpose.xlu0.b32.cont [3/16] 0.0, 128
        %1686 = vxpose.xlu0.b32.cont [4/16] 0.0, 128
        %1687 = vxpose.xlu0.b32.cont [5/16] 0.0, 128
        %1688 = vxpose.xlu0.b32.cont [6/16] 0.0, 128
        %1689 = vxpose.xlu0.b32.cont [7/16] 0.0, 128
        %1690 = vxpose.xlu0.b32.cont [8/16] 0.0, 128
        %1691 = vxpose.xlu0.b32.cont [9/16] 0.0, 128
        %1692 = vxpose.xlu0.b32.cont [10/16] 0.0, 128
        %1693 = vxpose.xlu0.b32.cont [11/16] 0.0, 128
        %1694 = vxpose.xlu0.b32.cont [12/16] 0.0, 128
        %1695 = vxpose.xlu0.b32.cont [13/16] 0.0, 128
        %1696 = vxpose.xlu0.b32.cont [14/16] 0.0, 128
        %1697 = vxpose.xlu0.b32.cont [15/16] 0.0, 128
        %1698 = vxpose.xlu0.b32.end [16/16] 0.0, 128
        %v1699 = vpop.trf.xlu0
        %v1700 = vpop.trf.xlu0
        %v1701 = vpop.trf.xlu0
        %v1702 = vpop.trf.xlu0
        %v1703 = vpop.trf.xlu0
        %v1704 = vpop.trf.xlu0
        %v1705 = vpop.trf.xlu0
        %v1706 = vpop.trf.xlu0
        %v1707 = vpop.trf.xlu0
        %v1708 = vpop.trf.xlu0
        %v1709 = vpop.trf.xlu0
        %v1710 = vpop.trf.xlu0
        %v1711 = vpop.trf.xlu0
        %v1712 = vpop.trf.xlu0
        %v1713 = vpop.trf.xlu0
        %v1714 = vpop.trf.xlu0
        %1716 = vrot.lane.b32.xlu0 %v1417, 96
        %v1717 = vpop.permute.xlu0 %1716
        %v1719 = vsel %vm1211, %v1417, 0
        %v1722 = vsel %vm1211, %v1717, 0
        %1724 = vmatprep.subr.bf16.mxu0 0
        %1725 = vmatpush1.bf16.xpose.msra.mxu0 0
        %1726 = vmatprep.subr.bf16.mxu0 0
        %1727 = vmatpush1.bf16.xpose.msra.mxu0 0
        %1728 = vmatprep.subr.bf16.mxu0 0
        %1729 = vmatpush1.bf16.xpose.msra.mxu0 0
        %1730 = vmatprep.subr.bf16.mxu0 0
        %1731 = vmatpush1.bf16.xpose.msra.mxu0 0
        %1732 = vmatprep.subr.bf16.mxu0 0
        %1733 = vmatpush1.bf16.xpose.msra.mxu0 0
        %1734 = vmatprep.subr.bf16.mxu0 0
        %1735 = vmatpush1.bf16.xpose.msra.mxu0 0
        %1736 = vmatprep.subr.bf16.mxu0 0
        %1737 = vmatpush1.bf16.xpose.msra.mxu0 0
        %1738 = vmatprep.subr.bf16.mxu0 0
        %1739 = vmatpush1.bf16.xpose.msra.mxu0 %v1722
        %1740 = vmatprep.subr.bf16.mxu0 0
        %1741 = vmatpush2.bf16.xpose.msra.mxu0 0
        %1742 = vmatprep.subr.bf16.mxu0 0
        %1743 = vmatpush2.bf16.xpose.msra.mxu0 0
        %1744 = vmatprep.subr.bf16.mxu0 0
        %1745 = vmatpush2.bf16.xpose.msra.mxu0 0
        %1746 = vmatprep.subr.bf16.mxu0 0
        %1747 = vmatpush2.bf16.xpose.msra.mxu0 0
        %1748 = vmatprep.subr.bf16.mxu0 0
        %1749 = vmatpush2.bf16.xpose.msra.mxu0 0
        %1750 = vmatprep.subr.bf16.mxu0 0
        %1751 = vmatpush2.bf16.xpose.msra.mxu0 0
        %1752 = vmatprep.subr.bf16.mxu0 0
        %1753 = vmatpush2.bf16.xpose.msra.mxu0 0
        %1754 = vmatprep.subr.bf16.mxu0 0
        %1755 = vmatpush2.bf16.xpose.msra.mxu0 0
        %1756 = vmatprep.mubr.bf16.mxu0 0
        %1757 = vmatmul.mubr.bf16.gmra.mxu0 %v1719
        %v1758 = vpop.f32.mrf.mxu0
        %v1759 = vadd.f32 %v1699, %v1758
        %v1760 = vpop.f32.mrf.mxu0
        %v1761 = vpop.f32.mrf.mxu0
        %v1762 = vpop.f32.mrf.mxu0
        %1763 = vdwg.mxu0
        %v1764 = vmul.f32 %v1759, 0.03125
        %v1765 = vsel %vm1122, -inf, %v1764
        %vm1766 = vcmp.eq.f32.partialorder %v1127, 0.0
        %v1767 = vsel %vm1766, -inf, %v1765
        %vm1768 = vcmask 64512
        %v1769 = vsel %vm1768, %v1767, -inf
        %1770 = vmax.xlane.f32.xlu0 %v1769
        %v1771 = vpop.xlane.xlu0 %1770
        %v1772 = vsub.f32 %v1767, %v1771
        %v1773 = vmul.f32 %v1772, 1.442695
        %v1774 = vpow.pop %v1773
        %v1775 = vsel %vm1768, %v1774, 0.0
        %1776 = vadd.xlane.f32.xlu0 %v1775
        %v1777 = vpop.xlane.xlu0 %1776
        %v1778 = vrcp.pop %v1777
        %v1779 = vmul.f32 %v1774, %v1778
        %v1780 = vmul.f32 %v1779, %v1127
        %v1781 = vpack.c.bf16 %v1780, %v1780
        %1782 = vrot.lane.b32.xlu0 %v1417, 64
        %v1783 = vpop.permute.xlu0 %1782
        %v1785 = vsel %vm1768, %v1781, 0
        %vm1787 = vcmask 1043456
        %v1789 = vsel %vm1787, %v1783, 0
        %1791 = vmatprep.subr.bf16.mxu0 0
        %1792 = vmatpush1.bf16.msra.mxu0 0
        %1793 = vmatprep.subr.bf16.mxu0 0
        %1794 = vmatpush1.bf16.msra.mxu0 0
        %1795 = vmatprep.subr.bf16.mxu0 0
        %1796 = vmatpush1.bf16.msra.mxu0 0
        %1797 = vmatprep.subr.bf16.mxu0 0
        %1798 = vmatpush1.bf16.msra.mxu0 0
        %1799 = vmatprep.subr.bf16.mxu0 0
        %1800 = vmatpush1.bf16.msra.mxu0 0
        %1801 = vmatprep.subr.bf16.mxu0 0
        %1802 = vmatpush1.bf16.msra.mxu0 0
        %1803 = vmatprep.subr.bf16.mxu0 0
        %1804 = vmatpush1.bf16.msra.mxu0 0
        %1805 = vmatprep.subr.bf16.mxu0 0
        %1806 = vmatpush1.bf16.msra.mxu0 %v1789
        %1807 = vmatprep.subr.bf16.mxu0 0
        %1808 = vmatpush2.bf16.msra.mxu0 0
        %1809 = vmatprep.subr.bf16.mxu0 0
        %1810 = vmatpush2.bf16.msra.mxu0 0
        %1811 = vmatprep.subr.bf16.mxu0 0
        %1812 = vmatpush2.bf16.msra.mxu0 0
        %1813 = vmatprep.subr.bf16.mxu0 0
        %1814 = vmatpush2.bf16.msra.mxu0 0
        %1815 = vmatprep.subr.bf16.mxu0 0
        %1816 = vmatpush2.bf16.msra.mxu0 0
        %1817 = vmatprep.subr.bf16.mxu0 0
        %1818 = vmatpush2.bf16.msra.mxu0 0
        %1819 = vmatprep.subr.bf16.mxu0 0
        %1820 = vmatpush2.bf16.msra.mxu0 0
        %1821 = vmatprep.subr.bf16.mxu0 0
        %1822 = vmatpush2.bf16.msra.mxu0 0
        %1823 = vmatprep.mubr.bf16.mxu0 0
        %1824 = vmatmul.mubr.bf16.gmra.mxu0 %v1785
        %v1825 = vpop.f32.mrf.mxu0
        %v1826 = vadd.f32 0.0, %v1825
        %v1827 = vpop.f32.mrf.mxu0
        %v1828 = vpop.f32.mrf.mxu0
        %v1829 = vpop.f32.mrf.mxu0
        %1830 = vdwg.mxu0
        %v1831 = vpack.c.bf16 %v1826, %v1826
        %v1833 = vlaneseq
        %v1834 = vshrl.u32 %v1833, 7
        %v1835 = vsub.s32 0, %v1834
        %v1836 = vrot.slane %v1255, %v1835
        %v1842 = vunpack.c.l.b16 %v1251
        %v1843 = vunpack.c.l.b16 %v1252
        %v1844 = vunpack.c.l.b16 %v1253
        %v1845 = vunpack.c.l.b16 %v1254
        %v1846 = vpack.c.b16 %v1843, %v1842
        %v1847 = vpack.c.b16 %v1845, %v1844
        %v1851 = vsel %vm1211, %v1831, 0
        %1853 = vmatprep.subr.bf16.mxu0 0
        %1854 = vmatpush1.bf16.msra.mxu0 0
        %1855 = vmatprep.subr.bf16.mxu0 0
        %1856 = vmatpush1.bf16.msra.mxu0 0
        %1857 = vmatprep.subr.bf16.mxu0 0
        %1858 = vmatpush1.bf16.msra.mxu0 0
        %1859 = vmatprep.subr.bf16.mxu0 0
        %1860 = vmatpush1.bf16.msra.mxu0 0
        %1861 = vmatprep.subr.bf16.mxu0 0
        %1862 = vmatpush1.bf16.msra.mxu0 0
        %1863 = vmatprep.subr.bf16.mxu0 0
        %1864 = vmatpush1.bf16.msra.mxu0 0
        %1865 = vmatprep.subr.bf16.mxu0 0
        %1866 = vmatpush1.bf16.msra.mxu0 %v1847
        %1867 = vmatprep.subr.bf16.mxu0 0
        %1868 = vmatpush1.bf16.msra.mxu0 %v1846
        %1869 = vmatprep.subr.bf16.mxu0 0
        %1870 = vmatpush2.bf16.msra.mxu0 0
        %1871 = vmatprep.subr.bf16.mxu0 0
        %1872 = vmatpush2.bf16.msra.mxu0 0
        %1873 = vmatprep.subr.bf16.mxu0 0
        %1874 = vmatpush2.bf16.msra.mxu0 0
        %1875 = vmatprep.subr.bf16.mxu0 0
        %1876 = vmatpush2.bf16.msra.mxu0 0
        %1877 = vmatprep.subr.bf16.mxu0 0
        %1878 = vmatpush2.bf16.msra.mxu0 0
        %1879 = vmatprep.subr.bf16.mxu0 0
        %1880 = vmatpush2.bf16.msra.mxu0 0
        %1881 = vmatprep.subr.bf16.mxu0 0
        %1882 = vmatpush2.bf16.msra.mxu0 0
        %1883 = vmatprep.subr.bf16.mxu0 0
        %1884 = vmatpush2.bf16.msra.mxu0 0
        %1885 = vmatprep.mubr.bf16.mxu0 0
        %1886 = vmatmul.mubr.bf16.gmra.mxu0 %v1851
        %v1887 = vpop.f32.mrf.mxu0
        %v1888 = vadd.f32 %v1836, %v1887
        %v1889 = vpop.f32.mrf.mxu0
        %v1890 = vpop.f32.mrf.mxu0
        %v1891 = vpop.f32.mrf.mxu0
        %1892 = vdwg.mxu0
        %v1893 = vadd.f32 %v1239, %v1888
        %v1894 = vld [vmem:[#allocation20] sm:$0x1]
        %v1895 = vld [vmem:[#allocation22] sm:$0x1]
        %v1896 = vsel %vm1211, %v1893, 0.0
        %1897 = vadd.xlane.f32.xlu0 %v1896
        %v1898 = vpop.xlane.xlu0 %1897
        %v1899 = vmul.f32 %v1898, %v1215
        %v1900 = vsub.f32 %v1893, %v1899
        %v1901 = vmul.f32 %v1900, %v1900
        %v1902 = vsel %vm1211, %v1901, 0.0
        %1903 = vadd.xlane.f32.xlu0 %v1902
        %v1904 = vpop.xlane.xlu0 %1903
        %v1905 = vmul.f32 %v1904, %v1215
        %v1906 = vadd.f32 %v1905, 1e-05
        %v1907 = vrsqrt.pop %v1906
        %v1908 = vmul.f32 %v1900, %v1907
        %v1910 = vlaneseq
        %v1911 = vshrl.u32 %v1910, 7
        %v1912 = vsub.s32 0, %v1911
        %v1913 = vrot.slane %v1894, %v1912
        %v1915 = vmul.f32 %v1908, %v1913
        %v1917 = vlaneseq
        %v1918 = vshrl.u32 %v1917, 7
        %v1919 = vsub.s32 0, %v1918
        %v1920 = vrot.slane %v1895, %v1919
        %v1922 = vadd.f32 %v1915, %v1920
        %s1923 = scalar_lea.vmem [#allocation11], 16
        %v1924 = vld [vmem:[%s1923] sm:$0xf]
        %v1925 = vld [vmem:[%s1923 + $0x4] sm:$0xf]
        %v1926 = vld [vmem:[%s1923 + $0x8] sm:$0xf]
        %v1927 = vld [vmem:[%s1923 + $0xc] sm:$0xf]
        %s1928 = scalar_lea.vmem [#allocation13], 1
        %v1929 = vld [vmem:[%s1928] sm:$0x1]
        %s1930 = scalar_lea.vmem [#allocation14], 16
        %v1931 = vld [vmem:[%s1930] sm:$0xf]
        %v1932 = vld [vmem:[%s1930 + $0x4] sm:$0xf]
        %v1933 = vld [vmem:[%s1930 + $0x8] sm:$0xf]
        %v1934 = vld [vmem:[%s1930 + $0xc] sm:$0xf]
        %s1935 = scalar_lea.vmem [#allocation16], 1
        %v1936 = vld [vmem:[%s1935] sm:$0x1]
        %s1937 = scalar_lea.vmem [#allocation17], 16
        %v1938 = vld [vmem:[%s1937] sm:$0xf]
        %v1939 = vld [vmem:[%s1937 + $0x4] sm:$0xf]
        %v1940 = vld [vmem:[%s1937 + $0x8] sm:$0xf]
        %v1941 = vld [vmem:[%s1937 + $0xc] sm:$0xf]
        %s1942 = scalar_lea.vmem [#allocation19], 1
        %v1943 = vld [vmem:[%s1942] sm:$0x1]
        %v1944 = vpack.c.bf16 %v1240, %v1240
        %v1946 = vlaneseq
        %v1947 = vshrl.u32 %v1946, 7
        %v1948 = vsub.s32 0, %v1947
        %v1949 = vrot.slane %v1929, %v1948
        %v1955 = vunpack.c.l.b16 %v1924
        %v1956 = vunpack.c.l.b16 %v1925
        %v1957 = vunpack.c.l.b16 %v1926
        %v1958 = vunpack.c.l.b16 %v1927
        %v1959 = vpack.c.b16 %v1956, %v1955
        %v1960 = vpack.c.b16 %v1958, %v1957
        %v1964 = vsel %vm1211, %v1944, 0
        %1966 = vmatprep.subr.bf16.mxu0 0
        %1967 = vmatpush1.bf16.msra.mxu0 0
        %1968 = vmatprep.subr.bf16.mxu0 0
        %1969 = vmatpush1.bf16.msra.mxu0 0
        %1970 = vmatprep.subr.bf16.mxu0 0
        %1971 = vmatpush1.bf16.msra.mxu0 0
        %1972 = vmatprep.subr.bf16.mxu0 0
        %1973 = vmatpush1.bf16.msra.mxu0 0
        %1974 = vmatprep.subr.bf16.mxu0 0
        %1975 = vmatpush1.bf16.msra.mxu0 0
        %1976 = vmatprep.subr.bf16.mxu0 0
        %1977 = vmatpush1.bf16.msra.mxu0 0
        %1978 = vmatprep.subr.bf16.mxu0 0
        %1979 = vmatpush1.bf16.msra.mxu0 %v1960
        %1980 = vmatprep.subr.bf16.mxu0 0
        %1981 = vmatpush1.bf16.msra.mxu0 %v1959
        %1982 = vmatprep.subr.bf16.mxu0 0
        %1983 = vmatpush2.bf16.msra.mxu0 0
        %1984 = vmatprep.subr.bf16.mxu0 0
        %1985 = vmatpush2.bf16.msra.mxu0 0
        %1986 = vmatprep.subr.bf16.mxu0 0
        %1987 = vmatpush2.bf16.msra.mxu0 0
        %1988 = vmatprep.subr.bf16.mxu0 0
        %1989 = vmatpush2.bf16.msra.mxu0 0
        %1990 = vmatprep.subr.bf16.mxu0 0
        %1991 = vmatpush2.bf16.msra.mxu0 0
        %1992 = vmatprep.subr.bf16.mxu0 0
        %1993 = vmatpush2.bf16.msra.mxu0 0
        %1994 = vmatprep.subr.bf16.mxu0 0
        %1995 = vmatpush2.bf16.msra.mxu0 0
        %1996 = vmatprep.subr.bf16.mxu0 0
        %1997 = vmatpush2.bf16.msra.mxu0 0
        %1998 = vmatprep.mubr.bf16.mxu0 0
        %1999 = vmatmul.mubr.bf16.gmra.mxu0 %v1964
        %v2000 = vpop.f32.mrf.mxu0
        %v2001 = vadd.f32 %v1949, %v2000
        %v2002 = vpop.f32.mrf.mxu0
        %v2003 = vpop.f32.mrf.mxu0
        %v2004 = vpop.f32.mrf.mxu0
        %2005 = vdwg.mxu0
        %v2006 = vpack.c.bf16 %v1922, %v1922
        %2007 = vrot.lane.b32.xlu0 %v1959, 96
        %v2008 = vpop.permute.xlu0 %2007
        %2009 = vrot.lane.b32.xlu0 %v1960, 96
        %v2010 = vpop.permute.xlu0 %2009
        %2013 = vrot.lane.b32.xlu0 %v1949, 96
        %v2014 = vpop.permute.xlu0 %2013
        %v2017 = vsel %vm1211, %v2006, 0
        %2019 = vmatprep.subr.bf16.mxu0 0
        %2020 = vmatpush1.bf16.msra.mxu0 0
        %2021 = vmatprep.subr.bf16.mxu0 0
        %2022 = vmatpush1.bf16.msra.mxu0 0
        %2023 = vmatprep.subr.bf16.mxu0 0
        %2024 = vmatpush1.bf16.msra.mxu0 0
        %2025 = vmatprep.subr.bf16.mxu0 0
        %2026 = vmatpush1.bf16.msra.mxu0 0
        %2027 = vmatprep.subr.bf16.mxu0 0
        %2028 = vmatpush1.bf16.msra.mxu0 0
        %2029 = vmatprep.subr.bf16.mxu0 0
        %2030 = vmatpush1.bf16.msra.mxu0 0
        %2031 = vmatprep.subr.bf16.mxu0 0
        %2032 = vmatpush1.bf16.msra.mxu0 %v2010
        %2033 = vmatprep.subr.bf16.mxu0 0
        %2034 = vmatpush1.bf16.msra.mxu0 %v2008
        %2035 = vmatprep.subr.bf16.mxu0 0
        %2036 = vmatpush2.bf16.msra.mxu0 0
        %2037 = vmatprep.subr.bf16.mxu0 0
        %2038 = vmatpush2.bf16.msra.mxu0 0
        %2039 = vmatprep.subr.bf16.mxu0 0
        %2040 = vmatpush2.bf16.msra.mxu0 0
        %2041 = vmatprep.subr.bf16.mxu0 0
        %2042 = vmatpush2.bf16.msra.mxu0 0
        %2043 = vmatprep.subr.bf16.mxu0 0
        %2044 = vmatpush2.bf16.msra.mxu0 0
        %2045 = vmatprep.subr.bf16.mxu0 0
        %2046 = vmatpush2.bf16.msra.mxu0 0
        %2047 = vmatprep.subr.bf16.mxu0 0
        %2048 = vmatpush2.bf16.msra.mxu0 0
        %2049 = vmatprep.subr.bf16.mxu0 0
        %2050 = vmatpush2.bf16.msra.mxu0 0
        %2051 = vmatprep.mubr.bf16.mxu0 0
        %2052 = vmatmul.mubr.bf16.gmra.mxu0 %v2017
        %v2053 = vpop.f32.mrf.mxu0
        %v2054 = vadd.f32 %v2014, %v2053
        %v2055 = vpop.f32.mrf.mxu0
        %v2056 = vpop.f32.mrf.mxu0
        %v2057 = vpop.f32.mrf.mxu0
        %2058 = vdwg.mxu0
        %v2060 = vlaneseq
        %v2061 = vshrl.u32 %v2060, 7
        %v2062 = vsub.s32 0, %v2061
        %v2063 = vrot.slane %v1936, %v2062
        %v2069 = vunpack.c.l.b16 %v1931
        %v2070 = vunpack.c.l.b16 %v1932
        %v2071 = vunpack.c.l.b16 %v1933
        %v2072 = vunpack.c.l.b16 %v1934
        %v2073 = vpack.c.b16 %v2070, %v2069
        %v2074 = vpack.c.b16 %v2072, %v2071
        %2077 = vmatprep.subr.bf16.mxu0 0
        %2078 = vmatpush1.bf16.msra.mxu0 0
        %2079 = vmatprep.subr.bf16.mxu0 0
        %2080 = vmatpush1.bf16.msra.mxu0 0
        %2081 = vmatprep.subr.bf16.mxu0 0
        %2082 = vmatpush1.bf16.msra.mxu0 0
        %2083 = vmatprep.subr.bf16.mxu0 0
        %2084 = vmatpush1.bf16.msra.mxu0 0
        %2085 = vmatprep.subr.bf16.mxu0 0
        %2086 = vmatpush1.bf16.msra.mxu0 0
        %2087 = vmatprep.subr.bf16.mxu0 0
        %2088 = vmatpush1.bf16.msra.mxu0 0
        %2089 = vmatprep.subr.bf16.mxu0 0
        %2090 = vmatpush1.bf16.msra.mxu0 %v2074
        %2091 = vmatprep.subr.bf16.mxu0 0
        %2092 = vmatpush1.bf16.msra.mxu0 %v2073
        %2093 = vmatprep.subr.bf16.mxu0 0
        %2094 = vmatpush2.bf16.msra.mxu0 0
        %2095 = vmatprep.subr.bf16.mxu0 0
        %2096 = vmatpush2.bf16.msra.mxu0 0
        %2097 = vmatprep.subr.bf16.mxu0 0
        %2098 = vmatpush2.bf16.msra.mxu0 0
        %2099 = vmatprep.subr.bf16.mxu0 0
        %2100 = vmatpush2.bf16.msra.mxu0 0
        %2101 = vmatprep.subr.bf16.mxu0 0
        %2102 = vmatpush2.bf16.msra.mxu0 0
        %2103 = vmatprep.subr.bf16.mxu0 0
        %2104 = vmatpush2.bf16.msra.mxu0 0
        %2105 = vmatprep.subr.bf16.mxu0 0
        %2106 = vmatpush2.bf16.msra.mxu0 0
        %2107 = vmatprep.subr.bf16.mxu0 0
        %2108 = vmatpush2.bf16.msra.mxu0 0
        %2109 = vmatprep.mubr.bf16.mxu0 0
        %2110 = vmatmul.mubr.bf16.gmra.mxu0 %v1341
        %v2111 = vpop.f32.mrf.mxu0
        %v2112 = vadd.f32 %v2063, %v2111
        %v2113 = vpop.f32.mrf.mxu0
        %v2114 = vpop.f32.mrf.mxu0
        %v2115 = vadd.f32 %v2063, %v2114
        %v2116 = vpop.f32.mrf.mxu0
        %2117 = vmatprep.mubr.bf16.mxu0 0
        %2118 = vmatmul.mubr.bf16.gmra.mxu0 %v1344
        %v2119 = vpop.f32.mrf.mxu0
        %v2120 = vadd.f32 %v2063, %v2119
        %v2121 = vpop.f32.mrf.mxu0
        %v2122 = vpop.f32.mrf.mxu0
        %v2123 = vadd.f32 %v2063, %v2122
        %v2124 = vpop.f32.mrf.mxu0
        %2125 = vmatprep.mubr.bf16.mxu0 0
        %2126 = vmatmul.mubr.bf16.gmra.mxu0 %v1347
        %v2127 = vpop.f32.mrf.mxu0
        %v2128 = vadd.f32 %v2063, %v2127
        %v2129 = vpop.f32.mrf.mxu0
        %v2130 = vpop.f32.mrf.mxu0
        %v2131 = vadd.f32 %v2063, %v2130
        %v2132 = vpop.f32.mrf.mxu0
        %2133 = vmatprep.mubr.bf16.mxu0 0
        %2134 = vmatmul.mubr.bf16.gmra.mxu0 %v1350
        %v2135 = vpop.f32.mrf.mxu0
        %v2136 = vadd.f32 %v2063, %v2135
        %v2137 = vpop.f32.mrf.mxu0
        %v2138 = vpop.f32.mrf.mxu0
        %v2139 = vadd.f32 %v2063, %v2138
        %v2140 = vpop.f32.mrf.mxu0
        %2141 = vdwg.mxu0
        %v2142 = vpack.c.bf16 %v2001, %v2001
        %v2143 = vpack.c.bf16 %v2054, %v2054
        %2152 = vrot.lane.b32.xlu0 %v2112, 96
        %v2153 = vpop.permute.xlu0 %2152
        %2154 = vrot.lane.b32.xlu0 %v2115, 96
        %v2155 = vpop.permute.xlu0 %2154
        %2156 = vrot.lane.b32.xlu0 %v2120, 96
        %v2157 = vpop.permute.xlu0 %2156
        %2158 = vrot.lane.b32.xlu0 %v2123, 96
        %v2159 = vpop.permute.xlu0 %2158
        %2160 = vrot.lane.b32.xlu0 %v2128, 96
        %v2161 = vpop.permute.xlu0 %2160
        %2162 = vrot.lane.b32.xlu0 %v2131, 96
        %v2163 = vpop.permute.xlu0 %2162
        %2164 = vrot.lane.b32.xlu0 %v2136, 96
        %v2165 = vpop.permute.xlu0 %2164
        %2166 = vrot.lane.b32.xlu0 %v2139, 96
        %v2167 = vpop.permute.xlu0 %2166
        %v2176 = vmul.f32 %v2001, %v2153
        %v2177 = vmul.f32 %v2001, %v2155
        %v2178 = vmul.f32 %v2001, %v2157
        %v2179 = vmul.f32 %v2001, %v2159
        %v2180 = vmul.f32 %v2001, %v2161
        %v2181 = vmul.f32 %v2001, %v2163
        %v2182 = vmul.f32 %v2001, %v2165
        %v2183 = vmul.f32 %v2001, %v2167
        %v2185 = vcombine.high %v2054, %v2054
        %v2187 = vunpack.c.l.s4 1966171168
        %v2188 = vunpack.c.0.s8 %v2187
        %v2189 = vlaneseq
        %v2190 = vshrl.u32 %v2189, 7
        %v2191 = vsub.s32 %v2188, %v2190
        %v2192 = vrot.slane %v2054, %v2191
        %v2194 = vunpack.c.l.s4 1966171168
        %v2195 = vunpack.c.0.s8 %v2194
        %v2196 = vlaneseq
        %v2197 = vshrl.u32 %v2196, 7
        %v2198 = vsub.s32 %v2195, %v2197
        %v2199 = vrot.slane %v2185, %v2198
        %v2200 = vcombine.high %v2192, %v2192
        %v2201 = vcombine.high %v2199, %v2199
        %v2203 = vunpack.c.l.s4 1966171168
        %v2204 = vunpack.c.0.s8 %v2203
        %v2205 = vlaneseq
        %v2206 = vshrl.u32 %v2205, 7
        %v2207 = vsub.s32 %v2204, %v2206
        %v2208 = vrot.slane %v2192, %v2207
        %v2210 = vunpack.c.l.s4 1966171168
        %v2211 = vunpack.c.0.s8 %v2210
        %v2212 = vlaneseq
        %v2213 = vshrl.u32 %v2212, 7
        %v2214 = vsub.s32 %v2211, %v2213
        %v2215 = vrot.slane %v2199, %v2214
        %v2217 = vunpack.c.l.s4 1966171168
        %v2218 = vunpack.c.0.s8 %v2217
        %v2219 = vlaneseq
        %v2220 = vshrl.u32 %v2219, 7
        %v2221 = vsub.s32 %v2218, %v2220
        %v2222 = vrot.slane %v2200, %v2221
        %v2224 = vunpack.c.l.s4 1966171168
        %v2225 = vunpack.c.0.s8 %v2224
        %v2226 = vlaneseq
        %v2227 = vshrl.u32 %v2226, 7
        %v2228 = vsub.s32 %v2225, %v2227
        %v2229 = vrot.slane %v2201, %v2228
        %v2230 = vcombine.high %v2208, %v2208
        %v2231 = vcombine.high %v2215, %v2215
        %v2232 = vcombine.high %v2222, %v2222
        %v2233 = vcombine.high %v2229, %v2229
        %v2234 = vlaneseq
        %v2235 = vshrl.u32 %v2234, 7
        %v2236 = vsub.s32 0, %v2235
        %v2237 = vrot.slane %v2208, %v2236
        %v2238 = vlaneseq
        %v2239 = vshrl.u32 %v2238, 7
        %v2240 = vsub.s32 0, %v2239
        %v2241 = vrot.slane %v2222, %v2240
        %v2242 = vlaneseq
        %v2243 = vshrl.u32 %v2242, 7
        %v2244 = vsub.s32 0, %v2243
        %v2245 = vrot.slane %v2230, %v2244
        %v2246 = vlaneseq
        %v2247 = vshrl.u32 %v2246, 7
        %v2248 = vsub.s32 0, %v2247
        %v2249 = vrot.slane %v2232, %v2248
        %v2250 = vlaneseq
        %v2251 = vshrl.u32 %v2250, 7
        %v2252 = vsub.s32 0, %v2251
        %v2253 = vrot.slane %v2215, %v2252
        %v2254 = vlaneseq
        %v2255 = vshrl.u32 %v2254, 7
        %v2256 = vsub.s32 0, %v2255
        %v2257 = vrot.slane %v2229, %v2256
        %v2258 = vlaneseq
        %v2259 = vshrl.u32 %v2258, 7
        %v2260 = vsub.s32 0, %v2259
        %v2261 = vrot.slane %v2231, %v2260
        %v2262 = vlaneseq
        %v2263 = vshrl.u32 %v2262, 7
        %v2264 = vsub.s32 0, %v2263
        %v2265 = vrot.slane %v2233, %v2264
        %v2274 = vadd.f32 %v2237, %v2153
        %v2275 = vadd.f32 %v2241, %v2155
        %v2276 = vadd.f32 %v2245, %v2157
        %v2277 = vadd.f32 %v2249, %v2159
        %v2278 = vadd.f32 %v2253, %v2161
        %v2279 = vadd.f32 %v2257, %v2163
        %v2280 = vadd.f32 %v2261, %v2165
        %v2281 = vadd.f32 %v2265, %v2167
        %v2282 = vmul.f32 %v2112, %v2274
        %v2283 = vmul.f32 %v2115, %v2275
        %v2284 = vmul.f32 %v2120, %v2276
        %v2285 = vmul.f32 %v2123, %v2277
        %v2286 = vmul.f32 %v2128, %v2278
        %v2287 = vmul.f32 %v2131, %v2279
        %v2288 = vmul.f32 %v2136, %v2280
        %v2289 = vmul.f32 %v2139, %v2281
        %v2290 = vadd.f32 %v2176, %v2282
        %v2291 = vadd.f32 %v2177, %v2283
        %v2292 = vadd.f32 %v2178, %v2284
        %v2293 = vadd.f32 %v2179, %v2285
        %v2294 = vadd.f32 %v2180, %v2286
        %v2295 = vadd.f32 %v2181, %v2287
        %v2296 = vadd.f32 %v2182, %v2288
        %v2297 = vadd.f32 %v2183, %v2289
        %v2298 = vsel %vm1211, %v2290, 0.0
        %2299 = vadd.xlane.f32.xlu0 %v2298
        %v2300 = vpop.xlane.xlu0 %2299
        %v2301 = vsel %vm1211, %v2291, 0.0
        %2302 = vadd.xlane.f32.xlu0 %v2301
        %v2303 = vpop.xlane.xlu0 %2302
        %v2304 = vsel %vm1211, %v2292, 0.0
        %2305 = vadd.xlane.f32.xlu0 %v2304
        %v2306 = vpop.xlane.xlu0 %2305
        %v2307 = vsel %vm1211, %v2293, 0.0
        %2308 = vadd.xlane.f32.xlu0 %v2307
        %v2309 = vpop.xlane.xlu0 %2308
        %v2310 = vsel %vm1211, %v2294, 0.0
        %2311 = vadd.xlane.f32.xlu0 %v2310
        %v2312 = vpop.xlane.xlu0 %2311
        %v2313 = vsel %vm1211, %v2295, 0.0
        %2314 = vadd.xlane.f32.xlu0 %v2313
        %v2315 = vpop.xlane.xlu0 %2314
        %v2316 = vsel %vm1211, %v2296, 0.0
        %2317 = vadd.xlane.f32.xlu0 %v2316
        %v2318 = vpop.xlane.xlu0 %2317
        %v2319 = vsel %vm1211, %v2297, 0.0
        %2320 = vadd.xlane.f32.xlu0 %v2319
        %v2321 = vpop.xlane.xlu0 %2320
        %v2330 = vlaneseq
        %v2331 = vshrl.u32 %v2330, 7
        %v2332 = vsub.s32 %v1121, %v2331
        %v2333 = vrot.slane %v2300, %v2332
        %v2334 = vlaneseq
        %v2335 = vshrl.u32 %v2334, 7
        %v2336 = vsub.s32 %v1121, %v2335
        %v2337 = vrot.slane %v2303, %v2336
        %v2338 = vlaneseq
        %v2339 = vshrl.u32 %v2338, 7
        %v2340 = vsub.s32 %v1121, %v2339
        %v2341 = vrot.slane %v2306, %v2340
        %v2342 = vlaneseq
        %v2343 = vshrl.u32 %v2342, 7
        %v2344 = vsub.s32 %v1121, %v2343
        %v2345 = vrot.slane %v2309, %v2344
        %v2346 = vlaneseq
        %v2347 = vshrl.u32 %v2346, 7
        %v2348 = vsub.s32 %v1121, %v2347
        %v2349 = vrot.slane %v2312, %v2348
        %v2350 = vlaneseq
        %v2351 = vshrl.u32 %v2350, 7
        %v2352 = vsub.s32 %v1121, %v2351
        %v2353 = vrot.slane %v2315, %v2352
        %v2354 = vlaneseq
        %v2355 = vshrl.u32 %v2354, 7
        %v2356 = vsub.s32 %v1121, %v2355
        %v2357 = vrot.slane %v2318, %v2356
        %v2358 = vlaneseq
        %v2359 = vshrl.u32 %v2358, 7
        %v2360 = vsub.s32 %v1121, %v2359
        %v2361 = vrot.slane %v2321, %v2360
        %v2362 = vsel %vm1668, %v2337, %v2333
        %v2363 = vsel %vm1670, %v2341, %v2362
        %v2364 = vsel %vm1672, %v2345, %v2363
        %v2365 = vsel %vm1674, %v2349, %v2364
        %v2366 = vsel %vm1676, %v2353, %v2365
        %v2367 = vsel %vm1678, %v2357, %v2366
        %v2368 = vsel %vm1680, %v2361, %v2367
        %2370 = vxpose.xlu0.b32.start [1/16] %v2368, 128
        %2371 = vxpose.xlu0.b32.cont [2/16] 0.0, 128
        %2372 = vxpose.xlu0.b32.cont [3/16] 0.0, 128
        %2373 = vxpose.xlu0.b32.cont [4/16] 0.0, 128
        %2374 = vxpose.xlu0.b32.cont [5/16] 0.0, 128
        %2375 = vxpose.xlu0.b32.cont [6/16] 0.0, 128
        %2376 = vxpose.xlu0.b32.cont [7/16] 0.0, 128
        %2377 = vxpose.xlu0.b32.cont [8/16] 0.0, 128
        %2378 = vxpose.xlu0.b32.cont [9/16] 0.0, 128
        %2379 = vxpose.xlu0.b32.cont [10/16] 0.0, 128
        %2380 = vxpose.xlu0.b32.cont [11/16] 0.0, 128
        %2381 = vxpose.xlu0.b32.cont [12/16] 0.0, 128
        %2382 = vxpose.xlu0.b32.cont [13/16] 0.0, 128
        %2383 = vxpose.xlu0.b32.cont [14/16] 0.0, 128
        %2384 = vxpose.xlu0.b32.cont [15/16] 0.0, 128
        %2385 = vxpose.xlu0.b32.end [16/16] 0.0, 128
        %v2386 = vpop.trf.xlu0
        %v2387 = vpop.trf.xlu0
        %v2388 = vpop.trf.xlu0
        %v2389 = vpop.trf.xlu0
        %v2390 = vpop.trf.xlu0
        %v2391 = vpop.trf.xlu0
        %v2392 = vpop.trf.xlu0
        %v2393 = vpop.trf.xlu0
        %v2394 = vpop.trf.xlu0
        %v2395 = vpop.trf.xlu0
        %v2396 = vpop.trf.xlu0
        %v2397 = vpop.trf.xlu0
        %v2398 = vpop.trf.xlu0
        %v2399 = vpop.trf.xlu0
        %v2400 = vpop.trf.xlu0
        %v2401 = vpop.trf.xlu0
        %v2403 = vsel %vm1211, %v2142, 0
        %v2406 = vsel %vm1211, %v2143, 0
        %2408 = vmatprep.subr.bf16.mxu0 0
        %2409 = vmatpush1.bf16.xpose.msra.mxu0 0
        %2410 = vmatprep.subr.bf16.mxu0 0
        %2411 = vmatpush1.bf16.xpose.msra.mxu0 0
        %2412 = vmatprep.subr.bf16.mxu0 0
        %2413 = vmatpush1.bf16.xpose.msra.mxu0 0
        %2414 = vmatprep.subr.bf16.mxu0 0
        %2415 = vmatpush1.bf16.xpose.msra.mxu0 0
        %2416 = vmatprep.subr.bf16.mxu0 0
        %2417 = vmatpush1.bf16.xpose.msra.mxu0 0
        %2418 = vmatprep.subr.bf16.mxu0 0
        %2419 = vmatpush1.bf16.xpose.msra.mxu0 0
        %2420 = vmatprep.subr.bf16.mxu0 0
        %2421 = vmatpush1.bf16.xpose.msra.mxu0 0
        %2422 = vmatprep.subr.bf16.mxu0 0
        %2423 = vmatpush1.bf16.xpose.msra.mxu0 %v2406
        %2424 = vmatprep.subr.bf16.mxu0 0
        %2425 = vmatpush2.bf16.xpose.msra.mxu0 0
        %2426 = vmatprep.subr.bf16.mxu0 0
        %2427 = vmatpush2.bf16.xpose.msra.mxu0 0
        %2428 = vmatprep.subr.bf16.mxu0 0
        %2429 = vmatpush2.bf16.xpose.msra.mxu0 0
        %2430 = vmatprep.subr.bf16.mxu0 0
        %2431 = vmatpush2.bf16.xpose.msra.mxu0 0
        %2432 = vmatprep.subr.bf16.mxu0 0
        %2433 = vmatpush2.bf16.xpose.msra.mxu0 0
        %2434 = vmatprep.subr.bf16.mxu0 0
        %2435 = vmatpush2.bf16.xpose.msra.mxu0 0
        %2436 = vmatprep.subr.bf16.mxu0 0
        %2437 = vmatpush2.bf16.xpose.msra.mxu0 0
        %2438 = vmatprep.subr.bf16.mxu0 0
        %2439 = vmatpush2.bf16.xpose.msra.mxu0 0
        %2440 = vmatprep.mubr.bf16.mxu0 0
        %2441 = vmatmul.mubr.bf16.gmra.mxu0 %v2403
        %v2442 = vpop.f32.mrf.mxu0
        %v2443 = vadd.f32 %v2386, %v2442
        %v2444 = vpop.f32.mrf.mxu0
        %v2445 = vpop.f32.mrf.mxu0
        %v2446 = vpop.f32.mrf.mxu0
        %2447 = vdwg.mxu0
        %v2448 = vmul.f32 %v2443, 0.03125
        %v2449 = vsel %vm1122, -inf, %v2448
        %v2450 = vsel %vm1766, -inf, %v2449
        %v2451 = vsel %vm1768, %v2450, -inf
        %2452 = vmax.xlane.f32.xlu0 %v2451
        %v2453 = vpop.xlane.xlu0 %2452
        %v2454 = vsub.f32 %v2450, %v2453
        %v2455 = vmul.f32 %v2454, 1.442695
        %v2456 = vpow.pop %v2455
        %v2457 = vsel %vm1768, %v2456, 0.0
        %2458 = vadd.xlane.f32.xlu0 %v2457
        %v2459 = vpop.xlane.xlu0 %2458
        %v2460 = vrcp.pop %v2459
        %v2461 = vmul.f32 %v2456, %v2460
        %v2462 = vmul.f32 %v2461, %v1127
        %v2463 = vpack.c.bf16 %v2462, %v2462
        %2465 = vrot.lane.b32.xlu0 %v2143, 96
        %v2466 = vpop.permute.xlu0 %2465
        %v2468 = vsel %vm1768, %v2463, 0
        %v2471 = vsel %vm1787, %v2466, 0
        %2473 = vmatprep.subr.bf16.mxu0 0
        %2474 = vmatpush1.bf16.msra.mxu0 0
        %2475 = vmatprep.subr.bf16.mxu0 0
        %2476 = vmatpush1.bf16.msra.mxu0 0
        %2477 = vmatprep.subr.bf16.mxu0 0
        %2478 = vmatpush1.bf16.msra.mxu0 0
        %2479 = vmatprep.subr.bf16.mxu0 0
        %2480 = vmatpush1.bf16.msra.mxu0 0
        %2481 = vmatprep.subr.bf16.mxu0 0
        %2482 = vmatpush1.bf16.msra.mxu0 0
        %2483 = vmatprep.subr.bf16.mxu0 0
        %2484 = vmatpush1.bf16.msra.mxu0 0
        %2485 = vmatprep.subr.bf16.mxu0 0
        %2486 = vmatpush1.bf16.msra.mxu0 0
        %2487 = vmatprep.subr.bf16.mxu0 0
        %2488 = vmatpush1.bf16.msra.mxu0 %v2471
        %2489 = vmatprep.subr.bf16.mxu0 0
        %2490 = vmatpush2.bf16.msra.mxu0 0
        %2491 = vmatprep.subr.bf16.mxu0 0
        %2492 = vmatpush2.bf16.msra.mxu0 0
        %2493 = vmatprep.subr.bf16.mxu0 0
        %2494 = vmatpush2.bf16.msra.mxu0 0
        %2495 = vmatprep.subr.bf16.mxu0 0
        %2496 = vmatpush2.bf16.msra.mxu0 0
        %2497 = vmatprep.subr.bf16.mxu0 0
        %2498 = vmatpush2.bf16.msra.mxu0 0
        %2499 = vmatprep.subr.bf16.mxu0 0
        %2500 = vmatpush2.bf16.msra.mxu0 0
        %2501 = vmatprep.subr.bf16.mxu0 0
        %2502 = vmatpush2.bf16.msra.mxu0 0
        %2503 = vmatprep.subr.bf16.mxu0 0
        %2504 = vmatpush2.bf16.msra.mxu0 0
        %2505 = vmatprep.mubr.bf16.mxu0 0
        %2506 = vmatmul.mubr.bf16.gmra.mxu0 %v2468
        %v2507 = vpop.f32.mrf.mxu0
        %v2508 = vadd.f32 0.0, %v2507
        %v2509 = vpop.f32.mrf.mxu0
        %v2510 = vpop.f32.mrf.mxu0
        %v2511 = vpop.f32.mrf.mxu0
        %2512 = vdwg.mxu0
        %v2513 = vpack.c.bf16 %v2508, %v2508
        %v2515 = vlaneseq
        %v2516 = vshrl.u32 %v2515, 7
        %v2517 = vsub.s32 0, %v2516
        %v2518 = vrot.slane %v1943, %v2517
        %v2524 = vunpack.c.l.b16 %v1938
        %v2525 = vunpack.c.l.b16 %v1939
        %v2526 = vunpack.c.l.b16 %v1940
        %v2527 = vunpack.c.l.b16 %v1941
        %v2528 = vpack.c.b16 %v2525, %v2524
        %v2529 = vpack.c.b16 %v2527, %v2526
        %v2533 = vsel %vm1211, %v2513, 0
        %2535 = vmatprep.subr.bf16.mxu0 0
        %2536 = vmatpush1.bf16.msra.mxu0 0
        %2537 = vmatprep.subr.bf16.mxu0 0
        %2538 = vmatpush1.bf16.msra.mxu0 0
        %2539 = vmatprep.subr.bf16.mxu0 0
        %2540 = vmatpush1.bf16.msra.mxu0 0
        %2541 = vmatprep.subr.bf16.mxu0 0
        %2542 = vmatpush1.bf16.msra.mxu0 0
        %2543 = vmatprep.subr.bf16.mxu0 0
        %2544 = vmatpush1.bf16.msra.mxu0 0
        %2545 = vmatprep.subr.bf16.mxu0 0
        %2546 = vmatpush1.bf16.msra.mxu0 0
        %2547 = vmatprep.subr.bf16.mxu0 0
        %2548 = vmatpush1.bf16.msra.mxu0 %v2529
        %2549 = vmatprep.subr.bf16.mxu0 0
        %2550 = vmatpush1.bf16.msra.mxu0 %v2528
        %2551 = vmatprep.subr.bf16.mxu0 0
        %2552 = vmatpush2.bf16.msra.mxu0 0
        %2553 = vmatprep.subr.bf16.mxu0 0
        %2554 = vmatpush2.bf16.msra.mxu0 0
        %2555 = vmatprep.subr.bf16.mxu0 0
        %2556 = vmatpush2.bf16.msra.mxu0 0
        %2557 = vmatprep.subr.bf16.mxu0 0
        %2558 = vmatpush2.bf16.msra.mxu0 0
        %2559 = vmatprep.subr.bf16.mxu0 0
        %2560 = vmatpush2.bf16.msra.mxu0 0
        %2561 = vmatprep.subr.bf16.mxu0 0
        %2562 = vmatpush2.bf16.msra.mxu0 0
        %2563 = vmatprep.subr.bf16.mxu0 0
        %2564 = vmatpush2.bf16.msra.mxu0 0
        %2565 = vmatprep.subr.bf16.mxu0 0
        %2566 = vmatpush2.bf16.msra.mxu0 0
        %2567 = vmatprep.mubr.bf16.mxu0 0
        %2568 = vmatmul.mubr.bf16.gmra.mxu0 %v2533
        %v2569 = vpop.f32.mrf.mxu0
        %v2570 = vadd.f32 %v2518, %v2569
        %v2571 = vpop.f32.mrf.mxu0
        %v2572 = vpop.f32.mrf.mxu0
        %v2573 = vpop.f32.mrf.mxu0
        %2574 = vdwg.mxu0
        %v2575 = vadd.f32 %v1240, %v2570
        %s2576 = scalar_lea.vmem [#allocation20], 1
        %v2577 = vld [vmem:[%s2576] sm:$0x1]
        %s2578 = scalar_lea.vmem [#allocation22], 1
        %v2579 = vld [vmem:[%s2578] sm:$0x1]
        %v2580 = vsel %vm1211, %v2575, 0.0
        %2581 = vadd.xlane.f32.xlu0 %v2580
        %v2582 = vpop.xlane.xlu0 %2581
        %v2583 = vmul.f32 %v2582, %v1215
        %v2584 = vsub.f32 %v2575, %v2583
        %v2585 = vmul.f32 %v2584, %v2584
        %v2586 = vsel %vm1211, %v2585, 0.0
        %2587 = vadd.xlane.f32.xlu0 %v2586
        %v2588 = vpop.xlane.xlu0 %2587
        %v2589 = vmul.f32 %v2588, %v1215
        %v2590 = vadd.f32 %v2589, 1e-05
        %v2591 = vrsqrt.pop %v2590
        %v2592 = vmul.f32 %v2584, %v2591
        %v2594 = vlaneseq
        %v2595 = vshrl.u32 %v2594, 7
        %v2596 = vsub.s32 0, %v2595
        %v2597 = vrot.slane %v2577, %v2596
        %v2599 = vmul.f32 %v2592, %v2597
        %v2601 = vlaneseq
        %v2602 = vshrl.u32 %v2601, 7
        %v2603 = vsub.s32 0, %v2602
        %v2604 = vrot.slane %v2579, %v2603
        %v2606 = vadd.f32 %v2599, %v2604
        %v2607 = vld [vmem:[%s15] sm:$0xf]
        %v2608 = vld [vmem:[%s15 + $0x4] sm:$0xf]
        %v2609 = vld [vmem:[%s15 + $0x8] sm:$0xf]
        %v2610 = vld [vmem:[%s15 + $0xc] sm:$0xf]
        %v2611 = vpack.c.bf16 %v2606, %v2606
        %v2612 = vld [vmem:[#allocation23] sm:$0x1]
        %v2614 = vlaneseq
        %v2615 = vshrl.u32 %v2614, 7
        %v2616 = vsub.s32 0, %v2615
        %v2617 = vrot.slane %v2612, %v2616
        %v2623 = vunpack.c.l.b16 %v2607
        %v2624 = vunpack.c.l.b16 %v2608
        %v2625 = vunpack.c.l.b16 %v2609
        %v2626 = vunpack.c.l.b16 %v2610
        %v2627 = vpack.c.b16 %v2624, %v2623
        %v2628 = vpack.c.b16 %v2626, %v2625
        %v2632 = vsel %vm1211, %v2611, 0
        %2634 = vmatprep.subr.bf16.mxu0 0
        %2635 = vmatpush1.bf16.msra.mxu0 0
        %2636 = vmatprep.subr.bf16.mxu0 0
        %2637 = vmatpush1.bf16.msra.mxu0 0
        %2638 = vmatprep.subr.bf16.mxu0 0
        %2639 = vmatpush1.bf16.msra.mxu0 0
        %2640 = vmatprep.subr.bf16.mxu0 0
        %2641 = vmatpush1.bf16.msra.mxu0 0
        %2642 = vmatprep.subr.bf16.mxu0 0
        %2643 = vmatpush1.bf16.msra.mxu0 0
        %2644 = vmatprep.subr.bf16.mxu0 0
        %2645 = vmatpush1.bf16.msra.mxu0 0
        %2646 = vmatprep.subr.bf16.mxu0 0
        %2647 = vmatpush1.bf16.msra.mxu0 %v2628
        %2648 = vmatprep.subr.bf16.mxu0 0
        %2649 = vmatpush1.bf16.msra.mxu0 %v2627
        %2650 = vmatprep.subr.bf16.mxu0 0
        %2651 = vmatpush2.bf16.msra.mxu0 0
        %2652 = vmatprep.subr.bf16.mxu0 0
        %2653 = vmatpush2.bf16.msra.mxu0 0
        %2654 = vmatprep.subr.bf16.mxu0 0
        %2655 = vmatpush2.bf16.msra.mxu0 0
        %2656 = vmatprep.subr.bf16.mxu0 0
        %2657 = vmatpush2.bf16.msra.mxu0 0
        %2658 = vmatprep.subr.bf16.mxu0 0
        %2659 = vmatpush2.bf16.msra.mxu0 0
        %2660 = vmatprep.subr.bf16.mxu0 0
        %2661 = vmatpush2.bf16.msra.mxu0 0
        %2662 = vmatprep.subr.bf16.mxu0 0
        %2663 = vmatpush2.bf16.msra.mxu0 0
        %2664 = vmatprep.subr.bf16.mxu0 0
        %2665 = vmatpush2.bf16.msra.mxu0 0
        %2666 = vmatprep.mubr.bf16.mxu0 0
        %2667 = vmatmul.mubr.bf16.gmra.mxu0 %v2632
        %v2668 = vpop.f32.mrf.mxu0
        %v2669 = vadd.f32 %v2617, %v2668
        %v2670 = vpop.f32.mrf.mxu0
        %v2671 = vpop.f32.mrf.mxu0
        %v2672 = vpop.f32.mrf.mxu0
        %2673 = vdwg.mxu0
        %v2674 = vmul.f32 %v2669, 0.5
        %v2675 = vmul.f32 %v2669, 0.044715
        %v2676 = vmul.f32 %v2675, %v2669
        %v2677 = vmul.f32 %v2676, %v2669
        %v2678 = vadd.f32 %v2669, %v2677
        %v2679 = vmul.f32 %v2678, 0.7978846
        %v2680 = vtanh.pop %v2679
        %v2681 = vadd.f32 %v2680, 1.0
        %v2682 = vmul.f32 %v2674, %v2681
        %v2683 = vld [vmem:[#allocation25] sm:$0xf]
        %v2684 = vld [vmem:[#allocation25 + $0x4] sm:$0xf]
        %v2685 = vld [vmem:[#allocation25 + $0x8] sm:$0xf]
        %v2686 = vld [vmem:[#allocation25 + $0xc] sm:$0xf]
        %v2687 = vpack.c.bf16 %v2682, %v2682
        %v2688 = vld [vmem:[#allocation26] sm:$0x1]
        %v2690 = vlaneseq
        %v2691 = vshrl.u32 %v2690, 7
        %v2692 = vsub.s32 0, %v2691
        %v2693 = vrot.slane %v2688, %v2692
        %v2699 = vunpack.c.l.b16 %v2683
        %v2700 = vunpack.c.l.b16 %v2684
        %v2701 = vunpack.c.l.b16 %v2685
        %v2702 = vunpack.c.l.b16 %v2686
        %v2703 = vpack.c.b16 %v2700, %v2699
        %v2704 = vpack.c.b16 %v2702, %v2701
        %v2708 = vsel %vm1211, %v2687, 0
        %2710 = vmatprep.subr.bf16.mxu0 0
        %2711 = vmatpush1.bf16.msra.mxu0 0
        %2712 = vmatprep.subr.bf16.mxu0 0
        %2713 = vmatpush1.bf16.msra.mxu0 0
        %2714 = vmatprep.subr.bf16.mxu0 0
        %2715 = vmatpush1.bf16.msra.mxu0 0
        %2716 = vmatprep.subr.bf16.mxu0 0
        %2717 = vmatpush1.bf16.msra.mxu0 0
        %2718 = vmatprep.subr.bf16.mxu0 0
        %2719 = vmatpush1.bf16.msra.mxu0 0
        %2720 = vmatprep.subr.bf16.mxu0 0
        %2721 = vmatpush1.bf16.msra.mxu0 0
        %2722 = vmatprep.subr.bf16.mxu0 0
        %2723 = vmatpush1.bf16.msra.mxu0 %v2704
        %2724 = vmatprep.subr.bf16.mxu0 0
        %2725 = vmatpush1.bf16.msra.mxu0 %v2703
        %2726 = vmatprep.subr.bf16.mxu0 0
        %2727 = vmatpush2.bf16.msra.mxu0 0
        %2728 = vmatprep.subr.bf16.mxu0 0
        %2729 = vmatpush2.bf16.msra.mxu0 0
        %2730 = vmatprep.subr.bf16.mxu0 0
        %2731 = vmatpush2.bf16.msra.mxu0 0
        %2732 = vmatprep.subr.bf16.mxu0 0
        %2733 = vmatpush2.bf16.msra.mxu0 0
        %2734 = vmatprep.subr.bf16.mxu0 0
        %2735 = vmatpush2.bf16.msra.mxu0 0
        %2736 = vmatprep.subr.bf16.mxu0 0
        %2737 = vmatpush2.bf16.msra.mxu0 0
        %2738 = vmatprep.subr.bf16.mxu0 0
        %2739 = vmatpush2.bf16.msra.mxu0 0
        %2740 = vmatprep.subr.bf16.mxu0 0
        %2741 = vmatpush2.bf16.msra.mxu0 0
        %2742 = vmatprep.mubr.bf16.mxu0 0
        %2743 = vmatmul.mubr.bf16.gmra.mxu0 %v2708
        %v2744 = vpop.f32.mrf.mxu0
        %v2745 = vadd.f32 %v2693, %v2744
        %v2746 = vpop.f32.mrf.mxu0
        %v2747 = vpop.f32.mrf.mxu0
        %v2748 = vpop.f32.mrf.mxu0
        %2749 = vdwg.mxu0
        %v2750 = vadd.f32 %v2606, %v2745
        %s2751 = scalar_lea.vmem [#allocation20], 2
        %v2752 = vld [vmem:[%s2751] sm:$0x1]
        %s2753 = scalar_lea.vmem [#allocation22], 2
        %v2754 = vld [vmem:[%s2753] sm:$0x1]
        %v2755 = vsel %vm1211, %v2750, 0.0
        %2756 = vadd.xlane.f32.xlu0 %v2755
        %v2757 = vpop.xlane.xlu0 %2756
        %v2758 = vmul.f32 %v2757, %v1215
        %v2759 = vsub.f32 %v2750, %v2758
        %v2760 = vmul.f32 %v2759, %v2759
        %v2761 = vsel %vm1211, %v2760, 0.0
        %2762 = vadd.xlane.f32.xlu0 %v2761
        %v2763 = vpop.xlane.xlu0 %2762
        %v2764 = vmul.f32 %v2763, %v1215
        %v2765 = vadd.f32 %v2764, 1e-05
        %v2766 = vrsqrt.pop %v2765
        %v2767 = vmul.f32 %v2759, %v2766
        %v2769 = vlaneseq
        %v2770 = vshrl.u32 %v2769, 7
        %v2771 = vsub.s32 0, %v2770
        %v2772 = vrot.slane %v2752, %v2771
        %v2774 = vmul.f32 %v2767, %v2772
        %v2776 = vlaneseq
        %v2777 = vshrl.u32 %v2776, 7
        %v2778 = vsub.s32 0, %v2777
        %v2779 = vrot.slane %v2754, %v2778
        %v2781 = vadd.f32 %v2774, %v2779
        %s2782 = scalar_lea.vmem [#allocation11], 32
        %v2783 = vld [vmem:[%s2782] sm:$0xf]
        %v2784 = vld [vmem:[%s2782 + $0x4] sm:$0xf]
        %v2785 = vld [vmem:[%s2782 + $0x8] sm:$0xf]
        %v2786 = vld [vmem:[%s2782 + $0xc] sm:$0xf]
        %s2787 = scalar_lea.vmem [#allocation13], 2
        %v2788 = vld [vmem:[%s2787] sm:$0x1]
        %s2789 = scalar_lea.vmem [#allocation14], 32
        %v2790 = vld [vmem:[%s2789] sm:$0xf]
        %v2791 = vld [vmem:[%s2789 + $0x4] sm:$0xf]
        %v2792 = vld [vmem:[%s2789 + $0x8] sm:$0xf]
        %v2793 = vld [vmem:[%s2789 + $0xc] sm:$0xf]
        %s2794 = scalar_lea.vmem [#allocation16], 2
        %v2795 = vld [vmem:[%s2794] sm:$0x1]
        %s2796 = scalar_lea.vmem [#allocation17], 32
        %v2797 = vld [vmem:[%s2796] sm:$0xf]
        %v2798 = vld [vmem:[%s2796 + $0x4] sm:$0xf]
        %v2799 = vld [vmem:[%s2796 + $0x8] sm:$0xf]
        %v2800 = vld [vmem:[%s2796 + $0xc] sm:$0xf]
        %s2801 = scalar_lea.vmem [#allocation19], 2
        %v2802 = vld [vmem:[%s2801] sm:$0x1]
        %v2803 = vpack.c.bf16 %v2781, %v2781
        %v2805 = vlaneseq
        %v2806 = vshrl.u32 %v2805, 7
        %v2807 = vsub.s32 0, %v2806
        %v2808 = vrot.slane %v2788, %v2807
        %v2814 = vunpack.c.l.b16 %v2783
        %v2815 = vunpack.c.l.b16 %v2784
        %v2816 = vunpack.c.l.b16 %v2785
        %v2817 = vunpack.c.l.b16 %v2786
        %v2818 = vpack.c.b16 %v2815, %v2814
        %v2819 = vpack.c.b16 %v2817, %v2816
        %v2823 = vsel %vm1211, %v2803, 0
        %2825 = vmatprep.subr.bf16.mxu0 0
        %2826 = vmatpush1.bf16.msra.mxu0 0
        %2827 = vmatprep.subr.bf16.mxu0 0
        %2828 = vmatpush1.bf16.msra.mxu0 0
        %2829 = vmatprep.subr.bf16.mxu0 0
        %2830 = vmatpush1.bf16.msra.mxu0 0
        %2831 = vmatprep.subr.bf16.mxu0 0
        %2832 = vmatpush1.bf16.msra.mxu0 0
        %2833 = vmatprep.subr.bf16.mxu0 0
        %2834 = vmatpush1.bf16.msra.mxu0 0
        %2835 = vmatprep.subr.bf16.mxu0 0
        %2836 = vmatpush1.bf16.msra.mxu0 0
        %2837 = vmatprep.subr.bf16.mxu0 0
        %2838 = vmatpush1.bf16.msra.mxu0 %v2819
        %2839 = vmatprep.subr.bf16.mxu0 0
        %2840 = vmatpush1.bf16.msra.mxu0 %v2818
        %2841 = vmatprep.subr.bf16.mxu0 0
        %2842 = vmatpush2.bf16.msra.mxu0 0
        %2843 = vmatprep.subr.bf16.mxu0 0
        %2844 = vmatpush2.bf16.msra.mxu0 0
        %2845 = vmatprep.subr.bf16.mxu0 0
        %2846 = vmatpush2.bf16.msra.mxu0 0
        %2847 = vmatprep.subr.bf16.mxu0 0
        %2848 = vmatpush2.bf16.msra.mxu0 0
        %2849 = vmatprep.subr.bf16.mxu0 0
        %2850 = vmatpush2.bf16.msra.mxu0 0
        %2851 = vmatprep.subr.bf16.mxu0 0
        %2852 = vmatpush2.bf16.msra.mxu0 0
        %2853 = vmatprep.subr.bf16.mxu0 0
        %2854 = vmatpush2.bf16.msra.mxu0 0
        %2855 = vmatprep.subr.bf16.mxu0 0
        %2856 = vmatpush2.bf16.msra.mxu0 0
        %2857 = vmatprep.mubr.bf16.mxu0 0
        %2858 = vmatmul.mubr.bf16.gmra.mxu0 %v2823
        %v2859 = vpop.f32.mrf.mxu0
        %v2860 = vadd.f32 %v2808, %v2859
        %v2861 = vpop.f32.mrf.mxu0
        %v2862 = vpop.f32.mrf.mxu0
        %v2863 = vpop.f32.mrf.mxu0
        %2864 = vdwg.mxu0
        %v2866 = vlaneseq
        %v2867 = vshrl.u32 %v2866, 7
        %v2868 = vsub.s32 0, %v2867
        %v2869 = vrot.slane %v2795, %v2868
        %v2875 = vunpack.c.l.b16 %v2790
        %v2876 = vunpack.c.l.b16 %v2791
        %v2877 = vunpack.c.l.b16 %v2792
        %v2878 = vunpack.c.l.b16 %v2793
        %v2879 = vpack.c.b16 %v2876, %v2875
        %v2880 = vpack.c.b16 %v2878, %v2877
        %2883 = vmatprep.subr.bf16.mxu0 0
        %2884 = vmatpush1.bf16.msra.mxu0 0
        %2885 = vmatprep.subr.bf16.mxu0 0
        %2886 = vmatpush1.bf16.msra.mxu0 0
        %2887 = vmatprep.subr.bf16.mxu0 0
        %2888 = vmatpush1.bf16.msra.mxu0 0
        %2889 = vmatprep.subr.bf16.mxu0 0
        %2890 = vmatpush1.bf16.msra.mxu0 0
        %2891 = vmatprep.subr.bf16.mxu0 0
        %2892 = vmatpush1.bf16.msra.mxu0 0
        %2893 = vmatprep.subr.bf16.mxu0 0
        %2894 = vmatpush1.bf16.msra.mxu0 0
        %2895 = vmatprep.subr.bf16.mxu0 0
        %2896 = vmatpush1.bf16.msra.mxu0 %v2880
        %2897 = vmatprep.subr.bf16.mxu0 0
        %2898 = vmatpush1.bf16.msra.mxu0 %v2879
        %2899 = vmatprep.subr.bf16.mxu0 0
        %2900 = vmatpush2.bf16.msra.mxu0 0
        %2901 = vmatprep.subr.bf16.mxu0 0
        %2902 = vmatpush2.bf16.msra.mxu0 0
        %2903 = vmatprep.subr.bf16.mxu0 0
        %2904 = vmatpush2.bf16.msra.mxu0 0
        %2905 = vmatprep.subr.bf16.mxu0 0
        %2906 = vmatpush2.bf16.msra.mxu0 0
        %2907 = vmatprep.subr.bf16.mxu0 0
        %2908 = vmatpush2.bf16.msra.mxu0 0
        %2909 = vmatprep.subr.bf16.mxu0 0
        %2910 = vmatpush2.bf16.msra.mxu0 0
        %2911 = vmatprep.subr.bf16.mxu0 0
        %2912 = vmatpush2.bf16.msra.mxu0 0
        %2913 = vmatprep.subr.bf16.mxu0 0
        %2914 = vmatpush2.bf16.msra.mxu0 0
        %2915 = vmatprep.mubr.bf16.mxu0 0
        %2916 = vmatmul.mubr.bf16.gmra.mxu0 %v1341
        %v2917 = vpop.f32.mrf.mxu0
        %v2918 = vadd.f32 %v2869, %v2917
        %v2919 = vpop.f32.mrf.mxu0
        %v2920 = vpop.f32.mrf.mxu0
        %v2921 = vadd.f32 %v2869, %v2920
        %v2922 = vpop.f32.mrf.mxu0
        %2923 = vmatprep.mubr.bf16.mxu0 0
        %2924 = vmatmul.mubr.bf16.gmra.mxu0 %v1344
        %v2925 = vpop.f32.mrf.mxu0
        %v2926 = vadd.f32 %v2869, %v2925
        %v2927 = vpop.f32.mrf.mxu0
        %v2928 = vpop.f32.mrf.mxu0
        %v2929 = vadd.f32 %v2869, %v2928
        %v2930 = vpop.f32.mrf.mxu0
        %2931 = vmatprep.mubr.bf16.mxu0 0
        %2932 = vmatmul.mubr.bf16.gmra.mxu0 %v1347
        %v2933 = vpop.f32.mrf.mxu0
        %v2934 = vadd.f32 %v2869, %v2933
        %v2935 = vpop.f32.mrf.mxu0
        %v2936 = vpop.f32.mrf.mxu0
        %v2937 = vadd.f32 %v2869, %v2936
        %v2938 = vpop.f32.mrf.mxu0
        %2939 = vmatprep.mubr.bf16.mxu0 0
        %2940 = vmatmul.mubr.bf16.gmra.mxu0 %v1350
        %v2941 = vpop.f32.mrf.mxu0
        %v2942 = vadd.f32 %v2869, %v2941
        %v2943 = vpop.f32.mrf.mxu0
        %v2944 = vpop.f32.mrf.mxu0
        %v2945 = vadd.f32 %v2869, %v2944
        %v2946 = vpop.f32.mrf.mxu0
        %2947 = vdwg.mxu0
        %v2948 = vpack.c.bf16 %v2860, %v2860
        %2957 = vrot.lane.b32.xlu0 %v2918, 96
        %v2958 = vpop.permute.xlu0 %2957
        %2959 = vrot.lane.b32.xlu0 %v2921, 96
        %v2960 = vpop.permute.xlu0 %2959
        %2961 = vrot.lane.b32.xlu0 %v2926, 96
        %v2962 = vpop.permute.xlu0 %2961
        %2963 = vrot.lane.b32.xlu0 %v2929, 96
        %v2964 = vpop.permute.xlu0 %2963
        %2965 = vrot.lane.b32.xlu0 %v2934, 96
        %v2966 = vpop.permute.xlu0 %2965
        %2967 = vrot.lane.b32.xlu0 %v2937, 96
        %v2968 = vpop.permute.xlu0 %2967
        %2969 = vrot.lane.b32.xlu0 %v2942, 96
        %v2970 = vpop.permute.xlu0 %2969
        %2971 = vrot.lane.b32.xlu0 %v2945, 96
        %v2972 = vpop.permute.xlu0 %2971
        %v2981 = vmul.f32 %v2860, %v2958
        %v2982 = vmul.f32 %v2860, %v2960
        %v2983 = vmul.f32 %v2860, %v2962
        %v2984 = vmul.f32 %v2860, %v2964
        %v2985 = vmul.f32 %v2860, %v2966
        %v2986 = vmul.f32 %v2860, %v2968
        %v2987 = vmul.f32 %v2860, %v2970
        %v2988 = vmul.f32 %v2860, %v2972
        %v2990 = vcombine.high %v2860, %v2860
        %v2992 = vunpack.c.l.s4 1966171168
        %v2993 = vunpack.c.0.s8 %v2992
        %v2994 = vlaneseq
        %v2995 = vshrl.u32 %v2994, 7
        %v2996 = vsub.s32 %v2993, %v2995
        %v2997 = vrot.slane %v2860, %v2996
        %v2999 = vunpack.c.l.s4 1966171168
        %v3000 = vunpack.c.0.s8 %v2999
        %v3001 = vlaneseq
        %v3002 = vshrl.u32 %v3001, 7
        %v3003 = vsub.s32 %v3000, %v3002
        %v3004 = vrot.slane %v2990, %v3003
        %v3005 = vcombine.high %v2997, %v2997
        %v3006 = vcombine.high %v3004, %v3004
        %v3008 = vunpack.c.l.s4 1966171168
        %v3009 = vunpack.c.0.s8 %v3008
        %v3010 = vlaneseq
        %v3011 = vshrl.u32 %v3010, 7
        %v3012 = vsub.s32 %v3009, %v3011
        %v3013 = vrot.slane %v2997, %v3012
        %v3015 = vunpack.c.l.s4 1966171168
        %v3016 = vunpack.c.0.s8 %v3015
        %v3017 = vlaneseq
        %v3018 = vshrl.u32 %v3017, 7
        %v3019 = vsub.s32 %v3016, %v3018
        %v3020 = vrot.slane %v3004, %v3019
        %v3022 = vunpack.c.l.s4 1966171168
        %v3023 = vunpack.c.0.s8 %v3022
        %v3024 = vlaneseq
        %v3025 = vshrl.u32 %v3024, 7
        %v3026 = vsub.s32 %v3023, %v3025
        %v3027 = vrot.slane %v3005, %v3026
        %v3029 = vunpack.c.l.s4 1966171168
        %v3030 = vunpack.c.0.s8 %v3029
        %v3031 = vlaneseq
        %v3032 = vshrl.u32 %v3031, 7
        %v3033 = vsub.s32 %v3030, %v3032
        %v3034 = vrot.slane %v3006, %v3033
        %v3035 = vcombine.high %v3013, %v3013
        %v3036 = vcombine.high %v3020, %v3020
        %v3037 = vcombine.high %v3027, %v3027
        %v3038 = vcombine.high %v3034, %v3034
        %v3039 = vlaneseq
        %v3040 = vshrl.u32 %v3039, 7
        %v3041 = vsub.s32 0, %v3040
        %v3042 = vrot.slane %v3013, %v3041
        %v3043 = vlaneseq
        %v3044 = vshrl.u32 %v3043, 7
        %v3045 = vsub.s32 0, %v3044
        %v3046 = vrot.slane %v3027, %v3045
        %v3047 = vlaneseq
        %v3048 = vshrl.u32 %v3047, 7
        %v3049 = vsub.s32 0, %v3048
        %v3050 = vrot.slane %v3035, %v3049
        %v3051 = vlaneseq
        %v3052 = vshrl.u32 %v3051, 7
        %v3053 = vsub.s32 0, %v3052
        %v3054 = vrot.slane %v3037, %v3053
        %v3055 = vlaneseq
        %v3056 = vshrl.u32 %v3055, 7
        %v3057 = vsub.s32 0, %v3056
        %v3058 = vrot.slane %v3020, %v3057
        %v3059 = vlaneseq
        %v3060 = vshrl.u32 %v3059, 7
        %v3061 = vsub.s32 0, %v3060
        %v3062 = vrot.slane %v3034, %v3061
        %v3063 = vlaneseq
        %v3064 = vshrl.u32 %v3063, 7
        %v3065 = vsub.s32 0, %v3064
        %v3066 = vrot.slane %v3036, %v3065
        %v3067 = vlaneseq
        %v3068 = vshrl.u32 %v3067, 7
        %v3069 = vsub.s32 0, %v3068
        %v3070 = vrot.slane %v3038, %v3069
        %v3079 = vadd.f32 %v3042, %v2918
        %v3080 = vadd.f32 %v3046, %v2921
        %v3081 = vadd.f32 %v3050, %v2926
        %v3082 = vadd.f32 %v3054, %v2929
        %v3083 = vadd.f32 %v3058, %v2934
        %v3084 = vadd.f32 %v3062, %v2937
        %v3085 = vadd.f32 %v3066, %v2942
        %v3086 = vadd.f32 %v3070, %v2945
        %3095 = vrot.lane.b32.xlu0 %v3079, 96
        %v3096 = vpop.permute.xlu0 %3095
        %3097 = vrot.lane.b32.xlu0 %v3080, 96
        %v3098 = vpop.permute.xlu0 %3097
        %3099 = vrot.lane.b32.xlu0 %v3081, 96
        %v3100 = vpop.permute.xlu0 %3099
        %3101 = vrot.lane.b32.xlu0 %v3082, 96
        %v3102 = vpop.permute.xlu0 %3101
        %3103 = vrot.lane.b32.xlu0 %v3083, 96
        %v3104 = vpop.permute.xlu0 %3103
        %3105 = vrot.lane.b32.xlu0 %v3084, 96
        %v3106 = vpop.permute.xlu0 %3105
        %3107 = vrot.lane.b32.xlu0 %v3085, 96
        %v3108 = vpop.permute.xlu0 %3107
        %3109 = vrot.lane.b32.xlu0 %v3086, 96
        %v3110 = vpop.permute.xlu0 %3109
        %v3119 = vmul.f32 %v2918, %v3096
        %v3120 = vmul.f32 %v2921, %v3098
        %v3121 = vmul.f32 %v2926, %v3100
        %v3122 = vmul.f32 %v2929, %v3102
        %v3123 = vmul.f32 %v2934, %v3104
        %v3124 = vmul.f32 %v2937, %v3106
        %v3125 = vmul.f32 %v2942, %v3108
        %v3126 = vmul.f32 %v2945, %v3110
        %v3127 = vadd.f32 %v2981, %v3119
        %v3128 = vadd.f32 %v2982, %v3120
        %v3129 = vadd.f32 %v2983, %v3121
        %v3130 = vadd.f32 %v2984, %v3122
        %v3131 = vadd.f32 %v2985, %v3123
        %v3132 = vadd.f32 %v2986, %v3124
        %v3133 = vadd.f32 %v2987, %v3125
        %v3134 = vadd.f32 %v2988, %v3126
        %v3135 = vsel %vm1211, %v3127, 0.0
        %3136 = vadd.xlane.f32.xlu0 %v3135
        %v3137 = vpop.xlane.xlu0 %3136
        %v3138 = vsel %vm1211, %v3128, 0.0
        %3139 = vadd.xlane.f32.xlu0 %v3138
        %v3140 = vpop.xlane.xlu0 %3139
        %v3141 = vsel %vm1211, %v3129, 0.0
        %3142 = vadd.xlane.f32.xlu0 %v3141
        %v3143 = vpop.xlane.xlu0 %3142
        %v3144 = vsel %vm1211, %v3130, 0.0
        %3145 = vadd.xlane.f32.xlu0 %v3144
        %v3146 = vpop.xlane.xlu0 %3145
        %v3147 = vsel %vm1211, %v3131, 0.0
        %3148 = vadd.xlane.f32.xlu0 %v3147
        %v3149 = vpop.xlane.xlu0 %3148
        %v3150 = vsel %vm1211, %v3132, 0.0
        %3151 = vadd.xlane.f32.xlu0 %v3150
        %v3152 = vpop.xlane.xlu0 %3151
        %v3153 = vsel %vm1211, %v3133, 0.0
        %3154 = vadd.xlane.f32.xlu0 %v3153
        %v3155 = vpop.xlane.xlu0 %3154
        %v3156 = vsel %vm1211, %v3134, 0.0
        %3157 = vadd.xlane.f32.xlu0 %v3156
        %v3158 = vpop.xlane.xlu0 %3157
        %v3167 = vlaneseq
        %v3168 = vshrl.u32 %v3167, 7
        %v3169 = vsub.s32 %v1121, %v3168
        %v3170 = vrot.slane %v3137, %v3169
        %v3171 = vlaneseq
        %v3172 = vshrl.u32 %v3171, 7
        %v3173 = vsub.s32 %v1121, %v3172
        %v3174 = vrot.slane %v3140, %v3173
        %v3175 = vlaneseq
        %v3176 = vshrl.u32 %v3175, 7
        %v3177 = vsub.s32 %v1121, %v3176
        %v3178 = vrot.slane %v3143, %v3177
        %v3179 = vlaneseq
        %v3180 = vshrl.u32 %v3179, 7
        %v3181 = vsub.s32 %v1121, %v3180
        %v3182 = vrot.slane %v3146, %v3181
        %v3183 = vlaneseq
        %v3184 = vshrl.u32 %v3183, 7
        %v3185 = vsub.s32 %v1121, %v3184
        %v3186 = vrot.slane %v3149, %v3185
        %v3187 = vlaneseq
        %v3188 = vshrl.u32 %v3187, 7
        %v3189 = vsub.s32 %v1121, %v3188
        %v3190 = vrot.slane %v3152, %v3189
        %v3191 = vlaneseq
        %v3192 = vshrl.u32 %v3191, 7
        %v3193 = vsub.s32 %v1121, %v3192
        %v3194 = vrot.slane %v3155, %v3193
        %v3195 = vlaneseq
        %v3196 = vshrl.u32 %v3195, 7
        %v3197 = vsub.s32 %v1121, %v3196
        %v3198 = vrot.slane %v3158, %v3197
        %v3199 = vsel %vm1668, %v3174, %v3170
        %v3200 = vsel %vm1670, %v3178, %v3199
        %v3201 = vsel %vm1672, %v3182, %v3200
        %v3202 = vsel %vm1674, %v3186, %v3201
        %v3203 = vsel %vm1676, %v3190, %v3202
        %v3204 = vsel %vm1678, %v3194, %v3203
        %v3205 = vsel %vm1680, %v3198, %v3204
        %3207 = vxpose.xlu0.b32.start [1/16] %v3205, 128
        %3208 = vxpose.xlu0.b32.cont [2/16] 0.0, 128
        %3209 = vxpose.xlu0.b32.cont [3/16] 0.0, 128
        %3210 = vxpose.xlu0.b32.cont [4/16] 0.0, 128
        %3211 = vxpose.xlu0.b32.cont [5/16] 0.0, 128
        %3212 = vxpose.xlu0.b32.cont [6/16] 0.0, 128
        %3213 = vxpose.xlu0.b32.cont [7/16] 0.0, 128
        %3214 = vxpose.xlu0.b32.cont [8/16] 0.0, 128
        %3215 = vxpose.xlu0.b32.cont [9/16] 0.0, 128
        %3216 = vxpose.xlu0.b32.cont [10/16] 0.0, 128
        %3217 = vxpose.xlu0.b32.cont [11/16] 0.0, 128
        %3218 = vxpose.xlu0.b32.cont [12/16] 0.0, 128
        %3219 = vxpose.xlu0.b32.cont [13/16] 0.0, 128
        %3220 = vxpose.xlu0.b32.cont [14/16] 0.0, 128
        %3221 = vxpose.xlu0.b32.cont [15/16] 0.0, 128
        %3222 = vxpose.xlu0.b32.end [16/16] 0.0, 128
        %v3223 = vpop.trf.xlu0
        %v3224 = vpop.trf.xlu0
        %v3225 = vpop.trf.xlu0
        %v3226 = vpop.trf.xlu0
        %v3227 = vpop.trf.xlu0
        %v3228 = vpop.trf.xlu0
        %v3229 = vpop.trf.xlu0
        %v3230 = vpop.trf.xlu0
        %v3231 = vpop.trf.xlu0
        %v3232 = vpop.trf.xlu0
        %v3233 = vpop.trf.xlu0
        %v3234 = vpop.trf.xlu0
        %v3235 = vpop.trf.xlu0
        %v3236 = vpop.trf.xlu0
        %v3237 = vpop.trf.xlu0
        %v3238 = vpop.trf.xlu0
        %3240 = vrot.lane.b32.xlu0 %v2948, 96
        %v3241 = vpop.permute.xlu0 %3240
        %v3243 = vsel %vm1211, %v2948, 0
        %v3246 = vsel %vm1211, %v3241, 0
        %3248 = vmatprep.subr.bf16.mxu0 0
        %3249 = vmatpush1.bf16.xpose.msra.mxu0 0
        %3250 = vmatprep.subr.bf16.mxu0 0
        %3251 = vmatpush1.bf16.xpose.msra.mxu0 0
        %3252 = vmatprep.subr.bf16.mxu0 0
        %3253 = vmatpush1.bf16.xpose.msra.mxu0 0
        %3254 = vmatprep.subr.bf16.mxu0 0
        %3255 = vmatpush1.bf16.xpose.msra.mxu0 0
        %3256 = vmatprep.subr.bf16.mxu0 0
        %3257 = vmatpush1.bf16.xpose.msra.mxu0 0
        %3258 = vmatprep.subr.bf16.mxu0 0
        %3259 = vmatpush1.bf16.xpose.msra.mxu0 0
        %3260 = vmatprep.subr.bf16.mxu0 0
        %3261 = vmatpush1.bf16.xpose.msra.mxu0 0
        %3262 = vmatprep.subr.bf16.mxu0 0
        %3263 = vmatpush1.bf16.xpose.msra.mxu0 %v3246
        %3264 = vmatprep.subr.bf16.mxu0 0
        %3265 = vmatpush2.bf16.xpose.msra.mxu0 0
        %3266 = vmatprep.subr.bf16.mxu0 0
        %3267 = vmatpush2.bf16.xpose.msra.mxu0 0
        %3268 = vmatprep.subr.bf16.mxu0 0
        %3269 = vmatpush2.bf16.xpose.msra.mxu0 0
        %3270 = vmatprep.subr.bf16.mxu0 0
        %3271 = vmatpush2.bf16.xpose.msra.mxu0 0
        %3272 = vmatprep.subr.bf16.mxu0 0
        %3273 = vmatpush2.bf16.xpose.msra.mxu0 0
        %3274 = vmatprep.subr.bf16.mxu0 0
        %3275 = vmatpush2.bf16.xpose.msra.mxu0 0
        %3276 = vmatprep.subr.bf16.mxu0 0
        %3277 = vmatpush2.bf16.xpose.msra.mxu0 0
        %3278 = vmatprep.subr.bf16.mxu0 0
        %3279 = vmatpush2.bf16.xpose.msra.mxu0 0
        %3280 = vmatprep.mubr.bf16.mxu0 0
        %3281 = vmatmul.mubr.bf16.gmra.mxu0 %v3243
        %v3282 = vpop.f32.mrf.mxu0
        %v3283 = vadd.f32 %v3223, %v3282
        %v3284 = vpop.f32.mrf.mxu0
        %v3285 = vpop.f32.mrf.mxu0
        %v3286 = vpop.f32.mrf.mxu0
        %3287 = vdwg.mxu0
        %v3288 = vmul.f32 %v3283, 0.03125
        %v3289 = vsel %vm1122, -inf, %v3288
        %v3290 = vsel %vm1766, -inf, %v3289
        %v3291 = vsel %vm1768, %v3290, -inf
        %3292 = vmax.xlane.f32.xlu0 %v3291
        %v3293 = vpop.xlane.xlu0 %3292
        %v3294 = vsub.f32 %v3290, %v3293
        %v3295 = vmul.f32 %v3294, 1.442695
        %v3296 = vpow.pop %v3295
        %v3297 = vsel %vm1768, %v3296, 0.0
        %3298 = vadd.xlane.f32.xlu0 %v3297
        %v3299 = vpop.xlane.xlu0 %3298
        %v3300 = vrcp.pop %v3299
        %v3301 = vmul.f32 %v3296, %v3300
        %v3302 = vmul.f32 %v3301, %v1127
        %v3303 = vpack.c.bf16 %v3302, %v3302
        %3304 = vrot.lane.b32.xlu0 %v2948, 64
        %v3305 = vpop.permute.xlu0 %3304
        %v3307 = vsel %vm1768, %v3303, 0
        %v3310 = vsel %vm1787, %v3305, 0
        %3312 = vmatprep.subr.bf16.mxu0 0
        %3313 = vmatpush1.bf16.msra.mxu0 0
        %3314 = vmatprep.subr.bf16.mxu0 0
        %3315 = vmatpush1.bf16.msra.mxu0 0
        %3316 = vmatprep.subr.bf16.mxu0 0
        %3317 = vmatpush1.bf16.msra.mxu0 0
        %3318 = vmatprep.subr.bf16.mxu0 0
        %3319 = vmatpush1.bf16.msra.mxu0 0
        %3320 = vmatprep.subr.bf16.mxu0 0
        %3321 = vmatpush1.bf16.msra.mxu0 0
        %3322 = vmatprep.subr.bf16.mxu0 0
        %3323 = vmatpush1.bf16.msra.mxu0 0
        %3324 = vmatprep.subr.bf16.mxu0 0
        %3325 = vmatpush1.bf16.msra.mxu0 0
        %3326 = vmatprep.subr.bf16.mxu0 0
        %3327 = vmatpush1.bf16.msra.mxu0 %v3310
        %3328 = vmatprep.subr.bf16.mxu0 0
        %3329 = vmatpush2.bf16.msra.mxu0 0
        %3330 = vmatprep.subr.bf16.mxu0 0
        %3331 = vmatpush2.bf16.msra.mxu0 0
        %3332 = vmatprep.subr.bf16.mxu0 0
        %3333 = vmatpush2.bf16.msra.mxu0 0
        %3334 = vmatprep.subr.bf16.mxu0 0
        %3335 = vmatpush2.bf16.msra.mxu0 0
        %3336 = vmatprep.subr.bf16.mxu0 0
        %3337 = vmatpush2.bf16.msra.mxu0 0
        %3338 = vmatprep.subr.bf16.mxu0 0
        %3339 = vmatpush2.bf16.msra.mxu0 0
        %3340 = vmatprep.subr.bf16.mxu0 0
        %3341 = vmatpush2.bf16.msra.mxu0 0
        %3342 = vmatprep.subr.bf16.mxu0 0
        %3343 = vmatpush2.bf16.msra.mxu0 0
        %3344 = vmatprep.mubr.bf16.mxu0 0
        %3345 = vmatmul.mubr.bf16.gmra.mxu0 %v3307
        %v3346 = vpop.f32.mrf.mxu0
        %v3347 = vadd.f32 0.0, %v3346
        %v3348 = vpop.f32.mrf.mxu0
        %v3349 = vpop.f32.mrf.mxu0
        %v3350 = vpop.f32.mrf.mxu0
        %3351 = vdwg.mxu0
        %v3352 = vpack.c.bf16 %v3347, %v3347
        %v3354 = vlaneseq
        %v3355 = vshrl.u32 %v3354, 7
        %v3356 = vsub.s32 0, %v3355
        %v3357 = vrot.slane %v2802, %v3356
        %v3363 = vunpack.c.l.b16 %v2797
        %v3364 = vunpack.c.l.b16 %v2798
        %v3365 = vunpack.c.l.b16 %v2799
        %v3366 = vunpack.c.l.b16 %v2800
        %v3367 = vpack.c.b16 %v3364, %v3363
        %v3368 = vpack.c.b16 %v3366, %v3365
        %v3372 = vsel %vm1211, %v3352, 0
        %3374 = vmatprep.subr.bf16.mxu0 0
        %3375 = vmatpush1.bf16.msra.mxu0 0
        %3376 = vmatprep.subr.bf16.mxu0 0
        %3377 = vmatpush1.bf16.msra.mxu0 0
        %3378 = vmatprep.subr.bf16.mxu0 0
        %3379 = vmatpush1.bf16.msra.mxu0 0
        %3380 = vmatprep.subr.bf16.mxu0 0
        %3381 = vmatpush1.bf16.msra.mxu0 0
        %3382 = vmatprep.subr.bf16.mxu0 0
        %3383 = vmatpush1.bf16.msra.mxu0 0
        %3384 = vmatprep.subr.bf16.mxu0 0
        %3385 = vmatpush1.bf16.msra.mxu0 0
        %3386 = vmatprep.subr.bf16.mxu0 0
        %3387 = vmatpush1.bf16.msra.mxu0 %v3368
        %3388 = vmatprep.subr.bf16.mxu0 0
        %3389 = vmatpush1.bf16.msra.mxu0 %v3367
        %3390 = vmatprep.subr.bf16.mxu0 0
        %3391 = vmatpush2.bf16.msra.mxu0 0
        %3392 = vmatprep.subr.bf16.mxu0 0
        %3393 = vmatpush2.bf16.msra.mxu0 0
        %3394 = vmatprep.subr.bf16.mxu0 0
        %3395 = vmatpush2.bf16.msra.mxu0 0
        %3396 = vmatprep.subr.bf16.mxu0 0
        %3397 = vmatpush2.bf16.msra.mxu0 0
        %3398 = vmatprep.subr.bf16.mxu0 0
        %3399 = vmatpush2.bf16.msra.mxu0 0
        %3400 = vmatprep.subr.bf16.mxu0 0
        %3401 = vmatpush2.bf16.msra.mxu0 0
        %3402 = vmatprep.subr.bf16.mxu0 0
        %3403 = vmatpush2.bf16.msra.mxu0 0
        %3404 = vmatprep.subr.bf16.mxu0 0
        %3405 = vmatpush2.bf16.msra.mxu0 0
        %3406 = vmatprep.mubr.bf16.mxu0 0
        %3407 = vmatmul.mubr.bf16.gmra.mxu0 %v3372
        %v3408 = vpop.f32.mrf.mxu0
        %v3409 = vadd.f32 %v3357, %v3408
        %v3410 = vpop.f32.mrf.mxu0
        %v3411 = vpop.f32.mrf.mxu0
        %v3412 = vpop.f32.mrf.mxu0
        %3413 = vdwg.mxu0
        %v3414 = vadd.f32 %v2781, %v3409
        %s3415 = scalar_lea.vmem [#allocation20], 3
        %v3416 = vld [vmem:[%s3415] sm:$0x1]
        %s3417 = scalar_lea.vmem [#allocation22], 3
        %v3418 = vld [vmem:[%s3417] sm:$0x1]
        %v3419 = vsel %vm1211, %v3414, 0.0
        %3420 = vadd.xlane.f32.xlu0 %v3419
        %v3421 = vpop.xlane.xlu0 %3420
        %v3422 = vmul.f32 %v3421, %v1215
        %v3423 = vsub.f32 %v3414, %v3422
        %v3424 = vmul.f32 %v3423, %v3423
        %v3425 = vsel %vm1211, %v3424, 0.0
        %3426 = vadd.xlane.f32.xlu0 %v3425
        %v3427 = vpop.xlane.xlu0 %3426
        %v3428 = vmul.f32 %v3427, %v1215
        %v3429 = vadd.f32 %v3428, 1e-05
        %v3430 = vrsqrt.pop %v3429
        %v3431 = vmul.f32 %v3423, %v3430
        %v3433 = vlaneseq
        %v3434 = vshrl.u32 %v3433, 7
        %v3435 = vsub.s32 0, %v3434
        %v3436 = vrot.slane %v3416, %v3435
        %v3438 = vmul.f32 %v3431, %v3436
        %v3440 = vlaneseq
        %v3441 = vshrl.u32 %v3440, 7
        %v3442 = vsub.s32 0, %v3441
        %v3443 = vrot.slane %v3418, %v3442
        %v3445 = vadd.f32 %v3438, %v3443
        %s3446 = scalar_lea.vmem [#allocation11], 48
        %v3447 = vld [vmem:[%s3446] sm:$0xf]
        %v3448 = vld [vmem:[%s3446 + $0x4] sm:$0xf]
        %v3449 = vld [vmem:[%s3446 + $0x8] sm:$0xf]
        %v3450 = vld [vmem:[%s3446 + $0xc] sm:$0xf]
        %s3451 = scalar_lea.vmem [#allocation13], 3
        %v3452 = vld [vmem:[%s3451] sm:$0x1]
        %s3453 = scalar_lea.vmem [#allocation14], 48
        %v3454 = vld [vmem:[%s3453] sm:$0xf]
        %v3455 = vld [vmem:[%s3453 + $0x4] sm:$0xf]
        %v3456 = vld [vmem:[%s3453 + $0x8] sm:$0xf]
        %v3457 = vld [vmem:[%s3453 + $0xc] sm:$0xf]
        %s3458 = scalar_lea.vmem [#allocation16], 3
        %v3459 = vld [vmem:[%s3458] sm:$0x1]
        %s3460 = scalar_lea.vmem [#allocation17], 48
        %v3461 = vld [vmem:[%s3460] sm:$0xf]
        %v3462 = vld [vmem:[%s3460 + $0x4] sm:$0xf]
        %v3463 = vld [vmem:[%s3460 + $0x8] sm:$0xf]
        %v3464 = vld [vmem:[%s3460 + $0xc] sm:$0xf]
        %s3465 = scalar_lea.vmem [#allocation19], 3
        %v3466 = vld [vmem:[%s3465] sm:$0x1]
        %v3468 = vlaneseq
        %v3469 = vshrl.u32 %v3468, 7
        %v3470 = vsub.s32 0, %v3469
        %v3471 = vrot.slane %v3452, %v3470
        %v3477 = vunpack.c.l.b16 %v3447
        %v3478 = vunpack.c.l.b16 %v3448
        %v3479 = vunpack.c.l.b16 %v3449
        %v3480 = vunpack.c.l.b16 %v3450
        %v3481 = vpack.c.b16 %v3478, %v3477
        %v3482 = vpack.c.b16 %v3480, %v3479
        %3485 = vmatprep.subr.bf16.mxu0 0
        %3486 = vmatpush1.bf16.msra.mxu0 0
        %3487 = vmatprep.subr.bf16.mxu0 0
        %3488 = vmatpush1.bf16.msra.mxu0 0
        %3489 = vmatprep.subr.bf16.mxu0 0
        %3490 = vmatpush1.bf16.msra.mxu0 0
        %3491 = vmatprep.subr.bf16.mxu0 0
        %3492 = vmatpush1.bf16.msra.mxu0 0
        %3493 = vmatprep.subr.bf16.mxu0 0
        %3494 = vmatpush1.bf16.msra.mxu0 0
        %3495 = vmatprep.subr.bf16.mxu0 0
        %3496 = vmatpush1.bf16.msra.mxu0 0
        %3497 = vmatprep.subr.bf16.mxu0 0
        %3498 = vmatpush1.bf16.msra.mxu0 %v3482
        %3499 = vmatprep.subr.bf16.mxu0 0
        %3500 = vmatpush1.bf16.msra.mxu0 %v3481
        %3501 = vmatprep.subr.bf16.mxu0 0
        %3502 = vmatpush2.bf16.msra.mxu0 0
        %3503 = vmatprep.subr.bf16.mxu0 0
        %3504 = vmatpush2.bf16.msra.mxu0 0
        %3505 = vmatprep.subr.bf16.mxu0 0
        %3506 = vmatpush2.bf16.msra.mxu0 0
        %3507 = vmatprep.subr.bf16.mxu0 0
        %3508 = vmatpush2.bf16.msra.mxu0 0
        %3509 = vmatprep.subr.bf16.mxu0 0
        %3510 = vmatpush2.bf16.msra.mxu0 0
        %3511 = vmatprep.subr.bf16.mxu0 0
        %3512 = vmatpush2.bf16.msra.mxu0 0
        %3513 = vmatprep.subr.bf16.mxu0 0
        %3514 = vmatpush2.bf16.msra.mxu0 0
        %3515 = vmatprep.subr.bf16.mxu0 0
        %3516 = vmatpush2.bf16.msra.mxu0 0
        %3517 = vmatprep.mubr.bf16.mxu0 0
        %3518 = vmatmul.mubr.bf16.gmra.mxu0 %v1964
        %v3519 = vpop.f32.mrf.mxu0
        %v3520 = vadd.f32 %v3471, %v3519
        %v3521 = vpop.f32.mrf.mxu0
        %v3522 = vpop.f32.mrf.mxu0
        %v3523 = vpop.f32.mrf.mxu0
        %3524 = vdwg.mxu0
        %v3525 = vpack.c.bf16 %v3445, %v3445
        %3526 = vrot.lane.b32.xlu0 %v3481, 96
        %v3527 = vpop.permute.xlu0 %3526
        %3528 = vrot.lane.b32.xlu0 %v3482, 96
        %v3529 = vpop.permute.xlu0 %3528
        %3532 = vrot.lane.b32.xlu0 %v3471, 96
        %v3533 = vpop.permute.xlu0 %3532
        %v3536 = vsel %vm1211, %v3525, 0
        %3538 = vmatprep.subr.bf16.mxu0 0
        %3539 = vmatpush1.bf16.msra.mxu0 0
        %3540 = vmatprep.subr.bf16.mxu0 0
        %3541 = vmatpush1.bf16.msra.mxu0 0
        %3542 = vmatprep.subr.bf16.mxu0 0
        %3543 = vmatpush1.bf16.msra.mxu0 0
        %3544 = vmatprep.subr.bf16.mxu0 0
        %3545 = vmatpush1.bf16.msra.mxu0 0
        %3546 = vmatprep.subr.bf16.mxu0 0
        %3547 = vmatpush1.bf16.msra.mxu0 0
        %3548 = vmatprep.subr.bf16.mxu0 0
        %3549 = vmatpush1.bf16.msra.mxu0 0
        %3550 = vmatprep.subr.bf16.mxu0 0
        %3551 = vmatpush1.bf16.msra.mxu0 %v3529
        %3552 = vmatprep.subr.bf16.mxu0 0
        %3553 = vmatpush1.bf16.msra.mxu0 %v3527
        %3554 = vmatprep.subr.bf16.mxu0 0
        %3555 = vmatpush2.bf16.msra.mxu0 0
        %3556 = vmatprep.subr.bf16.mxu0 0
        %3557 = vmatpush2.bf16.msra.mxu0 0
        %3558 = vmatprep.subr.bf16.mxu0 0
        %3559 = vmatpush2.bf16.msra.mxu0 0
        %3560 = vmatprep.subr.bf16.mxu0 0
        %3561 = vmatpush2.bf16.msra.mxu0 0
        %3562 = vmatprep.subr.bf16.mxu0 0
        %3563 = vmatpush2.bf16.msra.mxu0 0
        %3564 = vmatprep.subr.bf16.mxu0 0
        %3565 = vmatpush2.bf16.msra.mxu0 0
        %3566 = vmatprep.subr.bf16.mxu0 0
        %3567 = vmatpush2.bf16.msra.mxu0 0
        %3568 = vmatprep.subr.bf16.mxu0 0
        %3569 = vmatpush2.bf16.msra.mxu0 0
        %3570 = vmatprep.mubr.bf16.mxu0 0
        %3571 = vmatmul.mubr.bf16.gmra.mxu0 %v3536
        %v3572 = vpop.f32.mrf.mxu0
        %v3573 = vadd.f32 %v3533, %v3572
        %v3574 = vpop.f32.mrf.mxu0
        %v3575 = vpop.f32.mrf.mxu0
        %v3576 = vpop.f32.mrf.mxu0
        %3577 = vdwg.mxu0
        %v3579 = vlaneseq
        %v3580 = vshrl.u32 %v3579, 7
        %v3581 = vsub.s32 0, %v3580
        %v3582 = vrot.slane %v3459, %v3581
        %v3588 = vunpack.c.l.b16 %v3454
        %v3589 = vunpack.c.l.b16 %v3455
        %v3590 = vunpack.c.l.b16 %v3456
        %v3591 = vunpack.c.l.b16 %v3457
        %v3592 = vpack.c.b16 %v3589, %v3588
        %v3593 = vpack.c.b16 %v3591, %v3590
        %3596 = vmatprep.subr.bf16.mxu0 0
        %3597 = vmatpush1.bf16.msra.mxu0 0
        %3598 = vmatprep.subr.bf16.mxu0 0
        %3599 = vmatpush1.bf16.msra.mxu0 0
        %3600 = vmatprep.subr.bf16.mxu0 0
        %3601 = vmatpush1.bf16.msra.mxu0 0
        %3602 = vmatprep.subr.bf16.mxu0 0
        %3603 = vmatpush1.bf16.msra.mxu0 0
        %3604 = vmatprep.subr.bf16.mxu0 0
        %3605 = vmatpush1.bf16.msra.mxu0 0
        %3606 = vmatprep.subr.bf16.mxu0 0
        %3607 = vmatpush1.bf16.msra.mxu0 0
        %3608 = vmatprep.subr.bf16.mxu0 0
        %3609 = vmatpush1.bf16.msra.mxu0 %v3593
        %3610 = vmatprep.subr.bf16.mxu0 0
        %3611 = vmatpush1.bf16.msra.mxu0 %v3592
        %3612 = vmatprep.subr.bf16.mxu0 0
        %3613 = vmatpush2.bf16.msra.mxu0 0
        %3614 = vmatprep.subr.bf16.mxu0 0
        %3615 = vmatpush2.bf16.msra.mxu0 0
        %3616 = vmatprep.subr.bf16.mxu0 0
        %3617 = vmatpush2.bf16.msra.mxu0 0
        %3618 = vmatprep.subr.bf16.mxu0 0
        %3619 = vmatpush2.bf16.msra.mxu0 0
        %3620 = vmatprep.subr.bf16.mxu0 0
        %3621 = vmatpush2.bf16.msra.mxu0 0
        %3622 = vmatprep.subr.bf16.mxu0 0
        %3623 = vmatpush2.bf16.msra.mxu0 0
        %3624 = vmatprep.subr.bf16.mxu0 0
        %3625 = vmatpush2.bf16.msra.mxu0 0
        %3626 = vmatprep.subr.bf16.mxu0 0
        %3627 = vmatpush2.bf16.msra.mxu0 0
        %3628 = vmatprep.mubr.bf16.mxu0 0
        %3629 = vmatmul.mubr.bf16.gmra.mxu0 %v1341
        %v3630 = vpop.f32.mrf.mxu0
        %v3631 = vadd.f32 %v3582, %v3630
        %v3632 = vpop.f32.mrf.mxu0
        %v3633 = vpop.f32.mrf.mxu0
        %v3634 = vadd.f32 %v3582, %v3633
        %v3635 = vpop.f32.mrf.mxu0
        %3636 = vmatprep.mubr.bf16.mxu0 0
        %3637 = vmatmul.mubr.bf16.gmra.mxu0 %v1344
        %v3638 = vpop.f32.mrf.mxu0
        %v3639 = vadd.f32 %v3582, %v3638
        %v3640 = vpop.f32.mrf.mxu0
        %v3641 = vpop.f32.mrf.mxu0
        %v3642 = vadd.f32 %v3582, %v3641
        %v3643 = vpop.f32.mrf.mxu0
        %3644 = vmatprep.mubr.bf16.mxu0 0
        %3645 = vmatmul.mubr.bf16.gmra.mxu0 %v1347
        %v3646 = vpop.f32.mrf.mxu0
        %v3647 = vadd.f32 %v3582, %v3646
        %v3648 = vpop.f32.mrf.mxu0
        %v3649 = vpop.f32.mrf.mxu0
        %v3650 = vadd.f32 %v3582, %v3649
        %v3651 = vpop.f32.mrf.mxu0
        %3652 = vmatprep.mubr.bf16.mxu0 0
        %3653 = vmatmul.mubr.bf16.gmra.mxu0 %v1350
        %v3654 = vpop.f32.mrf.mxu0
        %v3655 = vadd.f32 %v3582, %v3654
        %v3656 = vpop.f32.mrf.mxu0
        %v3657 = vpop.f32.mrf.mxu0
        %v3658 = vadd.f32 %v3582, %v3657
        %v3659 = vpop.f32.mrf.mxu0
        %3660 = vdwg.mxu0
        %v3661 = vpack.c.bf16 %v3520, %v3520
        %v3662 = vpack.c.bf16 %v3573, %v3573
        %3671 = vrot.lane.b32.xlu0 %v3631, 96
        %v3672 = vpop.permute.xlu0 %3671
        %3673 = vrot.lane.b32.xlu0 %v3634, 96
        %v3674 = vpop.permute.xlu0 %3673
        %3675 = vrot.lane.b32.xlu0 %v3639, 96
        %v3676 = vpop.permute.xlu0 %3675
        %3677 = vrot.lane.b32.xlu0 %v3642, 96
        %v3678 = vpop.permute.xlu0 %3677
        %3679 = vrot.lane.b32.xlu0 %v3647, 96
        %v3680 = vpop.permute.xlu0 %3679
        %3681 = vrot.lane.b32.xlu0 %v3650, 96
        %v3682 = vpop.permute.xlu0 %3681
        %3683 = vrot.lane.b32.xlu0 %v3655, 96
        %v3684 = vpop.permute.xlu0 %3683
        %3685 = vrot.lane.b32.xlu0 %v3658, 96
        %v3686 = vpop.permute.xlu0 %3685
        %v3695 = vmul.f32 %v3520, %v3672
        %v3696 = vmul.f32 %v3520, %v3674
        %v3697 = vmul.f32 %v3520, %v3676
        %v3698 = vmul.f32 %v3520, %v3678
        %v3699 = vmul.f32 %v3520, %v3680
        %v3700 = vmul.f32 %v3520, %v3682
        %v3701 = vmul.f32 %v3520, %v3684
        %v3702 = vmul.f32 %v3520, %v3686
        %v3704 = vcombine.high %v3573, %v3573
        %v3706 = vunpack.c.l.s4 1966171168
        %v3707 = vunpack.c.0.s8 %v3706
        %v3708 = vlaneseq
        %v3709 = vshrl.u32 %v3708, 7
        %v3710 = vsub.s32 %v3707, %v3709
        %v3711 = vrot.slane %v3573, %v3710
        %v3713 = vunpack.c.l.s4 1966171168
        %v3714 = vunpack.c.0.s8 %v3713
        %v3715 = vlaneseq
        %v3716 = vshrl.u32 %v3715, 7
        %v3717 = vsub.s32 %v3714, %v3716
        %v3718 = vrot.slane %v3704, %v3717
        %v3719 = vcombine.high %v3711, %v3711
        %v3720 = vcombine.high %v3718, %v3718
        %v3722 = vunpack.c.l.s4 1966171168
        %v3723 = vunpack.c.0.s8 %v3722
        %v3724 = vlaneseq
        %v3725 = vshrl.u32 %v3724, 7
        %v3726 = vsub.s32 %v3723, %v3725
        %v3727 = vrot.slane %v3711, %v3726
        %v3729 = vunpack.c.l.s4 1966171168
        %v3730 = vunpack.c.0.s8 %v3729
        %v3731 = vlaneseq
        %v3732 = vshrl.u32 %v3731, 7
        %v3733 = vsub.s32 %v3730, %v3732
        %v3734 = vrot.slane %v3718, %v3733
        %v3736 = vunpack.c.l.s4 1966171168
        %v3737 = vunpack.c.0.s8 %v3736
        %v3738 = vlaneseq
        %v3739 = vshrl.u32 %v3738, 7
        %v3740 = vsub.s32 %v3737, %v3739
        %v3741 = vrot.slane %v3719, %v3740
        %v3743 = vunpack.c.l.s4 1966171168
        %v3744 = vunpack.c.0.s8 %v3743
        %v3745 = vlaneseq
        %v3746 = vshrl.u32 %v3745, 7
        %v3747 = vsub.s32 %v3744, %v3746
        %v3748 = vrot.slane %v3720, %v3747
        %v3749 = vcombine.high %v3727, %v3727
        %v3750 = vcombine.high %v3734, %v3734
        %v3751 = vcombine.high %v3741, %v3741
        %v3752 = vcombine.high %v3748, %v3748
        %v3753 = vlaneseq
        %v3754 = vshrl.u32 %v3753, 7
        %v3755 = vsub.s32 0, %v3754
        %v3756 = vrot.slane %v3727, %v3755
        %v3757 = vlaneseq
        %v3758 = vshrl.u32 %v3757, 7
        %v3759 = vsub.s32 0, %v3758
        %v3760 = vrot.slane %v3741, %v3759
        %v3761 = vlaneseq
        %v3762 = vshrl.u32 %v3761, 7
        %v3763 = vsub.s32 0, %v3762
        %v3764 = vrot.slane %v3749, %v3763
        %v3765 = vlaneseq
        %v3766 = vshrl.u32 %v3765, 7
        %v3767 = vsub.s32 0, %v3766
        %v3768 = vrot.slane %v3751, %v3767
        %v3769 = vlaneseq
        %v3770 = vshrl.u32 %v3769, 7
        %v3771 = vsub.s32 0, %v3770
        %v3772 = vrot.slane %v3734, %v3771
        %v3773 = vlaneseq
        %v3774 = vshrl.u32 %v3773, 7
        %v3775 = vsub.s32 0, %v3774
        %v3776 = vrot.slane %v3748, %v3775
        %v3777 = vlaneseq
        %v3778 = vshrl.u32 %v3777, 7
        %v3779 = vsub.s32 0, %v3778
        %v3780 = vrot.slane %v3750, %v3779
        %v3781 = vlaneseq
        %v3782 = vshrl.u32 %v3781, 7
        %v3783 = vsub.s32 0, %v3782
        %v3784 = vrot.slane %v3752, %v3783
        %v3793 = vadd.f32 %v3756, %v3672
        %v3794 = vadd.f32 %v3760, %v3674
        %v3795 = vadd.f32 %v3764, %v3676
        %v3796 = vadd.f32 %v3768, %v3678
        %v3797 = vadd.f32 %v3772, %v3680
        %v3798 = vadd.f32 %v3776, %v3682
        %v3799 = vadd.f32 %v3780, %v3684
        %v3800 = vadd.f32 %v3784, %v3686
        %v3801 = vmul.f32 %v3631, %v3793
        %v3802 = vmul.f32 %v3634, %v3794
        %v3803 = vmul.f32 %v3639, %v3795
        %v3804 = vmul.f32 %v3642, %v3796
        %v3805 = vmul.f32 %v3647, %v3797
        %v3806 = vmul.f32 %v3650, %v3798
        %v3807 = vmul.f32 %v3655, %v3799
        %v3808 = vmul.f32 %v3658, %v3800
        %v3809 = vadd.f32 %v3695, %v3801
        %v3810 = vadd.f32 %v3696, %v3802
        %v3811 = vadd.f32 %v3697, %v3803
        %v3812 = vadd.f32 %v3698, %v3804
        %v3813 = vadd.f32 %v3699, %v3805
        %v3814 = vadd.f32 %v3700, %v3806
        %v3815 = vadd.f32 %v3701, %v3807
        %v3816 = vadd.f32 %v3702, %v3808
        %v3817 = vsel %vm1211, %v3809, 0.0
        %3818 = vadd.xlane.f32.xlu0 %v3817
        %v3819 = vpop.xlane.xlu0 %3818
        %v3820 = vsel %vm1211, %v3810, 0.0
        %3821 = vadd.xlane.f32.xlu0 %v3820
        %v3822 = vpop.xlane.xlu0 %3821
        %v3823 = vsel %vm1211, %v3811, 0.0
        %3824 = vadd.xlane.f32.xlu0 %v3823
        %v3825 = vpop.xlane.xlu0 %3824
        %v3826 = vsel %vm1211, %v3812, 0.0
        %3827 = vadd.xlane.f32.xlu0 %v3826
        %v3828 = vpop.xlane.xlu0 %3827
        %v3829 = vsel %vm1211, %v3813, 0.0
        %3830 = vadd.xlane.f32.xlu0 %v3829
        %v3831 = vpop.xlane.xlu0 %3830
        %v3832 = vsel %vm1211, %v3814, 0.0
        %3833 = vadd.xlane.f32.xlu0 %v3832
        %v3834 = vpop.xlane.xlu0 %3833
        %v3835 = vsel %vm1211, %v3815, 0.0
        %3836 = vadd.xlane.f32.xlu0 %v3835
        %v3837 = vpop.xlane.xlu0 %3836
        %v3838 = vsel %vm1211, %v3816, 0.0
        %3839 = vadd.xlane.f32.xlu0 %v3838
        %v3840 = vpop.xlane.xlu0 %3839
        %v3849 = vlaneseq
        %v3850 = vshrl.u32 %v3849, 7
        %v3851 = vsub.s32 %v1121, %v3850
        %v3852 = vrot.slane %v3819, %v3851
        %v3853 = vlaneseq
        %v3854 = vshrl.u32 %v3853, 7
        %v3855 = vsub.s32 %v1121, %v3854
        %v3856 = vrot.slane %v3822, %v3855
        %v3857 = vlaneseq
        %v3858 = vshrl.u32 %v3857, 7
        %v3859 = vsub.s32 %v1121, %v3858
        %v3860 = vrot.slane %v3825, %v3859
        %v3861 = vlaneseq
        %v3862 = vshrl.u32 %v3861, 7
        %v3863 = vsub.s32 %v1121, %v3862
        %v3864 = vrot.slane %v3828, %v3863
        %v3865 = vlaneseq
        %v3866 = vshrl.u32 %v3865, 7
        %v3867 = vsub.s32 %v1121, %v3866
        %v3868 = vrot.slane %v3831, %v3867
        %v3869 = vlaneseq
        %v3870 = vshrl.u32 %v3869, 7
        %v3871 = vsub.s32 %v1121, %v3870
        %v3872 = vrot.slane %v3834, %v3871
        %v3873 = vlaneseq
        %v3874 = vshrl.u32 %v3873, 7
        %v3875 = vsub.s32 %v1121, %v3874
        %v3876 = vrot.slane %v3837, %v3875
        %v3877 = vlaneseq
        %v3878 = vshrl.u32 %v3877, 7
        %v3879 = vsub.s32 %v1121, %v3878
        %v3880 = vrot.slane %v3840, %v3879
        %v3881 = vsel %vm1668, %v3856, %v3852
        %v3882 = vsel %vm1670, %v3860, %v3881
        %v3883 = vsel %vm1672, %v3864, %v3882
        %v3884 = vsel %vm1674, %v3868, %v3883
        %v3885 = vsel %vm1676, %v3872, %v3884
        %v3886 = vsel %vm1678, %v3876, %v3885
        %v3887 = vsel %vm1680, %v3880, %v3886
        %3889 = vxpose.xlu0.b32.start [1/16] %v3887, 128
        %3890 = vxpose.xlu0.b32.cont [2/16] 0.0, 128
        %3891 = vxpose.xlu0.b32.cont [3/16] 0.0, 128
        %3892 = vxpose.xlu0.b32.cont [4/16] 0.0, 128
        %3893 = vxpose.xlu0.b32.cont [5/16] 0.0, 128
        %3894 = vxpose.xlu0.b32.cont [6/16] 0.0, 128
        %3895 = vxpose.xlu0.b32.cont [7/16] 0.0, 128
        %3896 = vxpose.xlu0.b32.cont [8/16] 0.0, 128
        %3897 = vxpose.xlu0.b32.cont [9/16] 0.0, 128
        %3898 = vxpose.xlu0.b32.cont [10/16] 0.0, 128
        %3899 = vxpose.xlu0.b32.cont [11/16] 0.0, 128
        %3900 = vxpose.xlu0.b32.cont [12/16] 0.0, 128
        %3901 = vxpose.xlu0.b32.cont [13/16] 0.0, 128
        %3902 = vxpose.xlu0.b32.cont [14/16] 0.0, 128
        %3903 = vxpose.xlu0.b32.cont [15/16] 0.0, 128
        %3904 = vxpose.xlu0.b32.end [16/16] 0.0, 128
        %v3905 = vpop.trf.xlu0
        %v3906 = vpop.trf.xlu0
        %v3907 = vpop.trf.xlu0
        %v3908 = vpop.trf.xlu0
        %v3909 = vpop.trf.xlu0
        %v3910 = vpop.trf.xlu0
        %v3911 = vpop.trf.xlu0
        %v3912 = vpop.trf.xlu0
        %v3913 = vpop.trf.xlu0
        %v3914 = vpop.trf.xlu0
        %v3915 = vpop.trf.xlu0
        %v3916 = vpop.trf.xlu0
        %v3917 = vpop.trf.xlu0
        %v3918 = vpop.trf.xlu0
        %v3919 = vpop.trf.xlu0
        %v3920 = vpop.trf.xlu0
        %v3922 = vsel %vm1211, %v3661, 0
        %v3925 = vsel %vm1211, %v3662, 0
        %3927 = vmatprep.subr.bf16.mxu0 0
        %3928 = vmatpush1.bf16.xpose.msra.mxu0 0
        %3929 = vmatprep.subr.bf16.mxu0 0
        %3930 = vmatpush1.bf16.xpose.msra.mxu0 0
        %3931 = vmatprep.subr.bf16.mxu0 0
        %3932 = vmatpush1.bf16.xpose.msra.mxu0 0
        %3933 = vmatprep.subr.bf16.mxu0 0
        %3934 = vmatpush1.bf16.xpose.msra.mxu0 0
        %3935 = vmatprep.subr.bf16.mxu0 0
        %3936 = vmatpush1.bf16.xpose.msra.mxu0 0
        %3937 = vmatprep.subr.bf16.mxu0 0
        %3938 = vmatpush1.bf16.xpose.msra.mxu0 0
        %3939 = vmatprep.subr.bf16.mxu0 0
        %3940 = vmatpush1.bf16.xpose.msra.mxu0 0
        %3941 = vmatprep.subr.bf16.mxu0 0
        %3942 = vmatpush1.bf16.xpose.msra.mxu0 %v3925
        %3943 = vmatprep.subr.bf16.mxu0 0
        %3944 = vmatpush2.bf16.xpose.msra.mxu0 0
        %3945 = vmatprep.subr.bf16.mxu0 0
        %3946 = vmatpush2.bf16.xpose.msra.mxu0 0
        %3947 = vmatprep.subr.bf16.mxu0 0
        %3948 = vmatpush2.bf16.xpose.msra.mxu0 0
        %3949 = vmatprep.subr.bf16.mxu0 0
        %3950 = vmatpush2.bf16.xpose.msra.mxu0 0
        %3951 = vmatprep.subr.bf16.mxu0 0
        %3952 = vmatpush2.bf16.xpose.msra.mxu0 0
        %3953 = vmatprep.subr.bf16.mxu0 0
        %3954 = vmatpush2.bf16.xpose.msra.mxu0 0
        %3955 = vmatprep.subr.bf16.mxu0 0
        %3956 = vmatpush2.bf16.xpose.msra.mxu0 0
        %3957 = vmatprep.subr.bf16.mxu0 0
        %3958 = vmatpush2.bf16.xpose.msra.mxu0 0
        %3959 = vmatprep.mubr.bf16.mxu0 0
        %3960 = vmatmul.mubr.bf16.gmra.mxu0 %v3922
        %v3961 = vpop.f32.mrf.mxu0
        %v3962 = vadd.f32 %v3905, %v3961
        %v3963 = vpop.f32.mrf.mxu0
        %v3964 = vpop.f32.mrf.mxu0
        %v3965 = vpop.f32.mrf.mxu0
        %3966 = vdwg.mxu0
        %v3967 = vmul.f32 %v3962, 0.03125
        %v3968 = vsel %vm1122, -inf, %v3967
        %v3969 = vsel %vm1766, -inf, %v3968
        %v3970 = vsel %vm1768, %v3969, -inf
        %3971 = vmax.xlane.f32.xlu0 %v3970
        %v3972 = vpop.xlane.xlu0 %3971
        %v3973 = vsub.f32 %v3969, %v3972
        %v3974 = vmul.f32 %v3973, 1.442695
        %v3975 = vpow.pop %v3974
        %v3976 = vsel %vm1768, %v3975, 0.0
        %3977 = vadd.xlane.f32.xlu0 %v3976
        %v3978 = vpop.xlane.xlu0 %3977
        %v3979 = vrcp.pop %v3978
        %v3980 = vmul.f32 %v3975, %v3979
        %v3981 = vmul.f32 %v3980, %v1127
        %v3982 = vpack.c.bf16 %v3981, %v3981
        %3984 = vrot.lane.b32.xlu0 %v3662, 96
        %v3985 = vpop.permute.xlu0 %3984
        %v3987 = vsel %vm1768, %v3982, 0
        %v3990 = vsel %vm1787, %v3985, 0
        %3992 = vmatprep.subr.bf16.mxu0 0
        %3993 = vmatpush1.bf16.msra.mxu0 0
        %3994 = vmatprep.subr.bf16.mxu0 0
        %3995 = vmatpush1.bf16.msra.mxu0 0
        %3996 = vmatprep.subr.bf16.mxu0 0
        %3997 = vmatpush1.bf16.msra.mxu0 0
        %3998 = vmatprep.subr.bf16.mxu0 0
        %3999 = vmatpush1.bf16.msra.mxu0 0
        %4000 = vmatprep.subr.bf16.mxu0 0
        %4001 = vmatpush1.bf16.msra.mxu0 0
        %4002 = vmatprep.subr.bf16.mxu0 0
        %4003 = vmatpush1.bf16.msra.mxu0 0
        %4004 = vmatprep.subr.bf16.mxu0 0
        %4005 = vmatpush1.bf16.msra.mxu0 0
        %4006 = vmatprep.subr.bf16.mxu0 0
        %4007 = vmatpush1.bf16.msra.mxu0 %v3990
        %4008 = vmatprep.subr.bf16.mxu0 0
        %4009 = vmatpush2.bf16.msra.mxu0 0
        %4010 = vmatprep.subr.bf16.mxu0 0
        %4011 = vmatpush2.bf16.msra.mxu0 0
        %4012 = vmatprep.subr.bf16.mxu0 0
        %4013 = vmatpush2.bf16.msra.mxu0 0
        %4014 = vmatprep.subr.bf16.mxu0 0
        %4015 = vmatpush2.bf16.msra.mxu0 0
        %4016 = vmatprep.subr.bf16.mxu0 0
        %4017 = vmatpush2.bf16.msra.mxu0 0
        %4018 = vmatprep.subr.bf16.mxu0 0
        %4019 = vmatpush2.bf16.msra.mxu0 0
        %4020 = vmatprep.subr.bf16.mxu0 0
        %4021 = vmatpush2.bf16.msra.mxu0 0
        %4022 = vmatprep.subr.bf16.mxu0 0
        %4023 = vmatpush2.bf16.msra.mxu0 0
        %4024 = vmatprep.mubr.bf16.mxu0 0
        %4025 = vmatmul.mubr.bf16.gmra.mxu0 %v3987
        %v4026 = vpop.f32.mrf.mxu0
        %v4027 = vadd.f32 0.0, %v4026
        %v4028 = vpop.f32.mrf.mxu0
        %v4029 = vpop.f32.mrf.mxu0
        %v4030 = vpop.f32.mrf.mxu0
        %4031 = vdwg.mxu0
        %v4032 = vpack.c.bf16 %v4027, %v4027
        %v4034 = vlaneseq
        %v4035 = vshrl.u32 %v4034, 7
        %v4036 = vsub.s32 0, %v4035
        %v4037 = vrot.slane %v3466, %v4036
        %v4043 = vunpack.c.l.b16 %v3461
        %v4044 = vunpack.c.l.b16 %v3462
        %v4045 = vunpack.c.l.b16 %v3463
        %v4046 = vunpack.c.l.b16 %v3464
        %v4047 = vpack.c.b16 %v4044, %v4043
        %v4048 = vpack.c.b16 %v4046, %v4045
        %v4052 = vsel %vm1211, %v4032, 0
        %4054 = vmatprep.subr.bf16.mxu0 0
        %4055 = vmatpush1.bf16.msra.mxu0 0
        %4056 = vmatprep.subr.bf16.mxu0 0
        %4057 = vmatpush1.bf16.msra.mxu0 0
        %4058 = vmatprep.subr.bf16.mxu0 0
        %4059 = vmatpush1.bf16.msra.mxu0 0
        %4060 = vmatprep.subr.bf16.mxu0 0
        %4061 = vmatpush1.bf16.msra.mxu0 0
        %4062 = vmatprep.subr.bf16.mxu0 0
        %4063 = vmatpush1.bf16.msra.mxu0 0
        %4064 = vmatprep.subr.bf16.mxu0 0
        %4065 = vmatpush1.bf16.msra.mxu0 0
        %4066 = vmatprep.subr.bf16.mxu0 0
        %4067 = vmatpush1.bf16.msra.mxu0 %v4048
        %4068 = vmatprep.subr.bf16.mxu0 0
        %4069 = vmatpush1.bf16.msra.mxu0 %v4047
        %4070 = vmatprep.subr.bf16.mxu0 0
        %4071 = vmatpush2.bf16.msra.mxu0 0
        %4072 = vmatprep.subr.bf16.mxu0 0
        %4073 = vmatpush2.bf16.msra.mxu0 0
        %4074 = vmatprep.subr.bf16.mxu0 0
        %4075 = vmatpush2.bf16.msra.mxu0 0
        %4076 = vmatprep.subr.bf16.mxu0 0
        %4077 = vmatpush2.bf16.msra.mxu0 0
        %4078 = vmatprep.subr.bf16.mxu0 0
        %4079 = vmatpush2.bf16.msra.mxu0 0
        %4080 = vmatprep.subr.bf16.mxu0 0
        %4081 = vmatpush2.bf16.msra.mxu0 0
        %4082 = vmatprep.subr.bf16.mxu0 0
        %4083 = vmatpush2.bf16.msra.mxu0 0
        %4084 = vmatprep.subr.bf16.mxu0 0
        %4085 = vmatpush2.bf16.msra.mxu0 0
        %4086 = vmatprep.mubr.bf16.mxu0 0
        %4087 = vmatmul.mubr.bf16.gmra.mxu0 %v4052
        %v4088 = vpop.f32.mrf.mxu0
        %v4089 = vadd.f32 %v4037, %v4088
        %v4090 = vpop.f32.mrf.mxu0
        %v4091 = vpop.f32.mrf.mxu0
        %v4092 = vpop.f32.mrf.mxu0
        %4093 = vdwg.mxu0
        %v4094 = vadd.f32 %v1240, %v4089
        %s4095 = scalar_lea.vmem [#allocation20], 4
        %v4096 = vld [vmem:[%s4095] sm:$0x1]
        %s4097 = scalar_lea.vmem [#allocation22], 4
        %v4098 = vld [vmem:[%s4097] sm:$0x1]
        %v4099 = vsel %vm1211, %v4094, 0.0
        %4100 = vadd.xlane.f32.xlu0 %v4099
        %v4101 = vpop.xlane.xlu0 %4100
        %v4102 = vmul.f32 %v4101, %v1215
        %v4103 = vsub.f32 %v4094, %v4102
        %v4104 = vmul.f32 %v4103, %v4103
        %v4105 = vsel %vm1211, %v4104, 0.0
        %4106 = vadd.xlane.f32.xlu0 %v4105
        %v4107 = vpop.xlane.xlu0 %4106
        %v4108 = vmul.f32 %v4107, %v1215
        %v4109 = vadd.f32 %v4108, 1e-05
        %v4110 = vrsqrt.pop %v4109
        %v4111 = vmul.f32 %v4103, %v4110
        %v4113 = vlaneseq
        %v4114 = vshrl.u32 %v4113, 7
        %v4115 = vsub.s32 0, %v4114
        %v4116 = vrot.slane %v4096, %v4115
        %v4118 = vmul.f32 %v4111, %v4116
        %v4120 = vlaneseq
        %v4121 = vshrl.u32 %v4120, 7
        %v4122 = vsub.s32 0, %v4121
        %v4123 = vrot.slane %v4098, %v4122
        %v4125 = vadd.f32 %v4118, %v4123
        %s4126 = scalar_lea.vmem %s15, 16
        %v4127 = vld [vmem:[%s4126] sm:$0xf]
        %v4128 = vld [vmem:[%s4126 + $0x4] sm:$0xf]
        %v4129 = vld [vmem:[%s4126 + $0x8] sm:$0xf]
        %v4130 = vld [vmem:[%s4126 + $0xc] sm:$0xf]
        %v4131 = vpack.c.bf16 %v4125, %v4125
        %s4132 = scalar_lea.vmem [#allocation23], 1
        %v4133 = vld [vmem:[%s4132] sm:$0x1]
        %v4135 = vlaneseq
        %v4136 = vshrl.u32 %v4135, 7
        %v4137 = vsub.s32 0, %v4136
        %v4138 = vrot.slane %v4133, %v4137
        %v4144 = vunpack.c.l.b16 %v4127
        %v4145 = vunpack.c.l.b16 %v4128
        %v4146 = vunpack.c.l.b16 %v4129
        %v4147 = vunpack.c.l.b16 %v4130
        %v4148 = vpack.c.b16 %v4145, %v4144
        %v4149 = vpack.c.b16 %v4147, %v4146
        %v4153 = vsel %vm1211, %v4131, 0
        %4155 = vmatprep.subr.bf16.mxu0 0
        %4156 = vmatpush1.bf16.msra.mxu0 0
        %4157 = vmatprep.subr.bf16.mxu0 0
        %4158 = vmatpush1.bf16.msra.mxu0 0
        %4159 = vmatprep.subr.bf16.mxu0 0
        %4160 = vmatpush1.bf16.msra.mxu0 0
        %4161 = vmatprep.subr.bf16.mxu0 0
        %4162 = vmatpush1.bf16.msra.mxu0 0
        %4163 = vmatprep.subr.bf16.mxu0 0
        %4164 = vmatpush1.bf16.msra.mxu0 0
        %4165 = vmatprep.subr.bf16.mxu0 0
        %4166 = vmatpush1.bf16.msra.mxu0 0
        %4167 = vmatprep.subr.bf16.mxu0 0
        %4168 = vmatpush1.bf16.msra.mxu0 %v4149
        %4169 = vmatprep.subr.bf16.mxu0 0
        %4170 = vmatpush1.bf16.msra.mxu0 %v4148
        %4171 = vmatprep.subr.bf16.mxu0 0
        %4172 = vmatpush2.bf16.msra.mxu0 0
        %4173 = vmatprep.subr.bf16.mxu0 0
        %4174 = vmatpush2.bf16.msra.mxu0 0
        %4175 = vmatprep.subr.bf16.mxu0 0
        %4176 = vmatpush2.bf16.msra.mxu0 0
        %4177 = vmatprep.subr.bf16.mxu0 0
        %4178 = vmatpush2.bf16.msra.mxu0 0
        %4179 = vmatprep.subr.bf16.mxu0 0
        %4180 = vmatpush2.bf16.msra.mxu0 0
        %4181 = vmatprep.subr.bf16.mxu0 0
        %4182 = vmatpush2.bf16.msra.mxu0 0
        %4183 = vmatprep.subr.bf16.mxu0 0
        %4184 = vmatpush2.bf16.msra.mxu0 0
        %4185 = vmatprep.subr.bf16.mxu0 0
        %4186 = vmatpush2.bf16.msra.mxu0 0
        %4187 = vmatprep.mubr.bf16.mxu0 0
        %4188 = vmatmul.mubr.bf16.gmra.mxu0 %v4153
        %v4189 = vpop.f32.mrf.mxu0
        %v4190 = vadd.f32 %v4138, %v4189
        %v4191 = vpop.f32.mrf.mxu0
        %v4192 = vpop.f32.mrf.mxu0
        %v4193 = vpop.f32.mrf.mxu0
        %4194 = vdwg.mxu0
        %v4195 = vmul.f32 %v4190, 0.5
        %v4196 = vmul.f32 %v4190, 0.044715
        %v4197 = vmul.f32 %v4196, %v4190
        %v4198 = vmul.f32 %v4197, %v4190
        %v4199 = vadd.f32 %v4190, %v4198
        %v4200 = vmul.f32 %v4199, 0.7978846
        %v4201 = vtanh.pop %v4200
        %v4202 = vadd.f32 %v4201, 1.0
        %v4203 = vmul.f32 %v4195, %v4202
        %s4204 = scalar_lea.vmem [#allocation25], 16
        %v4205 = vld [vmem:[%s4204] sm:$0xf]
        %v4206 = vld [vmem:[%s4204 + $0x4] sm:$0xf]
        %v4207 = vld [vmem:[%s4204 + $0x8] sm:$0xf]
        %v4208 = vld [vmem:[%s4204 + $0xc] sm:$0xf]
        %v4209 = vpack.c.bf16 %v4203, %v4203
        %s4210 = scalar_lea.vmem [#allocation26], 1
        %v4211 = vld [vmem:[%s4210] sm:$0x1]
        %v4213 = vlaneseq
        %v4214 = vshrl.u32 %v4213, 7
        %v4215 = vsub.s32 0, %v4214
        %v4216 = vrot.slane %v4211, %v4215
        %v4222 = vunpack.c.l.b16 %v4205
        %v4223 = vunpack.c.l.b16 %v4206
        %v4224 = vunpack.c.l.b16 %v4207
        %v4225 = vunpack.c.l.b16 %v4208
        %v4226 = vpack.c.b16 %v4223, %v4222
        %v4227 = vpack.c.b16 %v4225, %v4224
        %v4231 = vsel %vm1211, %v4209, 0
        %4233 = vmatprep.subr.bf16.mxu0 0
        %4234 = vmatpush1.bf16.msra.mxu0 0
        %4235 = vmatprep.subr.bf16.mxu0 0
        %4236 = vmatpush1.bf16.msra.mxu0 0
        %4237 = vmatprep.subr.bf16.mxu0 0
        %4238 = vmatpush1.bf16.msra.mxu0 0
        %4239 = vmatprep.subr.bf16.mxu0 0
        %4240 = vmatpush1.bf16.msra.mxu0 0
        %4241 = vmatprep.subr.bf16.mxu0 0
        %4242 = vmatpush1.bf16.msra.mxu0 0
        %4243 = vmatprep.subr.bf16.mxu0 0
        %4244 = vmatpush1.bf16.msra.mxu0 0
        %4245 = vmatprep.subr.bf16.mxu0 0
        %4246 = vmatpush1.bf16.msra.mxu0 %v4227
        %4247 = vmatprep.subr.bf16.mxu0 0
        %4248 = vmatpush1.bf16.msra.mxu0 %v4226
        %4249 = vmatprep.subr.bf16.mxu0 0
        %4250 = vmatpush2.bf16.msra.mxu0 0
        %4251 = vmatprep.subr.bf16.mxu0 0
        %4252 = vmatpush2.bf16.msra.mxu0 0
        %4253 = vmatprep.subr.bf16.mxu0 0
        %4254 = vmatpush2.bf16.msra.mxu0 0
        %4255 = vmatprep.subr.bf16.mxu0 0
        %4256 = vmatpush2.bf16.msra.mxu0 0
        %4257 = vmatprep.subr.bf16.mxu0 0
        %4258 = vmatpush2.bf16.msra.mxu0 0
        %4259 = vmatprep.subr.bf16.mxu0 0
        %4260 = vmatpush2.bf16.msra.mxu0 0
        %4261 = vmatprep.subr.bf16.mxu0 0
        %4262 = vmatpush2.bf16.msra.mxu0 0
        %4263 = vmatprep.subr.bf16.mxu0 0
        %4264 = vmatpush2.bf16.msra.mxu0 0
        %4265 = vmatprep.mubr.bf16.mxu0 0
        %4266 = vmatmul.mubr.bf16.gmra.mxu0 %v4231
        %v4267 = vpop.f32.mrf.mxu0
        %v4268 = vadd.f32 %v4216, %v4267
        %v4269 = vpop.f32.mrf.mxu0
        %v4270 = vpop.f32.mrf.mxu0
        %v4271 = vpop.f32.mrf.mxu0
        %4272 = vdwg.mxu0
        %v4273 = vadd.f32 %v4125, %v4268
        %s4274 = scalar_lea.vmem [#allocation20], 5
        %v4275 = vld [vmem:[%s4274] sm:$0x1]
        %s4276 = scalar_lea.vmem [#allocation22], 5
        %v4277 = vld [vmem:[%s4276] sm:$0x1]
        %v4278 = vsel %vm1211, %v4273, 0.0
        %4279 = vadd.xlane.f32.xlu0 %v4278
        %v4280 = vpop.xlane.xlu0 %4279
        %v4281 = vmul.f32 %v4280, %v1215
        %v4282 = vsub.f32 %v4273, %v4281
        %v4283 = vmul.f32 %v4282, %v4282
        %v4284 = vsel %vm1211, %v4283, 0.0
        %4285 = vadd.xlane.f32.xlu0 %v4284
        %v4286 = vpop.xlane.xlu0 %4285
        %v4287 = vmul.f32 %v4286, %v1215
        %v4288 = vadd.f32 %v4287, 1e-05
        %v4289 = vrsqrt.pop %v4288
        %v4290 = vmul.f32 %v4282, %v4289
        %v4292 = vlaneseq
        %v4293 = vshrl.u32 %v4292, 7
        %v4294 = vsub.s32 0, %v4293
        %v4295 = vrot.slane %v4275, %v4294
        %v4297 = vmul.f32 %v4290, %v4295
        %v4299 = vlaneseq
        %v4300 = vshrl.u32 %v4299, 7
        %v4301 = vsub.s32 0, %v4300
        %v4302 = vrot.slane %v4277, %v4301
        %v4304 = vadd.f32 %v4297, %v4302
        %v4305 = vld [vmem:[#allocation28] sm:$0xf]
        %v4306 = vld [vmem:[#allocation28 + $0x4] sm:$0xf]
        %v4307 = vld [vmem:[#allocation28 + $0x8] sm:$0xf]
        %v4308 = vld [vmem:[#allocation28 + $0xc] sm:$0xf]
        %v4309 = vpack.c.bf16 %v4304, %v4304
        %v4310 = vld [vmem:[#allocation29] sm:$0x1]
        %v4312 = vlaneseq
        %v4313 = vshrl.u32 %v4312, 7
        %v4314 = vsub.s32 0, %v4313
        %v4315 = vrot.slane %v4310, %v4314
        %v4321 = vunpack.c.l.b16 %v4305
        %v4322 = vunpack.c.l.b16 %v4306
        %v4323 = vunpack.c.l.b16 %v4307
        %v4324 = vunpack.c.l.b16 %v4308
        %v4325 = vpack.c.b16 %v4322, %v4321
        %v4326 = vpack.c.b16 %v4324, %v4323
        %v4330 = vsel %vm1211, %v4309, 0
        %4332 = vmatprep.subr.bf16.mxu0 0
        %4333 = vmatpush1.bf16.msra.mxu0 0
        %4334 = vmatprep.subr.bf16.mxu0 0
        %4335 = vmatpush1.bf16.msra.mxu0 0
        %4336 = vmatprep.subr.bf16.mxu0 0
        %4337 = vmatpush1.bf16.msra.mxu0 0
        %4338 = vmatprep.subr.bf16.mxu0 0
        %4339 = vmatpush1.bf16.msra.mxu0 0
        %4340 = vmatprep.subr.bf16.mxu0 0
        %4341 = vmatpush1.bf16.msra.mxu0 0
        %4342 = vmatprep.subr.bf16.mxu0 0
        %4343 = vmatpush1.bf16.msra.mxu0 0
        %4344 = vmatprep.subr.bf16.mxu0 0
        %4345 = vmatpush1.bf16.msra.mxu0 %v4326
        %4346 = vmatprep.subr.bf16.mxu0 0
        %4347 = vmatpush1.bf16.msra.mxu0 %v4325
        %4348 = vmatprep.subr.bf16.mxu0 0
        %4349 = vmatpush2.bf16.msra.mxu0 0
        %4350 = vmatprep.subr.bf16.mxu0 0
        %4351 = vmatpush2.bf16.msra.mxu0 0
        %4352 = vmatprep.subr.bf16.mxu0 0
        %4353 = vmatpush2.bf16.msra.mxu0 0
        %4354 = vmatprep.subr.bf16.mxu0 0
        %4355 = vmatpush2.bf16.msra.mxu0 0
        %4356 = vmatprep.subr.bf16.mxu0 0
        %4357 = vmatpush2.bf16.msra.mxu0 0
        %4358 = vmatprep.subr.bf16.mxu0 0
        %4359 = vmatpush2.bf16.msra.mxu0 0
        %4360 = vmatprep.subr.bf16.mxu0 0
        %4361 = vmatpush2.bf16.msra.mxu0 0
        %4362 = vmatprep.subr.bf16.mxu0 0
        %4363 = vmatpush2.bf16.msra.mxu0 0
        %4364 = vmatprep.mubr.bf16.mxu0 0
        %4365 = vmatmul.mubr.bf16.gmra.mxu0 %v4330
        %v4366 = vpop.f32.mrf.mxu0
        %v4367 = vadd.f32 %v4315, %v4366
        %v4368 = vpop.f32.mrf.mxu0
        %v4369 = vpop.f32.mrf.mxu0
        %v4370 = vpop.f32.mrf.mxu0
        %4371 = vdwg.mxu0
        %v4372 = vmul.f32 %v4367, 0.5
        %v4373 = vmul.f32 %v4367, 0.044715
        %v4374 = vmul.f32 %v4373, %v4367
        %v4375 = vmul.f32 %v4374, %v4367
        %v4376 = vadd.f32 %v4367, %v4375
        %v4377 = vmul.f32 %v4376, 0.7978846
        %v4378 = vtanh.pop %v4377
        %v4379 = vadd.f32 %v4378, 1.0
        %v4380 = vmul.f32 %v4372, %v4379
        %v4381 = vld [vmem:[#allocation31] sm:$0x1]
        %v4382 = vld [vmem:[#allocation32] sm:$0x1]
        %v4383 = vsel %vm1211, %v4380, 0.0
        %4384 = vadd.xlane.f32.xlu0 %v4383
        %v4385 = vpop.xlane.xlu0 %4384
        %v4386 = vmul.f32 %v4385, %v1215
        %v4387 = vsub.f32 %v4380, %v4386
        %v4388 = vmul.f32 %v4387, %v4387
        %v4389 = vsel %vm1211, %v4388, 0.0
        %4390 = vadd.xlane.f32.xlu0 %v4389
        %v4391 = vpop.xlane.xlu0 %4390
        %v4392 = vmul.f32 %v4391, %v1215
        %v4393 = vadd.f32 %v4392, 1e-05
        %v4394 = vrsqrt.pop %v4393
        %v4395 = vmul.f32 %v4387, %v4394
        %v4397 = vlaneseq
        %v4398 = vshrl.u32 %v4397, 7
        %v4399 = vsub.s32 0, %v4398
        %v4400 = vrot.slane %v4381, %v4399
        %v4402 = vmul.f32 %v4395, %v4400
        %v4404 = vlaneseq
        %v4405 = vshrl.u32 %v4404, 7
        %v4406 = vsub.s32 0, %v4405
        %v4407 = vrot.slane %v4382, %v4406
        %v4409 = vadd.f32 %v4402, %v4407
        %v4410 = vld [vmem:[%s23] sm:$0xf]
        %v4411 = vld [vmem:[%s23 + $0x4] sm:$0xf]
        %v4412 = vld [vmem:[%s23 + $0x8] sm:$0xf]
        %v4413 = vld [vmem:[%s23 + $0xc] sm:$0xf]
        %v4414 = vpack.c.bf16 %v4409, %v4409
        %v4415 = vld [vmem:[#allocation34] sm:$0x1]
        %v4417 = vlaneseq
        %v4418 = vshrl.u32 %v4417, 7
        %v4419 = vsub.s32 0, %v4418
        %v4420 = vrot.slane %v4415, %v4419
        %v4426 = vunpack.c.l.b16 %v4410
        %v4427 = vunpack.c.l.b16 %v4411
        %v4428 = vunpack.c.l.b16 %v4412
        %v4429 = vunpack.c.l.b16 %v4413
        %v4430 = vpack.c.b16 %v4427, %v4426
        %v4431 = vpack.c.b16 %v4429, %v4428
        %v4435 = vsel %vm1211, %v4414, 0
        %4437 = vmatprep.subr.bf16.mxu0 0
        %4438 = vmatpush1.bf16.msra.mxu0 0
        %4439 = vmatprep.subr.bf16.mxu0 0
        %4440 = vmatpush1.bf16.msra.mxu0 0
        %4441 = vmatprep.subr.bf16.mxu0 0
        %4442 = vmatpush1.bf16.msra.mxu0 0
        %4443 = vmatprep.subr.bf16.mxu0 0
        %4444 = vmatpush1.bf16.msra.mxu0 0
        %4445 = vmatprep.subr.bf16.mxu0 0
        %4446 = vmatpush1.bf16.msra.mxu0 0
        %4447 = vmatprep.subr.bf16.mxu0 0
        %4448 = vmatpush1.bf16.msra.mxu0 0
        %4449 = vmatprep.subr.bf16.mxu0 0
        %4450 = vmatpush1.bf16.msra.mxu0 %v4431
        %4451 = vmatprep.subr.bf16.mxu0 0
        %4452 = vmatpush1.bf16.msra.mxu0 %v4430
        %4453 = vmatprep.subr.bf16.mxu0 0
        %4454 = vmatpush2.bf16.msra.mxu0 0
        %4455 = vmatprep.subr.bf16.mxu0 0
        %4456 = vmatpush2.bf16.msra.mxu0 0
        %4457 = vmatprep.subr.bf16.mxu0 0
        %4458 = vmatpush2.bf16.msra.mxu0 0
        %4459 = vmatprep.subr.bf16.mxu0 0
        %4460 = vmatpush2.bf16.msra.mxu0 0
        %4461 = vmatprep.subr.bf16.mxu0 0
        %4462 = vmatpush2.bf16.msra.mxu0 0
        %4463 = vmatprep.subr.bf16.mxu0 0
        %4464 = vmatpush2.bf16.msra.mxu0 0
        %4465 = vmatprep.subr.bf16.mxu0 0
        %4466 = vmatpush2.bf16.msra.mxu0 0
        %4467 = vmatprep.subr.bf16.mxu0 0
        %4468 = vmatpush2.bf16.msra.mxu0 0
        %4469 = vmatprep.mubr.bf16.mxu0 0
        %4470 = vmatmul.mubr.bf16.gmra.mxu0 %v4435
        %v4471 = vpop.f32.mrf.mxu0
        %v4472 = vadd.f32 %v4420, %v4471
        %v4473 = vpop.f32.mrf.mxu0
        %v4474 = vpop.f32.mrf.mxu0
        %v4475 = vpop.f32.mrf.mxu0
        %4476 = vdwg.mxu0
        %vm4477 = vcmask 130048
        %4478 = vst.msk [vmem:[%s1108] sm:$0xff] %vm4477, %v4472
        %s4479 = sand.u32 %s607, 1
        %s4480 = scalar_lea.sflag [#allocation4], %s4479
        %s4481 = sand.u32 %s607, 1
        %s4482 = smul.addr %s4481, 8
        %s4483 = scalar_lea.vmem [#allocation35], %s4482
        // Predicated region
        $region205: #{decoder_forward.1} parent=119 // pred_check
          %p4484 = pneg %p617
        $region206: #{decoder_forward.1} parent=119 // pred_check_branch
          %4486 = sbr.rel (%p4484) target = $region208
        $region207: #{decoder_forward.1} parent=119 // pred_region
          %s4488 = ssub.s32 128, 128
          %4489 = vsyncadd %s4480, %s4488
          %s4490 = smul.addr %s54, 128
          %s4491 = scalar_lea.hbm %s25, %s4490
          %s4493 = sshll.u32 %s4483, 4
          %s4494 = int_to_ptr.vmem [resolvable:$true] %s4493
          %4496 = dma.vmem_to_hbm [thread:$0]  %s4494, 128, %s4491, %s4480
        $region208: #{decoder_forward.1} parent=119 // pred_fallthru
          _
      $region120: #{decoder_forward.1} parent=5 // pred_fallthru
        _
      %p4497 = scmp.le.s32.totalorder 2, %s49
      // Predicated region
      $region209: #{decoder_forward.1} parent=5 // pred_check
        %p4498 = pneg %p4497
      $region210: #{decoder_forward.1} parent=5 // pred_check_branch
        %4500 = sbr.rel (%p4498) target = $region212
      $region211: #{decoder_forward.1} parent=5 // pred_region
        %s4501 = ssub.s32 %s49, 2
        // Predicated region
        $region213: #{decoder_forward.1} parent=211 // pred_check
          %p4502 = pneg %p623
        $region214: #{decoder_forward.1} parent=211 // pred_check_branch
          %4504 = sbr.rel (%p4502) target = $region216
        $region215: #{decoder_forward.1} parent=211 // pred_region
          %s4505 = sand.u32 %s608, 1
          %s4506 = scalar_lea.sflag [#allocation4], %s4505
          %s4507 = sand.u32 %s608, 1
          %s4508 = smul.addr %s4507, 8
          %s4509 = scalar_lea.vmem [#allocation35], %s4508
          %4510 = dma.done %s4506, 128
        $region216: #{decoder_forward.1} parent=211 // pred_fallthru
          _
      $region212: #{decoder_forward.1} parent=5 // pred_fallthru
        _
    $region6: #{decoder_forward.1} parent=1 // loop_footer
      %s53 = sadd.s32 1, %s49
    $region7: #{decoder_forward.1} parent=1 // loop_footer_branch
      %48 = sbr.rel target = $region3
    $region8: #{decoder_forward.1} parent=1 // loop_exit
      _
    %4511 = vsyncpa [#allocation3], 1
    %s4512 = scalar_lea.sflag [#allocation3], 1
    %4513 = vsyncpa %s4512, 1
    %4514 = vsyncpa [#allocation6], 1
    %s4515 = scalar_lea.sflag [#allocation6], 1
    %4516 = vsyncpa %s4515, 1
    %4517 = vsyncpa [#allocation9], 1
    %4518 = vsyncpa [#allocation12], 1
    %4519 = vsyncpa [#allocation15], 1
    %4520 = vsyncpa [#allocation18], 1
    %4521 = vsyncpa [#allocation21], 1
    %4522 = vsyncpa [#allocation24], 1
    %4523 = vsyncpa [#allocation27], 1
    %4524 = vsyncpa [#allocation30], 1
    %4525 = vsyncpa [#allocation33], 1
    %4526 = vsyncpa [#allocation4], 1
    %s4527 = scalar_lea.sflag [#allocation4], 1
    %4528 = vsyncpa %s4527, 1

</llo_original>
